<compile_context>
chip_gen: v7x
topology: tpu7x:2x2x1
jax: 0.10.0
libtpu: 0.0.40
codegen_flags: <defaults>
</compile_context>

<pallas_src>
import functools

import jax
import jax.numpy as jnp
import numpy as np
from jax.experimental import pallas as pl
from jax.experimental.pallas import tpu as pltpu


# ----------------------------------------------------------------------------
# Static helpers (host side / trace time)
# ----------------------------------------------------------------------------
def _pick_bblk(n):
    """Largest batch block <= 8 that keeps >= 2 grid steps (v7x has 2 TCs)."""
    best = 1
    for d in range(1, n + 1):
        if n % d == 0 and d <= 8 and n // d >= 2:
            best = d
    return best


def _conv_tap_meta(H, W, K, L):
    """(lane-roll shift, is_center) per tap of a KxK 'same' conv applied to a
    row-major flattened pixel axis of total lane length L (= bblk*H*W)."""
    # TODO(synk): pad=(K-1)//2 matches PyTorch 'same' only for odd K (K in {1,3} here).
    pad = (K - 1) // 2
    meta = []
    for dh in range(K):
        for dw in range(K):
            oh, ow = dh - pad, dw - pad
            d = oh * W + ow                       # tap for output col j lives at col j + d
            meta.append(((-d) % L, oh == 0 and ow == 0))
    return meta


def _tap_mask_np(H, W, K, bblk):
    """(K*K, bblk*H*W) f32: 1 where a tap stays on-image, 0 where the lane roll
    wrapped across an image/batch boundary.  Shared by every residual conv."""
    pad = (K - 1) // 2
    hh = np.arange(H)[:, None]
    ww = np.arange(W)[None, :]
    rows = []
    for dh in range(K):
        for dw in range(K):
            oh, ow = dh - pad, dw - pad
            valid = ((hh + oh >= 0) & (hh + oh < H) &
                     (ww + ow >= 0) & (ww + ow < W))
            rows.append(valid.reshape(-1))
    m = np.stack(rows, 0).astype(np.float32)
    return np.tile(m, (1, bblk))


def _coupling_mask_np(C, H, W, bblk, mask_type):
    """(C, bblk*H*W) f32 coupling mask (checkerboard / channel, optional flip)."""
    if 'checkerboard' in mask_type:
        hh = np.arange(H)[:, None]
        ww = np.arange(W)[None, :]
        base = ((hh + ww) % 2).astype(np.float32).reshape(1, H * W)
        m = np.broadcast_to(base, (C, H * W)).copy()
        if mask_type == 'checkerboard1':
            m = 1.0 - m
    else:
        ch = (np.arange(C) % 2).astype(np.float32)[:, None]
        m = np.broadcast_to(ch, (C, H * W)).copy()
        if mask_type == 'channel1':
            m = 1.0 - m
    return np.tile(m, (1, bblk))


# ----------------------------------------------------------------------------
# The fused coupling-layer kernel (one grid step == `bblk` batch elements)
# ----------------------------------------------------------------------------
def _coupling_layer_kernel(x_ref, cmask_ref, tmask_ref, w1_ref, wres_ref, wss_ref,
                           bias_ref, sf_ref, isf_ref, res_ref, ld_ref,
                           *, H, W, K, nb):
    HW = H * W
    bblk, C, _ = x_ref.shape                    # (bblk, C, HW)
    F = w1_ref.shape[0]
    L = bblk * HW
    cdt = w1_ref.dtype                           # matmul input dtype (bf16 or f32)

    # Block activations as (C, L): batch elements concatenated along lanes.
    if bblk == 1:
        x = x_ref[0]
    else:
        x = jnp.concatenate([x_ref[b] for b in range(bblk)], axis=1)

    m = cmask_ref[...]                           # (C, L) coupling mask
    inv = 1.0 - m

    def bias(off, size):
        """Packed per-batch bias chunk -> column(s) broadcastable to (size, L)."""
        if bblk == 1:
            return bias_ref[0, off:off + size, :]                     # (size, 1)
        segs = [jnp.broadcast_to(bias_ref[b, off:off + size, :], (size, HW))
                for b in range(bblk)]
        return jnp.concatenate(segs, axis=1)                          # (size, L)

    # ---- m1: masked 1x1 conv (+ conv bias + cond-MLP bias, pre-folded) -----
    curr = jnp.dot(w1_ref[...], (x * m).astype(cdt),
                   preferred_element_type=jnp.float32) + bias(0, F)   # (F, L)

    # ---- residual chain: nb x (KxK conv -> KxK conv -> +skip -> tanh) ------
    if nb > 0:
        taps_meta = _conv_tap_meta(H, W, K, L)

        def conv_same(a, widx, boff):
            # All K*K taps fused into a single matmul (contraction dim K*K*F).
            taps = []
            for k, (shift, center) in enumerate(taps_meta):
                if center:
                    taps.append(a)
                else:
                    taps.append(pltpu.roll(a, shift, axis=1) * tmask_ref[k:k + 1, :])
            stacked = jnp.concatenate(taps, axis=0).astype(cdt)       # (K*K*F, L)
            return jnp.dot(wres_ref[widx], stacked,
                           preferred_element_type=jnp.float32) + bias(boff, F)

        # TODO(synk): if num_res_blocks grows large, switch this static unroll
        # to lax.fori_loop (dynamic wres_ref / bias indexing) to bound vreg
        # live ranges.
        for i in range(nb):
            h1 = conv_same(curr, 2 * i, F * (1 + 2 * i))
            h2 = conv_same(h1, 2 * i + 1, F * (2 + 2 * i))
            curr = jnp.tanh(h2 + curr)           # curr += skip; curr = tanh(curr)

    # ---- fused shift/scale heads + affine coupling + per-batch log-det -----
    ss = jnp.dot(wss_ref[...], curr.astype(cdt),
                 preferred_element_type=jnp.float32) + bias(F * (1 + 2 * nb), 2 * C)
    shift = ss[:C] * inv                                              # (C, L)
    scale = pltpu.roll(ss, C, axis=0)[:C] * inv                       # aligned split
    scale = jnp.tanh(scale * isf_ref[...]) * sf_ref[...]              # tanh(s/sf)*sf
    res = x * m + inv * (x * jnp.exp(scale) + shift)

    for b in range(bblk):
        res_ref[b] = res[:, b * HW:(b + 1) * HW].astype(res_ref.dtype)
        ld_ref[b] = jnp.sum(scale[:, b * HW:(b + 1) * HW], keepdims=True)


# ----------------------------------------------------------------------------
# Forward wrapper (cheap host glue: cond-MLP bias folding, weight reshapes)
# ----------------------------------------------------------------------------
def coupling_layer_conv_forward(params, x_nchw, y, task, log_det, z,
                                mask_type, kernel_size, num_res_blocks,
                                bblk=None, matmul_dtype=jnp.bfloat16):
    assert mask_type in ('checkerboard0', 'checkerboard1', 'channel0', 'channel1')
    N, C, H, Wd = x_nchw.shape
    F = params['m1']['w'].shape[-1]
    K = kernel_size
    KK = K * K
    nb = num_res_blocks - 1
    HW = H * Wd

    if bblk is None:
        bblk = _pick_bblk(N)
    assert N % bblk == 0
    L = bblk * HW
    cdt = matmul_dtype

    # NCHW -> (N, C, H*W): pure reshape, channels on sublanes, pixels on lanes.
    xf = x_nchw.reshape(N, C, HW)
    cond_emb = y if task is None else jnp.concatenate([y, task], axis=1)

    def head_w(p, cin, cout):
        # (kh, kw, cin, cout) -> fused (cout, kh*kw*cin), tap-major / cin-minor.
        w = p['w']
        kk = w.shape[0] * w.shape[1]
        return jnp.transpose(w.reshape(kk, cin, cout),
                             (2, 0, 1)).reshape(cout, kk * cin).astype(cdt)

    def folded_bias(p):
        # conv bias + cond_model(cond_emb): tiny MLP, plain JAX -> (N, cout).
        h = jnp.maximum(cond_emb @ p['cw1'] + p['cb1'], 0.0)
        return h @ p['cw2'] + p['cb2'] + p['b']

    w1 = head_w(params['m1'], C, F)                                  # (F, C)
    if nb > 0:
        w_res = jnp.stack([head_w(params[f'm{m}_{i}'], F, F)
                           for i in range(nb) for m in (2, 3)])      # (2nb, F, KK*F)
    else:
        w_res = jnp.zeros((2, F, KK * F), cdt)                       # never read
    w_ss = jnp.concatenate([head_w(params['shift'], F, C),
                            head_w(params['scale'], F, C)], axis=0)  # (2C, F)

    bias_chunks = [folded_bias(params['m1'])]
    for i in range(nb):
        bias_chunks.append(folded_bias(params[f'm2_{i}']))
        bias_chunks.append(folded_bias(params[f'm3_{i}']))
    bias_chunks.append(folded_bias(params['shift']))
    bias_chunks.append(folded_bias(params['scale']))
    bias_all = jnp.concatenate(bias_chunks, axis=1)[..., None].astype(jnp.float32)
    TOT = bias_all.shape[1]                                          # F*(1+2nb)+2C

    sf = jnp.exp(params['scaling_factor']).reshape(C, 1).astype(jnp.float32)
    isf = 1.0 / sf

    cmask = jnp.asarray(_coupling_mask_np(C, H, Wd, bblk, mask_type))  # (C, L)
    tmask = jnp.asarray(_tap_mask_np(H, Wd, K, bblk))                  # (KK, L)

    flops = int(2 * N * HW * (C * F + nb * 2 * KK * F * F + F * 2 * C))
    transc = int(N * HW * (nb * F + 2 * C))
    bytes_acc = int(4 * (2 * xf.size + bias_all.size + cmask.size + tmask.size
                         + 2 * sf.size + N)
                    + np.dtype(cdt).itemsize * (w1.size + w_res.size + w_ss.size))

    kern = functools.partial(_coupling_layer_kernel, H=H, W=Wd, K=K, nb=nb)
    res_flat, ld = pl.pallas_call(
        kern,
        out_shape=(jax.ShapeDtypeStruct((N, C, HW), x_nchw.dtype),
                   jax.ShapeDtypeStruct((N, 1, 1), jnp.float32)),
        grid=(N // bblk,),
        in_specs=[
            pl.BlockSpec((bblk, C, HW), lambda n: (n, 0, 0)),        # x
            pl.BlockSpec((C, L), lambda n: (0, 0)),                  # coupling mask
            pl.BlockSpec((KK, L), lambda n: (0, 0)),                 # conv boundary mask
            pl.BlockSpec((F, C), lambda n: (0, 0)),                  # w1 (1x1 conv)
            pl.BlockSpec(w_res.shape, lambda n: (0, 0, 0)),          # fused res-conv weights
            pl.BlockSpec((2 * C, F), lambda n: (0, 0)),              # fused shift/scale weights
            pl.BlockSpec((bblk, TOT, 1), lambda n: (n, 0, 0)),       # packed per-batch biases
            pl.BlockSpec((C, 1), lambda n: (0, 0)),                  # s_fac
            pl.BlockSpec((C, 1), lambda n: (0, 0)),                  # 1 / s_fac
        ],
        out_specs=(pl.BlockSpec((bblk, C, HW), lambda n: (n, 0, 0)),  # res (lane-dense)
                   pl.BlockSpec((bblk, 1, 1), lambda n: (n, 0, 0))),  # log-det delta
        compiler_params=pltpu.CompilerParams(
            dimension_semantics=("parallel",)),   # v7x: grid steps split across TCs
        cost_estimate=pl.CostEstimate(flops=flops, transcendentals=transc,
                                      bytes_accessed=bytes_acc),
    )(xf, cmask, tmask, w1, w_res, w_ss, bias_all, sf, isf)

    res_nchw = res_flat.reshape(N, C, H, Wd)                          # pure reshape
    return res_nchw, log_det + ld.reshape(N), z


# ----------------------------------------------------------------------------
# Pure-JAX reference (lax.conv) -- validates taps / masks / roll direction
# ----------------------------------------------------------------------------
def coupling_layer_conv_reference(params, x, y, task, log_det, z,
                                  mask_type, kernel_size, num_res_blocks):
    N, C, H, W = x.shape
    cond_emb = y if task is None else jnp.concatenate([y, task], axis=1)

    def myconv(p, a):
        w = jnp.transpose(p['w'], (3, 2, 0, 1))        # (kh,kw,ci,co) -> OIHW
        out = jax.lax.conv_general_dilated(
            a, w, window_strides=(1, 1), padding='SAME',
            dimension_numbers=('NCHW', 'OIHW', 'NCHW'),
            precision=jax.lax.Precision.HIGHEST)
        out = out + p['b'][None, :, None, None]
        h = jnp.maximum(cond_emb @ p['cw1'] + p['cb1'], 0.0)
        cond = h @ p['cw2'] + p['cb2']
        return out + cond[:, :, None, None]

    if 'checkerboard' in mask_type:
        hh = jnp.arange(H)[:, None]
        ww = jnp.arange(W)[None, :]
        m2d = ((hh + ww) % 2).astype(x.dtype)
        if mask_type == 'checkerboard1':
            m2d = 1.0 - m2d
        mask = jnp.broadcast_to(m2d[None, None], (N, C, H, W))
    else:
        mc = (jnp.arange(C) % 2).astype(x.dtype)
        if mask_type == 'channel1':
            mc = 1.0 - mc
        mask = jnp.broadcast_to(mc[None, :, None, None], (N, C, H, W))

    masked_x = x * mask
    curr = myconv(params['m1'], masked_x)
    skip = curr
    for i in range(num_res_blocks - 1):
        curr = myconv(params[f'm2_{i}'], curr)
        curr = myconv(params[f'm3_{i}'], curr)
        curr = jnp.tanh(curr + skip)
        skip = curr
    shift = myconv(params['shift'], curr) * (1.0 - mask)
    scale = myconv(params['scale'], curr) * (1.0 - mask)
    s_fac = jnp.exp(params['scaling_factor'])[None, :, None, None]
    scale = jnp.tanh(scale / s_fac) * s_fac
    res = masked_x + (1.0 - mask) * (x * jnp.exp(scale) + shift)
    return res, log_det + scale.sum(axis=(1, 2, 3)), z


# ----------------------------------------------------------------------------
# Deterministic parameter initialization (synthetic, matches module shapes)
# ----------------------------------------------------------------------------
def init_myconv_params(key, c_in, c_out, K, cond_dim, n_hidden):
    k = jax.random.split(key, 6)
    return {
        'w':   0.1 * jax.random.normal(k[0], (K, K, c_in, c_out), jnp.float32),
        'b':   0.01 * jax.random.normal(k[1], (c_out,), jnp.float32),
        'cw1': 0.1 * jax.random.normal(k[2], (cond_dim, n_hidden), jnp.float32),
        'cb1': 0.01 * jax.random.normal(k[3], (n_hidden,), jnp.float32),
        'cw2': 0.1 * jax.random.normal(k[4], (n_hidden, c_out), jnp.float32),
        'cb2': 0.01 * jax.random.normal(k[5], (c_out,), jnp.float32),
    }


def init_coupling_params(key, c_in, kernel_size, cond_dim, n_filter, n_hidden,
                         num_res_blocks):
    keys = jax.random.split(key, 2 * (num_res_blocks - 1) + 3)
    params = {'m1': init_myconv_params(keys[0], c_in, n_filter, 1, cond_dim, n_hidden)}
    ki = 1
    for i in range(num_res_blocks - 1):
        params[f'm2_{i}'] = init_myconv_params(keys[ki], n_filter, n_filter,
                                               kernel_size, cond_dim, n_hidden); ki += 1
        params[f'm3_{i}'] = init_myconv_params(keys[ki], n_filter, n_filter,
                                               kernel_size, cond_dim, n_hidden); ki += 1
    params['shift'] = init_myconv_params(keys[ki], n_filter, c_in, 1, cond_dim, n_hidden)
    params['scale'] = init_myconv_params(keys[ki + 1], n_filter, c_in, 1, cond_dim, n_hidden)
    params['scaling_factor'] = jnp.zeros((c_in,), jnp.float32)   # nn.Parameter(zeros(c_in))
    return params


# ----------------------------------------------------------------------------
if __name__ == "__main__":
    N, C_IN, H, W = 2, 4, 16, 16
    COND_DIM, N_FILTER, N_HIDDEN = 8, 32, 32
    KERNEL_SIZE, NUM_RES_BLOCKS = 3, 3
    MASK_TYPE = 'checkerboard0'

    root = jax.random.PRNGKey(0)
    k_param, k_x, k_y, k_z = jax.random.split(root, 4)

    params = init_coupling_params(k_param, C_IN, KERNEL_SIZE, COND_DIM,
                                  N_FILTER, N_HIDDEN, NUM_RES_BLOCKS)

    x = jax.random.normal(k_x, (N, C_IN, H, W), jnp.float32)      # NCHW input
    y = jax.random.normal(k_y, (N, COND_DIM), jnp.float32)        # cond embedding
    task = None                                                   # -> cond_emb = y
    log_det = jnp.zeros((N,), jnp.float32)
    z = jax.random.normal(k_z, (N, 3), jnp.float32)               # passed through

    fwd = jax.jit(functools.partial(coupling_layer_conv_forward,
                                    mask_type=MASK_TYPE,
                                    kernel_size=KERNEL_SIZE,
                                    num_res_blocks=NUM_RES_BLOCKS))
    res, ld_out, z_out = fwd(params, x, y, task, log_det, z)
    jax.block_until_ready((res, ld_out, z_out))

    # Validate against a pure-JAX (lax.conv) reference.  Kernel matmuls run in
    # bf16 (f32 accumulation) -> loose tolerance vs. the f32 reference.
    ref = jax.jit(functools.partial(coupling_layer_conv_reference,
                                    mask_type=MASK_TYPE,
                                    kernel_size=KERNEL_SIZE,
                                    num_res_blocks=NUM_RES_BLOCKS))
    res_exp, ld_exp, _ = ref(params, x, y, task, log_det, z)
    jax.block_until_ready((res_exp, ld_exp))

    assert res.shape == (N, C_IN, H, W)
    assert ld_out.shape == (N,)
    assert z_out.shape == z.shape
    assert bool(jnp.all(jnp.isfinite(res))) and bool(jnp.all(jnp.isfinite(ld_out)))
    assert bool(jnp.allclose(res, res_exp, rtol=8e-2, atol=8e-2)), \
        float(jnp.max(jnp.abs(res - res_exp)))
    assert bool(jnp.allclose(ld_out, ld_exp, rtol=8e-2, atol=1.0)), \
        (float(ld_out[0]), float(ld_exp[0]))
    print("KERNEL_OK")
</pallas_src>

<mosaic_0001>
module attributes {stable_mosaic.version = 11 : i64} {
  func.func @_coupling_layer_kernel(%arg0: i32, %arg1: memref<1x4x256xf32, #tpu.memory_space<vmem>>, %arg2: memref<4x256xf32, #tpu.memory_space<vmem>>, %arg3: memref<9x256xf32, #tpu.memory_space<vmem>>, %arg4: memref<32x4xbf16, #tpu.memory_space<vmem>>, %arg5: memref<4x32x288xbf16, #tpu.memory_space<vmem>>, %arg6: memref<8x32xbf16, #tpu.memory_space<vmem>>, %arg7: memref<1x168x1xf32, #tpu.memory_space<vmem>>, %arg8: memref<4x1xf32, #tpu.memory_space<vmem>>, %arg9: memref<4x1xf32, #tpu.memory_space<vmem>>, %arg10: memref<1x4x256xf32, #tpu.memory_space<vmem>>, %arg11: memref<1x1x1xf32, #tpu.memory_space<vmem>>) attributes {dimension_semantics = [#tpu.dimension_semantics<parallel>], iteration_bounds = array<i64: 2>, scalar_prefetch = 0 : i64, scratch_operands = 0 : i64, tpu.core_type = #tpu.core_type<tc>, window_params = [{transform_indices = @transform_0, window_bounds = array<i64: 1, 4, 256>}, {pipeline_mode = #tpu.pipeline_mode<synchronous>, transform_indices = @transform_1, window_bounds = array<i64: 4, 256>}, {pipeline_mode = #tpu.pipeline_mode<synchronous>, transform_indices = @transform_2, window_bounds = array<i64: 9, 256>}, {pipeline_mode = #tpu.pipeline_mode<synchronous>, transform_indices = @transform_3, window_bounds = array<i64: 32, 4>}, {pipeline_mode = #tpu.pipeline_mode<synchronous>, transform_indices = @transform_4, window_bounds = array<i64: 4, 32, 288>}, {pipeline_mode = #tpu.pipeline_mode<synchronous>, transform_indices = @transform_5, window_bounds = array<i64: 8, 32>}, {transform_indices = @transform_6, window_bounds = array<i64: 1, 168, 1>}, {pipeline_mode = #tpu.pipeline_mode<synchronous>, transform_indices = @transform_7, window_bounds = array<i64: 4, 1>}, {pipeline_mode = #tpu.pipeline_mode<synchronous>, transform_indices = @transform_8, window_bounds = array<i64: 4, 1>}, {transform_indices = @transform_9, window_bounds = array<i64: 1, 4, 256>}, {transform_indices = @transform_10, window_bounds = array<i64: 1, 1, 1>}]} {
    %c0 = arith.constant 0 : index
    %c0_0 = arith.constant 0 : index
    %c0_1 = arith.constant 0 : index
    %0 = vector.load %arg1[%c0, %c0_0, %c0_1] : memref<1x4x256xf32, #tpu.memory_space<vmem>>, vector<1x4x256xf32>
    %1 = vector.shape_cast %0 : vector<1x4x256xf32> to vector<4x256xf32>
    %c0_2 = arith.constant 0 : index
    %c0_3 = arith.constant 0 : index
    %2 = vector.load %arg2[%c0_2, %c0_3] : memref<4x256xf32, #tpu.memory_space<vmem>>, vector<4x256xf32>
    %cst = arith.constant 1.000000e+00 : f32
    %3 = vector.broadcast %cst : f32 to vector<4x256xf32>
    %4 = arith.subf %3, %2 : vector<4x256xf32>
    %c0_4 = arith.constant 0 : index
    %c0_5 = arith.constant 0 : index
    %5 = vector.load %arg4[%c0_4, %c0_5] : memref<32x4xbf16, #tpu.memory_space<vmem>>, vector<32x4xbf16>
    %6 = arith.mulf %1, %2 : vector<4x256xf32>
    %7 = arith.truncf %6 : vector<4x256xf32> to vector<4x256xbf16>
    %cst_6 = arith.constant dense<0.000000e+00> : vector<32x256xf32>
    %8 = tpu.matmul %5, %7, %cst_6 {dimension_numbers = #tpu.dot_dimension_numbers<[1], [0], [0], [1], [0, 0, 1, 1], [], []>} : vector<32x4xbf16>, vector<4x256xbf16>, vector<32x256xf32> -> vector<32x256xf32>
    %c0_7 = arith.constant 0 : index
    %c0_8 = arith.constant 0 : index
    %c0_9 = arith.constant 0 : index
    %9 = vector.load %arg7[%c0_7, %c0_8, %c0_9] : memref<1x168x1xf32, #tpu.memory_space<vmem>>, vector<1x32x1xf32>
    %10 = vector.shape_cast %9 : vector<1x32x1xf32> to vector<32x1xf32>
    %11 = vector.broadcast %10 : vector<32x1xf32> to vector<32x256xf32>
    %12 = arith.addf %8, %11 : vector<32x256xf32>
    %c17_i32 = arith.constant 17 : i32
    %13 = tpu.dynamic_rotate %12 by %c17_i32 dim 1 : vector<32x256xf32>, i32 -> vector<32x256xf32>
    %c0_10 = arith.constant 0 : index
    %c0_11 = arith.constant 0 : index
    %14 = vector.load %arg3[%c0_10, %c0_11] : memref<9x256xf32, #tpu.memory_space<vmem>>, vector<1x256xf32>
    %15 = vector.broadcast %14 : vector<1x256xf32> to vector<32x256xf32>
    %16 = arith.mulf %13, %15 : vector<32x256xf32>
    %c16_i32 = arith.constant 16 : i32
    %17 = tpu.dynamic_rotate %12 by %c16_i32 dim 1 : vector<32x256xf32>, i32 -> vector<32x256xf32>
    %c1 = arith.constant 1 : index
    %c0_12 = arith.constant 0 : index
    %18 = vector.load %arg3[%c1, %c0_12] : memref<9x256xf32, #tpu.memory_space<vmem>>, vector<1x256xf32>
    %19 = vector.broadcast %18 : vector<1x256xf32> to vector<32x256xf32>
    %20 = arith.mulf %17, %19 : vector<32x256xf32>
    %c15_i32 = arith.constant 15 : i32
    %21 = tpu.dynamic_rotate %12 by %c15_i32 dim 1 : vector<32x256xf32>, i32 -> vector<32x256xf32>
    %c2 = arith.constant 2 : index
    %c0_13 = arith.constant 0 : index
    %22 = vector.load %arg3[%c2, %c0_13] : memref<9x256xf32, #tpu.memory_space<vmem>>, vector<1x256xf32>
    %23 = vector.broadcast %22 : vector<1x256xf32> to vector<32x256xf32>
    %24 = arith.mulf %21, %23 : vector<32x256xf32>
    %c1_i32 = arith.constant 1 : i32
    %25 = tpu.dynamic_rotate %12 by %c1_i32 dim 1 : vector<32x256xf32>, i32 -> vector<32x256xf32>
    %c3 = arith.constant 3 : index
    %c0_14 = arith.constant 0 : index
    %26 = vector.load %arg3[%c3, %c0_14] : memref<9x256xf32, #tpu.memory_space<vmem>>, vector<1x256xf32>
    %27 = vector.broadcast %26 : vector<1x256xf32> to vector<32x256xf32>
    %28 = arith.mulf %25, %27 : vector<32x256xf32>
    %c255_i32 = arith.constant 255 : i32
    %29 = tpu.dynamic_rotate %12 by %c255_i32 dim 1 : vector<32x256xf32>, i32 -> vector<32x256xf32>
    %c5 = arith.constant 5 : index
    %c0_15 = arith.constant 0 : index
    %30 = vector.load %arg3[%c5, %c0_15] : memref<9x256xf32, #tpu.memory_space<vmem>>, vector<1x256xf32>
    %31 = vector.broadcast %30 : vector<1x256xf32> to vector<32x256xf32>
    %32 = arith.mulf %29, %31 : vector<32x256xf32>
    %c241_i32 = arith.constant 241 : i32
    %33 = tpu.dynamic_rotate %12 by %c241_i32 dim 1 : vector<32x256xf32>, i32 -> vector<32x256xf32>
    %c6 = arith.constant 6 : index
    %c0_16 = arith.constant 0 : index
    %34 = vector.load %arg3[%c6, %c0_16] : memref<9x256xf32, #tpu.memory_space<vmem>>, vector<1x256xf32>
    %35 = vector.broadcast %34 : vector<1x256xf32> to vector<32x256xf32>
    %36 = arith.mulf %33, %35 : vector<32x256xf32>
    %c240_i32 = arith.constant 240 : i32
    %37 = tpu.dynamic_rotate %12 by %c240_i32 dim 1 : vector<32x256xf32>, i32 -> vector<32x256xf32>
    %c7 = arith.constant 7 : index
    %c0_17 = arith.constant 0 : index
    %38 = vector.load %arg3[%c7, %c0_17] : memref<9x256xf32, #tpu.memory_space<vmem>>, vector<1x256xf32>
    %39 = vector.broadcast %38 : vector<1x256xf32> to vector<32x256xf32>
    %40 = arith.mulf %37, %39 : vector<32x256xf32>
    %c239_i32 = arith.constant 239 : i32
    %41 = tpu.dynamic_rotate %12 by %c239_i32 dim 1 : vector<32x256xf32>, i32 -> vector<32x256xf32>
    %c8 = arith.constant 8 : index
    %c0_18 = arith.constant 0 : index
    %42 = vector.load %arg3[%c8, %c0_18] : memref<9x256xf32, #tpu.memory_space<vmem>>, vector<1x256xf32>
    %43 = vector.broadcast %42 : vector<1x256xf32> to vector<32x256xf32>
    %44 = arith.mulf %41, %43 : vector<32x256xf32>
    %45 = tpu.concatenate %16, %20, %24, %28, %12, %32, %36, %40, %44 in 0 : vector<32x256xf32>, vector<32x256xf32>, vector<32x256xf32>, vector<32x256xf32>, vector<32x256xf32>, vector<32x256xf32>, vector<32x256xf32>, vector<32x256xf32>, vector<32x256xf32> -> vector<288x256xf32>
    %46 = arith.truncf %45 : vector<288x256xf32> to vector<288x256xbf16>
    %c0_19 = arith.constant 0 : index
    %c0_20 = arith.constant 0 : index
    %c0_21 = arith.constant 0 : index
    %47 = vector.load %arg5[%c0_19, %c0_20, %c0_21] : memref<4x32x288xbf16, #tpu.memory_space<vmem>>, vector<1x32x288xbf16>
    %48 = vector.shape_cast %47 : vector<1x32x288xbf16> to vector<32x288xbf16>
    %cst_22 = arith.constant dense<0.000000e+00> : vector<32x256xf32>
    %49 = tpu.matmul %48, %46, %cst_22 {dimension_numbers = #tpu.dot_dimension_numbers<[1], [0], [0], [1], [0, 0, 1, 1], [], []>} : vector<32x288xbf16>, vector<288x256xbf16>, vector<32x256xf32> -> vector<32x256xf32>
    %c0_23 = arith.constant 0 : index
    %c32 = arith.constant 32 : index
    %c0_24 = arith.constant 0 : index
    %50 = vector.load %arg7[%c0_23, %c32, %c0_24] : memref<1x168x1xf32, #tpu.memory_space<vmem>>, vector<1x32x1xf32>
    %51 = vector.shape_cast %50 : vector<1x32x1xf32> to vector<32x1xf32>
    %52 = vector.broadcast %51 : vector<32x1xf32> to vector<32x256xf32>
    %53 = arith.addf %49, %52 : vector<32x256xf32>
    %c17_i32_25 = arith.constant 17 : i32
    %54 = tpu.dynamic_rotate %53 by %c17_i32_25 dim 1 : vector<32x256xf32>, i32 -> vector<32x256xf32>
    %c0_26 = arith.constant 0 : index
    %c0_27 = arith.constant 0 : index
    %55 = vector.load %arg3[%c0_26, %c0_27] : memref<9x256xf32, #tpu.memory_space<vmem>>, vector<1x256xf32>
    %56 = vector.broadcast %55 : vector<1x256xf32> to vector<32x256xf32>
    %57 = arith.mulf %54, %56 : vector<32x256xf32>
    %c16_i32_28 = arith.constant 16 : i32
    %58 = tpu.dynamic_rotate %53 by %c16_i32_28 dim 1 : vector<32x256xf32>, i32 -> vector<32x256xf32>
    %c1_29 = arith.constant 1 : index
    %c0_30 = arith.constant 0 : index
    %59 = vector.load %arg3[%c1_29, %c0_30] : memref<9x256xf32, #tpu.memory_space<vmem>>, vector<1x256xf32>
    %60 = vector.broadcast %59 : vector<1x256xf32> to vector<32x256xf32>
    %61 = arith.mulf %58, %60 : vector<32x256xf32>
    %c15_i32_31 = arith.constant 15 : i32
    %62 = tpu.dynamic_rotate %53 by %c15_i32_31 dim 1 : vector<32x256xf32>, i32 -> vector<32x256xf32>
    %c2_32 = arith.constant 2 : index
    %c0_33 = arith.constant 0 : index
    %63 = vector.load %arg3[%c2_32, %c0_33] : memref<9x256xf32, #tpu.memory_space<vmem>>, vector<1x256xf32>
    %64 = vector.broadcast %63 : vector<1x256xf32> to vector<32x256xf32>
    %65 = arith.mulf %62, %64 : vector<32x256xf32>
    %c1_i32_34 = arith.constant 1 : i32
    %66 = tpu.dynamic_rotate %53 by %c1_i32_34 dim 1 : vector<32x256xf32>, i32 -> vector<32x256xf32>
    %c3_35 = arith.constant 3 : index
    %c0_36 = arith.constant 0 : index
    %67 = vector.load %arg3[%c3_35, %c0_36] : memref<9x256xf32, #tpu.memory_space<vmem>>, vector<1x256xf32>
    %68 = vector.broadcast %67 : vector<1x256xf32> to vector<32x256xf32>
    %69 = arith.mulf %66, %68 : vector<32x256xf32>
    %c255_i32_37 = arith.constant 255 : i32
    %70 = tpu.dynamic_rotate %53 by %c255_i32_37 dim 1 : vector<32x256xf32>, i32 -> vector<32x256xf32>
    %c5_38 = arith.constant 5 : index
    %c0_39 = arith.constant 0 : index
    %71 = vector.load %arg3[%c5_38, %c0_39] : memref<9x256xf32, #tpu.memory_space<vmem>>, vector<1x256xf32>
    %72 = vector.broadcast %71 : vector<1x256xf32> to vector<32x256xf32>
    %73 = arith.mulf %70, %72 : vector<32x256xf32>
    %c241_i32_40 = arith.constant 241 : i32
    %74 = tpu.dynamic_rotate %53 by %c241_i32_40 dim 1 : vector<32x256xf32>, i32 -> vector<32x256xf32>
    %c6_41 = arith.constant 6 : index
    %c0_42 = arith.constant 0 : index
    %75 = vector.load %arg3[%c6_41, %c0_42] : memref<9x256xf32, #tpu.memory_space<vmem>>, vector<1x256xf32>
    %76 = vector.broadcast %75 : vector<1x256xf32> to vector<32x256xf32>
    %77 = arith.mulf %74, %76 : vector<32x256xf32>
    %c240_i32_43 = arith.constant 240 : i32
    %78 = tpu.dynamic_rotate %53 by %c240_i32_43 dim 1 : vector<32x256xf32>, i32 -> vector<32x256xf32>
    %c7_44 = arith.constant 7 : index
    %c0_45 = arith.constant 0 : index
    %79 = vector.load %arg3[%c7_44, %c0_45] : memref<9x256xf32, #tpu.memory_space<vmem>>, vector<1x256xf32>
    %80 = vector.broadcast %79 : vector<1x256xf32> to vector<32x256xf32>
    %81 = arith.mulf %78, %80 : vector<32x256xf32>
    %c239_i32_46 = arith.constant 239 : i32
    %82 = tpu.dynamic_rotate %53 by %c239_i32_46 dim 1 : vector<32x256xf32>, i32 -> vector<32x256xf32>
    %c8_47 = arith.constant 8 : index
    %c0_48 = arith.constant 0 : index
    %83 = vector.load %arg3[%c8_47, %c0_48] : memref<9x256xf32, #tpu.memory_space<vmem>>, vector<1x256xf32>
    %84 = vector.broadcast %83 : vector<1x256xf32> to vector<32x256xf32>
    %85 = arith.mulf %82, %84 : vector<32x256xf32>
    %86 = tpu.concatenate %57, %61, %65, %69, %53, %73, %77, %81, %85 in 0 : vector<32x256xf32>, vector<32x256xf32>, vector<32x256xf32>, vector<32x256xf32>, vector<32x256xf32>, vector<32x256xf32>, vector<32x256xf32>, vector<32x256xf32>, vector<32x256xf32> -> vector<288x256xf32>
    %87 = arith.truncf %86 : vector<288x256xf32> to vector<288x256xbf16>
    %c1_49 = arith.constant 1 : index
    %c0_50 = arith.constant 0 : index
    %c0_51 = arith.constant 0 : index
    %88 = vector.load %arg5[%c1_49, %c0_50, %c0_51] : memref<4x32x288xbf16, #tpu.memory_space<vmem>>, vector<1x32x288xbf16>
    %89 = vector.shape_cast %88 : vector<1x32x288xbf16> to vector<32x288xbf16>
    %cst_52 = arith.constant dense<0.000000e+00> : vector<32x256xf32>
    %90 = tpu.matmul %89, %87, %cst_52 {dimension_numbers = #tpu.dot_dimension_numbers<[1], [0], [0], [1], [0, 0, 1, 1], [], []>} : vector<32x288xbf16>, vector<288x256xbf16>, vector<32x256xf32> -> vector<32x256xf32>
    %c0_53 = arith.constant 0 : index
    %c64 = arith.constant 64 : index
    %c0_54 = arith.constant 0 : index
    %91 = vector.load %arg7[%c0_53, %c64, %c0_54] : memref<1x168x1xf32, #tpu.memory_space<vmem>>, vector<1x32x1xf32>
    %92 = vector.shape_cast %91 : vector<1x32x1xf32> to vector<32x1xf32>
    %93 = vector.broadcast %92 : vector<32x1xf32> to vector<32x256xf32>
    %94 = arith.addf %90, %93 : vector<32x256xf32>
    %95 = arith.addf %94, %12 : vector<32x256xf32>
    %96 = math.tanh %95 : vector<32x256xf32>
    %c17_i32_55 = arith.constant 17 : i32
    %97 = tpu.dynamic_rotate %96 by %c17_i32_55 dim 1 : vector<32x256xf32>, i32 -> vector<32x256xf32>
    %c0_56 = arith.constant 0 : index
    %c0_57 = arith.constant 0 : index
    %98 = vector.load %arg3[%c0_56, %c0_57] : memref<9x256xf32, #tpu.memory_space<vmem>>, vector<1x256xf32>
    %99 = vector.broadcast %98 : vector<1x256xf32> to vector<32x256xf32>
    %100 = arith.mulf %97, %99 : vector<32x256xf32>
    %c16_i32_58 = arith.constant 16 : i32
    %101 = tpu.dynamic_rotate %96 by %c16_i32_58 dim 1 : vector<32x256xf32>, i32 -> vector<32x256xf32>
    %c1_59 = arith.constant 1 : index
    %c0_60 = arith.constant 0 : index
    %102 = vector.load %arg3[%c1_59, %c0_60] : memref<9x256xf32, #tpu.memory_space<vmem>>, vector<1x256xf32>
    %103 = vector.broadcast %102 : vector<1x256xf32> to vector<32x256xf32>
    %104 = arith.mulf %101, %103 : vector<32x256xf32>
    %c15_i32_61 = arith.constant 15 : i32
    %105 = tpu.dynamic_rotate %96 by %c15_i32_61 dim 1 : vector<32x256xf32>, i32 -> vector<32x256xf32>
    %c2_62 = arith.constant 2 : index
    %c0_63 = arith.constant 0 : index
    %106 = vector.load %arg3[%c2_62, %c0_63] : memref<9x256xf32, #tpu.memory_space<vmem>>, vector<1x256xf32>
    %107 = vector.broadcast %106 : vector<1x256xf32> to vector<32x256xf32>
    %108 = arith.mulf %105, %107 : vector<32x256xf32>
    %c1_i32_64 = arith.constant 1 : i32
    %109 = tpu.dynamic_rotate %96 by %c1_i32_64 dim 1 : vector<32x256xf32>, i32 -> vector<32x256xf32>
    %c3_65 = arith.constant 3 : index
    %c0_66 = arith.constant 0 : index
    %110 = vector.load %arg3[%c3_65, %c0_66] : memref<9x256xf32, #tpu.memory_space<vmem>>, vector<1x256xf32>
    %111 = vector.broadcast %110 : vector<1x256xf32> to vector<32x256xf32>
    %112 = arith.mulf %109, %111 : vector<32x256xf32>
    %c255_i32_67 = arith.constant 255 : i32
    %113 = tpu.dynamic_rotate %96 by %c255_i32_67 dim 1 : vector<32x256xf32>, i32 -> vector<32x256xf32>
    %c5_68 = arith.constant 5 : index
    %c0_69 = arith.constant 0 : index
    %114 = vector.load %arg3[%c5_68, %c0_69] : memref<9x256xf32, #tpu.memory_space<vmem>>, vector<1x256xf32>
    %115 = vector.broadcast %114 : vector<1x256xf32> to vector<32x256xf32>
    %116 = arith.mulf %113, %115 : vector<32x256xf32>
    %c241_i32_70 = arith.constant 241 : i32
    %117 = tpu.dynamic_rotate %96 by %c241_i32_70 dim 1 : vector<32x256xf32>, i32 -> vector<32x256xf32>
    %c6_71 = arith.constant 6 : index
    %c0_72 = arith.constant 0 : index
    %118 = vector.load %arg3[%c6_71, %c0_72] : memref<9x256xf32, #tpu.memory_space<vmem>>, vector<1x256xf32>
    %119 = vector.broadcast %118 : vector<1x256xf32> to vector<32x256xf32>
    %120 = arith.mulf %117, %119 : vector<32x256xf32>
    %c240_i32_73 = arith.constant 240 : i32
    %121 = tpu.dynamic_rotate %96 by %c240_i32_73 dim 1 : vector<32x256xf32>, i32 -> vector<32x256xf32>
    %c7_74 = arith.constant 7 : index
    %c0_75 = arith.constant 0 : index
    %122 = vector.load %arg3[%c7_74, %c0_75] : memref<9x256xf32, #tpu.memory_space<vmem>>, vector<1x256xf32>
    %123 = vector.broadcast %122 : vector<1x256xf32> to vector<32x256xf32>
    %124 = arith.mulf %121, %123 : vector<32x256xf32>
    %c239_i32_76 = arith.constant 239 : i32
    %125 = tpu.dynamic_rotate %96 by %c239_i32_76 dim 1 : vector<32x256xf32>, i32 -> vector<32x256xf32>
    %c8_77 = arith.constant 8 : index
    %c0_78 = arith.constant 0 : index
    %126 = vector.load %arg3[%c8_77, %c0_78] : memref<9x256xf32, #tpu.memory_space<vmem>>, vector<1x256xf32>
    %127 = vector.broadcast %126 : vector<1x256xf32> to vector<32x256xf32>
    %128 = arith.mulf %125, %127 : vector<32x256xf32>
    %129 = tpu.concatenate %100, %104, %108, %112, %96, %116, %120, %124, %128 in 0 : vector<32x256xf32>, vector<32x256xf32>, vector<32x256xf32>, vector<32x256xf32>, vector<32x256xf32>, vector<32x256xf32>, vector<32x256xf32>, vector<32x256xf32>, vector<32x256xf32> -> vector<288x256xf32>
    %130 = arith.truncf %129 : vector<288x256xf32> to vector<288x256xbf16>
    %c2_79 = arith.constant 2 : index
    %c0_80 = arith.constant 0 : index
    %c0_81 = arith.constant 0 : index
    %131 = vector.load %arg5[%c2_79, %c0_80, %c0_81] : memref<4x32x288xbf16, #tpu.memory_space<vmem>>, vector<1x32x288xbf16>
    %132 = vector.shape_cast %131 : vector<1x32x288xbf16> to vector<32x288xbf16>
    %cst_82 = arith.constant dense<0.000000e+00> : vector<32x256xf32>
    %133 = tpu.matmul %132, %130, %cst_82 {dimension_numbers = #tpu.dot_dimension_numbers<[1], [0], [0], [1], [0, 0, 1, 1], [], []>} : vector<32x288xbf16>, vector<288x256xbf16>, vector<32x256xf32> -> vector<32x256xf32>
    %c0_83 = arith.constant 0 : index
    %c96 = arith.constant 96 : index
    %c0_84 = arith.constant 0 : index
    %134 = vector.load %arg7[%c0_83, %c96, %c0_84] : memref<1x168x1xf32, #tpu.memory_space<vmem>>, vector<1x32x1xf32>
    %135 = vector.shape_cast %134 : vector<1x32x1xf32> to vector<32x1xf32>
    %136 = vector.broadcast %135 : vector<32x1xf32> to vector<32x256xf32>
    %137 = arith.addf %133, %136 : vector<32x256xf32>
    %c17_i32_85 = arith.constant 17 : i32
    %138 = tpu.dynamic_rotate %137 by %c17_i32_85 dim 1 : vector<32x256xf32>, i32 -> vector<32x256xf32>
    %c0_86 = arith.constant 0 : index
    %c0_87 = arith.constant 0 : index
    %139 = vector.load %arg3[%c0_86, %c0_87] : memref<9x256xf32, #tpu.memory_space<vmem>>, vector<1x256xf32>
    %140 = vector.broadcast %139 : vector<1x256xf32> to vector<32x256xf32>
    %141 = arith.mulf %138, %140 : vector<32x256xf32>
    %c16_i32_88 = arith.constant 16 : i32
    %142 = tpu.dynamic_rotate %137 by %c16_i32_88 dim 1 : vector<32x256xf32>, i32 -> vector<32x256xf32>
    %c1_89 = arith.constant 1 : index
    %c0_90 = arith.constant 0 : index
    %143 = vector.load %arg3[%c1_89, %c0_90] : memref<9x256xf32, #tpu.memory_space<vmem>>, vector<1x256xf32>
    %144 = vector.broadcast %143 : vector<1x256xf32> to vector<32x256xf32>
    %145 = arith.mulf %142, %144 : vector<32x256xf32>
    %c15_i32_91 = arith.constant 15 : i32
    %146 = tpu.dynamic_rotate %137 by %c15_i32_91 dim 1 : vector<32x256xf32>, i32 -> vector<32x256xf32>
    %c2_92 = arith.constant 2 : index
    %c0_93 = arith.constant 0 : index
    %147 = vector.load %arg3[%c2_92, %c0_93] : memref<9x256xf32, #tpu.memory_space<vmem>>, vector<1x256xf32>
    %148 = vector.broadcast %147 : vector<1x256xf32> to vector<32x256xf32>
    %149 = arith.mulf %146, %148 : vector<32x256xf32>
    %c1_i32_94 = arith.constant 1 : i32
    %150 = tpu.dynamic_rotate %137 by %c1_i32_94 dim 1 : vector<32x256xf32>, i32 -> vector<32x256xf32>
    %c3_95 = arith.constant 3 : index
    %c0_96 = arith.constant 0 : index
    %151 = vector.load %arg3[%c3_95, %c0_96] : memref<9x256xf32, #tpu.memory_space<vmem>>, vector<1x256xf32>
    %152 = vector.broadcast %151 : vector<1x256xf32> to vector<32x256xf32>
    %153 = arith.mulf %150, %152 : vector<32x256xf32>
    %c255_i32_97 = arith.constant 255 : i32
    %154 = tpu.dynamic_rotate %137 by %c255_i32_97 dim 1 : vector<32x256xf32>, i32 -> vector<32x256xf32>
    %c5_98 = arith.constant 5 : index
    %c0_99 = arith.constant 0 : index
    %155 = vector.load %arg3[%c5_98, %c0_99] : memref<9x256xf32, #tpu.memory_space<vmem>>, vector<1x256xf32>
    %156 = vector.broadcast %155 : vector<1x256xf32> to vector<32x256xf32>
    %157 = arith.mulf %154, %156 : vector<32x256xf32>
    %c241_i32_100 = arith.constant 241 : i32
    %158 = tpu.dynamic_rotate %137 by %c241_i32_100 dim 1 : vector<32x256xf32>, i32 -> vector<32x256xf32>
    %c6_101 = arith.constant 6 : index
    %c0_102 = arith.constant 0 : index
    %159 = vector.load %arg3[%c6_101, %c0_102] : memref<9x256xf32, #tpu.memory_space<vmem>>, vector<1x256xf32>
    %160 = vector.broadcast %159 : vector<1x256xf32> to vector<32x256xf32>
    %161 = arith.mulf %158, %160 : vector<32x256xf32>
    %c240_i32_103 = arith.constant 240 : i32
    %162 = tpu.dynamic_rotate %137 by %c240_i32_103 dim 1 : vector<32x256xf32>, i32 -> vector<32x256xf32>
    %c7_104 = arith.constant 7 : index
    %c0_105 = arith.constant 0 : index
    %163 = vector.load %arg3[%c7_104, %c0_105] : memref<9x256xf32, #tpu.memory_space<vmem>>, vector<1x256xf32>
    %164 = vector.broadcast %163 : vector<1x256xf32> to vector<32x256xf32>
    %165 = arith.mulf %162, %164 : vector<32x256xf32>
    %c239_i32_106 = arith.constant 239 : i32
    %166 = tpu.dynamic_rotate %137 by %c239_i32_106 dim 1 : vector<32x256xf32>, i32 -> vector<32x256xf32>
    %c8_107 = arith.constant 8 : index
    %c0_108 = arith.constant 0 : index
    %167 = vector.load %arg3[%c8_107, %c0_108] : memref<9x256xf32, #tpu.memory_space<vmem>>, vector<1x256xf32>
    %168 = vector.broadcast %167 : vector<1x256xf32> to vector<32x256xf32>
    %169 = arith.mulf %166, %168 : vector<32x256xf32>
    %170 = tpu.concatenate %141, %145, %149, %153, %137, %157, %161, %165, %169 in 0 : vector<32x256xf32>, vector<32x256xf32>, vector<32x256xf32>, vector<32x256xf32>, vector<32x256xf32>, vector<32x256xf32>, vector<32x256xf32>, vector<32x256xf32>, vector<32x256xf32> -> vector<288x256xf32>
    %171 = arith.truncf %170 : vector<288x256xf32> to vector<288x256xbf16>
    %c3_109 = arith.constant 3 : index
    %c0_110 = arith.constant 0 : index
    %c0_111 = arith.constant 0 : index
    %172 = vector.load %arg5[%c3_109, %c0_110, %c0_111] : memref<4x32x288xbf16, #tpu.memory_space<vmem>>, vector<1x32x288xbf16>
    %173 = vector.shape_cast %172 : vector<1x32x288xbf16> to vector<32x288xbf16>
    %cst_112 = arith.constant dense<0.000000e+00> : vector<32x256xf32>
    %174 = tpu.matmul %173, %171, %cst_112 {dimension_numbers = #tpu.dot_dimension_numbers<[1], [0], [0], [1], [0, 0, 1, 1], [], []>} : vector<32x288xbf16>, vector<288x256xbf16>, vector<32x256xf32> -> vector<32x256xf32>
    %c0_113 = arith.constant 0 : index
    %c128 = arith.constant 128 : index
    %c0_114 = arith.constant 0 : index
    %175 = vector.load %arg7[%c0_113, %c128, %c0_114] : memref<1x168x1xf32, #tpu.memory_space<vmem>>, vector<1x32x1xf32>
    %176 = vector.shape_cast %175 : vector<1x32x1xf32> to vector<32x1xf32>
    %177 = vector.broadcast %176 : vector<32x1xf32> to vector<32x256xf32>
    %178 = arith.addf %174, %177 : vector<32x256xf32>
    %179 = arith.addf %178, %96 : vector<32x256xf32>
    %180 = math.tanh %179 : vector<32x256xf32>
    %c0_115 = arith.constant 0 : index
    %c0_116 = arith.constant 0 : index
    %181 = vector.load %arg6[%c0_115, %c0_116] : memref<8x32xbf16, #tpu.memory_space<vmem>>, vector<8x32xbf16>
    %182 = arith.truncf %180 : vector<32x256xf32> to vector<32x256xbf16>
    %cst_117 = arith.constant dense<0.000000e+00> : vector<8x256xf32>
    %183 = tpu.matmul %181, %182, %cst_117 {dimension_numbers = #tpu.dot_dimension_numbers<[1], [0], [0], [1], [0, 0, 1, 1], [], []>} : vector<8x32xbf16>, vector<32x256xbf16>, vector<8x256xf32> -> vector<8x256xf32>
    %c0_118 = arith.constant 0 : index
    %c160 = arith.constant 160 : index
    %c0_119 = arith.constant 0 : index
    %184 = vector.load %arg7[%c0_118, %c160, %c0_119] : memref<1x168x1xf32, #tpu.memory_space<vmem>>, vector<1x8x1xf32>
    %185 = vector.shape_cast %184 : vector<1x8x1xf32> to vector<8x1xf32>
    %186 = vector.broadcast %185 : vector<8x1xf32> to vector<8x256xf32>
    %187 = arith.addf %183, %186 : vector<8x256xf32>
    %188 = vector.extract_strided_slice %187 {offsets = [0, 0], sizes = [4, 256], strides = [1, 1]} : vector<8x256xf32> to vector<4x256xf32>
    %189 = arith.mulf %188, %4 : vector<4x256xf32>
    %c4_i32 = arith.constant 4 : i32
    %190 = tpu.dynamic_rotate %187 by %c4_i32 dim 0 : vector<8x256xf32>, i32 -> vector<8x256xf32>
    %191 = vector.extract_strided_slice %190 {offsets = [0, 0], sizes = [4, 256], strides = [1, 1]} : vector<8x256xf32> to vector<4x256xf32>
    %192 = arith.mulf %191, %4 : vector<4x256xf32>
    %c0_120 = arith.constant 0 : index
    %c0_121 = arith.constant 0 : index
    %193 = vector.load %arg9[%c0_120, %c0_121] : memref<4x1xf32, #tpu.memory_space<vmem>>, vector<4x1xf32>
    %194 = vector.broadcast %193 : vector<4x1xf32> to vector<4x256xf32>
    %195 = arith.mulf %192, %194 : vector<4x256xf32>
    %196 = math.tanh %195 : vector<4x256xf32>
    %c0_122 = arith.constant 0 : index
    %c0_123 = arith.constant 0 : index
    %197 = vector.load %arg8[%c0_122, %c0_123] : memref<4x1xf32, #tpu.memory_space<vmem>>, vector<4x1xf32>
    %198 = vector.broadcast %197 : vector<4x1xf32> to vector<4x256xf32>
    %199 = arith.mulf %196, %198 : vector<4x256xf32>
    %200 = arith.mulf %1, %2 : vector<4x256xf32>
    %201 = math.exp %199 : vector<4x256xf32>
    %202 = arith.mulf %1, %201 : vector<4x256xf32>
    %203 = arith.addf %202, %189 : vector<4x256xf32>
    %204 = arith.mulf %4, %203 : vector<4x256xf32>
    %205 = arith.addf %200, %204 : vector<4x256xf32>
    %c0_124 = arith.constant 0 : index
    %c0_125 = arith.constant 0 : index
    %c0_126 = arith.constant 0 : index
    %206 = vector.load %arg10[%c0_124, %c0_125, %c0_126] : memref<1x4x256xf32, #tpu.memory_space<vmem>>, vector<1x4x256xf32>
    %207 = vector.shape_cast %206 : vector<1x4x256xf32> to vector<4x256xf32>
    %208 = vector.shape_cast %205 : vector<4x256xf32> to vector<1x4x256xf32>
    tpu.vector_store %arg10[%c0_124, %c0_125, %c0_126], %208 {strides = array<i32>} : memref<1x4x256xf32, #tpu.memory_space<vmem>>, vector<1x4x256xf32>,
    %209 = vector.shape_cast %199 : vector<4x256xf32> to vector<1x4x256xf32>
    %cst_127 = arith.constant dense<0.000000e+00> : vector<1xf32>
    %210 = vector.multi_reduction <add>, %209, %cst_127 [1, 2] : vector<1x4x256xf32> to vector<1xf32>
    %211 = vector.shape_cast %210 : vector<1xf32> to vector<1x1x1xf32>
    %212 = vector.extract %211[0, 0, 0] : f32 from vector<1x1x1xf32>
    %213 = vector.broadcast %212 : f32 to vector<1x1xf32>
    %c0_128 = arith.constant 0 : index
    %c0_129 = arith.constant 0 : index
    %c0_130 = arith.constant 0 : index
    %214 = vector.load %arg11[%c0_128, %c0_129, %c0_130] : memref<1x1x1xf32, #tpu.memory_space<vmem>>, vector<1x1x1xf32>
    %215 = vector.shape_cast %214 : vector<1x1x1xf32> to vector<1x1xf32>
    %216 = vector.shape_cast %213 : vector<1x1xf32> to vector<1x1x1xf32>
    tpu.vector_store %arg11[%c0_128, %c0_129, %c0_130], %216 {strides = array<i32>} : memref<1x1x1xf32, #tpu.memory_space<vmem>>, vector<1x1x1xf32>,
    return
  }
  func.func @transform_0(%arg0: i32) -> (i32, i32, i32) {
    %c0_i32 = arith.constant 0 : i32
    %c0_i32_0 = arith.constant 0 : i32
    %c0_i32_1 = arith.constant 0 : i32
    return %arg0, %c0_i32, %c0_i32_0 : i32, i32, i32
  }
  func.func @transform_1(%arg0: i32) -> (i32, i32) {
    %c0_i32 = arith.constant 0 : i32
    %c0_i32_0 = arith.constant 0 : i32
    %c0_i32_1 = arith.constant 0 : i32
    return %c0_i32, %c0_i32_0 : i32, i32
  }
  func.func @transform_2(%arg0: i32) -> (i32, i32) {
    %c0_i32 = arith.constant 0 : i32
    %c0_i32_0 = arith.constant 0 : i32
    %c0_i32_1 = arith.constant 0 : i32
    return %c0_i32, %c0_i32_0 : i32, i32
  }
  func.func @transform_3(%arg0: i32) -> (i32, i32) {
    %c0_i32 = arith.constant 0 : i32
    %c0_i32_0 = arith.constant 0 : i32
    %c0_i32_1 = arith.constant 0 : i32
    return %c0_i32, %c0_i32_0 : i32, i32
  }
  func.func @transform_4(%arg0: i32) -> (i32, i32, i32) {
    %c0_i32 = arith.constant 0 : i32
    %c0_i32_0 = arith.constant 0 : i32
    %c0_i32_1 = arith.constant 0 : i32
    %c0_i32_2 = arith.constant 0 : i32
    return %c0_i32, %c0_i32_0, %c0_i32_1 : i32, i32, i32
  }
  func.func @transform_5(%arg0: i32) -> (i32, i32) {
    %c0_i32 = arith.constant 0 : i32
    %c0_i32_0 = arith.constant 0 : i32
    %c0_i32_1 = arith.constant 0 : i32
    return %c0_i32, %c0_i32_0 : i32, i32
  }
  func.func @transform_6(%arg0: i32) -> (i32, i32, i32) {
    %c0_i32 = arith.constant 0 : i32
    %c0_i32_0 = arith.constant 0 : i32
    %c0_i32_1 = arith.constant 0 : i32
    return %arg0, %c0_i32, %c0_i32_0 : i32, i32, i32
  }
  func.func @transform_7(%arg0: i32) -> (i32, i32) {
    %c0_i32 = arith.constant 0 : i32
    %c0_i32_0 = arith.constant 0 : i32
    %c0_i32_1 = arith.constant 0 : i32
    return %c0_i32, %c0_i32_0 : i32, i32
  }
  func.func @transform_8(%arg0: i32) -> (i32, i32) {
    %c0_i32 = arith.constant 0 : i32
    %c0_i32_0 = arith.constant 0 : i32
    %c0_i32_1 = arith.constant 0 : i32
    return %c0_i32, %c0_i32_0 : i32, i32
  }
  func.func @transform_9(%arg0: i32) -> (i32, i32, i32) {
    %c0_i32 = arith.constant 0 : i32
    %c0_i32_0 = arith.constant 0 : i32
    %c0_i32_1 = arith.constant 0 : i32
    return %arg0, %c0_i32, %c0_i32_0 : i32, i32, i32
  }
  func.func @transform_10(%arg0: i32) -> (i32, i32, i32) {
    %c0_i32 = arith.constant 0 : i32
    %c0_i32_0 = arith.constant 0 : i32
    %c0_i32_1 = arith.constant 0 : i32
    return %arg0, %c0_i32, %c0_i32_0 : i32, i32, i32
  }
}

</mosaic_0001>

<llo_original>
// kernel: coupling_layer_conv_forward.1
$region0: #{coupling_layer_conv_forward.1}
  #allocation0 [shape = 'u32[]', space=smem, size = 0x4, offset = 0x4, fixed_abs, tag = 'smem constant byte address 0x4 - core index']
  #allocation1 [shape = 'u32[144,128]{1,0:T(1,128)}', space=vmem, size = 0x12000, scoped, tag = 'internal scratch']
  %s0 = inlined_call_operand.vmem [shape: f32[2,4,256], index: 0, kind: input, shape index: {}]
  %s1 = inlined_call_operand.vmem [shape: f32[4,256], index: 1, kind: input, shape index: {}]
  %s2 = inlined_call_operand.vmem [shape: f32[9,256], index: 2, kind: input, shape index: {}]
  %s3 = inlined_call_operand.vmem [shape: bf16[32,4], index: 3, kind: input, shape index: {}]
  %s4 = inlined_call_operand.vmem [shape: bf16[4,32,288], index: 4, kind: input, shape index: {}]
  %s5 = inlined_call_operand.vmem [shape: bf16[8,32], index: 5, kind: input, shape index: {}]
  %s6 = inlined_call_operand.vmem [shape: f32[2,168,1], index: 6, kind: input, shape index: {}]
  %s7 = inlined_call_operand.vmem [shape: f32[4,1], index: 7, kind: input, shape index: {}]
  %s8 = inlined_call_operand.vmem [shape: f32[4,1], index: 8, kind: input, shape index: {}]
  %s9 = inlined_call_operand.vmem [shape: f32[2,4,256], index: 9, kind: output, shape index: {0}]
  %s10 = inlined_call_operand.vmem [shape: f32[2,1,1], index: 10, kind: output, shape index: {1}]
  %11 = xla_tuple %s9, %s10
  %s12 = sld [smem:[#allocation0]]
  $region77: #{coupling_layer_conv_forward.1} parent=0
    _
  %s14 = ssub.s32 1, %s12
  %s15 = scalar_select 0, %s14, %s12
  loop: start=0, step=1, limit=4
  $region2: #{coupling_layer_conv_forward.1} parent=0 // loop_pre_header
    _
  $region3: #{coupling_layer_conv_forward.1} parent=0 // loop_header
    %s17 = sphi 0, %s21
    %p18 = scmp.ge.s32.totalorder %s17, 4
    %s27 = sphi 0, %s29
    %s30 = sphi 0, %s27
    %s31 = sphi 0, %s30
    %s47 = sphi 0, %s31
    %s51 = sphi 0, %s51
    %s53 = sphi 0, %s51
    %s54 = sphi 0, %s53
    %s68 = sphi 0, %s54
    %s72 = sphi 0, %s72
    %s74 = sphi 0, %s72
    %s75 = sphi 0, %s74
    %s89 = sphi 0, %s75
    %s93 = sphi 0, %s93
    %s95 = sphi 0, %s93
    %s96 = sphi 0, %s95
    %s110 = sphi 0, %s96
    %s114 = sphi 0, %s114
    %s116 = sphi 0, %s114
    %s117 = sphi 0, %s116
    %s131 = sphi 0, %s117
    %s135 = sphi 0, %s135
    %s137 = sphi 0, %s135
    %s138 = sphi 0, %s137
    %s152 = sphi 0, %s138
    %s158 = sphi 0, %s160
    %s161 = sphi 0, %s158
    %s162 = sphi 0, %s161
    %s178 = sphi 0, %s162
    %s182 = sphi 0, %s182
    %s184 = sphi 0, %s182
    %s185 = sphi 0, %s184
    %s199 = sphi 0, %s185
    %s203 = sphi 0, %s203
    %s205 = sphi 0, %s203
    %s206 = sphi 0, %s205
    %s220 = sphi 0, %s206
    %s226 = sphi 0, %s228
    %s229 = sphi 0, %s226
    %s230 = sphi 0, %s229
    %s246 = sphi 0, %s230
    %s252 = sphi 0, %s254
    %s255 = sphi 0, %s252
    %s256 = sphi 0, %s255
    %s272 = sphi 0, %s256
  $region4: #{coupling_layer_conv_forward.1} parent=0 // loop_header_branch
    %20 = sbr.rel (%p18) target = $region8
  $region5: #{coupling_layer_conv_forward.1} parent=0 // loop_body
    %s22 = ssub.s32 %s17, 1
    %s23 = ssub.s32 %s17, 2
    %s24 = sadd.s32 %s17, 1
    %s25 = ssub.s32 %s17, %s24
    %p26 = scmp.eq.s32.totalorder %s25, 0
    %s28 = sadd.s32 %s27, 1
    %s29 = scalar_select %p26, %s27, %s28
    %p32 = pneg %p26
    %p33 = scmp.eq.s32.totalorder %s17, 1
    %p34 = por %p32, %p33
    %p35 = scmp.ne.s32.totalorder %s27, %s30
    %p36 = scmp.eq.s32.totalorder %s17, 0
    %p37 = por %p35, %p36
    %p38 = scmp.ne.s32.totalorder %s27, %s30
    %p39 = scmp.eq.s32.totalorder %s22, 1
    %p40 = por %p38, %p39
    %p41 = scmp.ne.s32.totalorder %s30, %s31
    %p42 = scmp.eq.s32.totalorder %s22, 0
    %p43 = por %p41, %p42
    %p44 = scmp.ne.s32.totalorder %s30, %s31
    %p45 = scmp.eq.s32.totalorder %s23, 1
    %p46 = por %p44, %p45
    %p48 = scmp.ne.s32.totalorder %s31, %s47
    %p49 = scmp.eq.s32.totalorder %s23, 0
    %p50 = por %p48, %p49
    %s52 = sadd.s32 %s51, 1
    %p55 = scmp.eq.s32.totalorder %s17, 1
    %p56 = scmp.ne.s32.totalorder %s51, %s53
    %p57 = scmp.eq.s32.totalorder %s17, 0
    %p58 = por %p56, %p57
    %p59 = scmp.ne.s32.totalorder %s51, %s53
    %p60 = scmp.eq.s32.totalorder %s22, 1
    %p61 = por %p59, %p60
    %p62 = scmp.ne.s32.totalorder %s53, %s54
    %p63 = scmp.eq.s32.totalorder %s22, 0
    %p64 = por %p62, %p63
    %p65 = scmp.ne.s32.totalorder %s53, %s54
    %p66 = scmp.eq.s32.totalorder %s23, 1
    %p67 = por %p65, %p66
    %p69 = scmp.ne.s32.totalorder %s54, %s68
    %p70 = scmp.eq.s32.totalorder %s23, 0
    %p71 = por %p69, %p70
    %s73 = sadd.s32 %s72, 1
    %p76 = scmp.eq.s32.totalorder %s17, 1
    %p77 = scmp.ne.s32.totalorder %s72, %s74
    %p78 = scmp.eq.s32.totalorder %s17, 0
    %p79 = por %p77, %p78
    %p80 = scmp.ne.s32.totalorder %s72, %s74
    %p81 = scmp.eq.s32.totalorder %s22, 1
    %p82 = por %p80, %p81
    %p83 = scmp.ne.s32.totalorder %s74, %s75
    %p84 = scmp.eq.s32.totalorder %s22, 0
    %p85 = por %p83, %p84
    %p86 = scmp.ne.s32.totalorder %s74, %s75
    %p87 = scmp.eq.s32.totalorder %s23, 1
    %p88 = por %p86, %p87
    %p90 = scmp.ne.s32.totalorder %s75, %s89
    %p91 = scmp.eq.s32.totalorder %s23, 0
    %p92 = por %p90, %p91
    %s94 = sadd.s32 %s93, 1
    %p97 = scmp.eq.s32.totalorder %s17, 1
    %p98 = scmp.ne.s32.totalorder %s93, %s95
    %p99 = scmp.eq.s32.totalorder %s17, 0
    %p100 = por %p98, %p99
    %p101 = scmp.ne.s32.totalorder %s93, %s95
    %p102 = scmp.eq.s32.totalorder %s22, 1
    %p103 = por %p101, %p102
    %p104 = scmp.ne.s32.totalorder %s95, %s96
    %p105 = scmp.eq.s32.totalorder %s22, 0
    %p106 = por %p104, %p105
    %p107 = scmp.ne.s32.totalorder %s95, %s96
    %p108 = scmp.eq.s32.totalorder %s23, 1
    %p109 = por %p107, %p108
    %p111 = scmp.ne.s32.totalorder %s96, %s110
    %p112 = scmp.eq.s32.totalorder %s23, 0
    %p113 = por %p111, %p112
    %s115 = sadd.s32 %s114, 1
    %p118 = scmp.eq.s32.totalorder %s17, 1
    %p119 = scmp.ne.s32.totalorder %s114, %s116
    %p120 = scmp.eq.s32.totalorder %s17, 0
    %p121 = por %p119, %p120
    %p122 = scmp.ne.s32.totalorder %s114, %s116
    %p123 = scmp.eq.s32.totalorder %s22, 1
    %p124 = por %p122, %p123
    %p125 = scmp.ne.s32.totalorder %s116, %s117
    %p126 = scmp.eq.s32.totalorder %s22, 0
    %p127 = por %p125, %p126
    %p128 = scmp.ne.s32.totalorder %s116, %s117
    %p129 = scmp.eq.s32.totalorder %s23, 1
    %p130 = por %p128, %p129
    %p132 = scmp.ne.s32.totalorder %s117, %s131
    %p133 = scmp.eq.s32.totalorder %s23, 0
    %p134 = por %p132, %p133
    %s136 = sadd.s32 %s135, 1
    %p139 = scmp.eq.s32.totalorder %s17, 1
    %p140 = scmp.ne.s32.totalorder %s135, %s137
    %p141 = scmp.eq.s32.totalorder %s17, 0
    %p142 = por %p140, %p141
    %p143 = scmp.ne.s32.totalorder %s135, %s137
    %p144 = scmp.eq.s32.totalorder %s22, 1
    %p145 = por %p143, %p144
    %p146 = scmp.ne.s32.totalorder %s137, %s138
    %p147 = scmp.eq.s32.totalorder %s22, 0
    %p148 = por %p146, %p147
    %p149 = scmp.ne.s32.totalorder %s137, %s138
    %p150 = scmp.eq.s32.totalorder %s23, 1
    %p151 = por %p149, %p150
    %p153 = scmp.ne.s32.totalorder %s138, %s152
    %p154 = scmp.eq.s32.totalorder %s23, 0
    %p155 = por %p153, %p154
    %s156 = ssub.s32 %s17, %s24
    %p157 = scmp.eq.s32.totalorder %s156, 0
    %s159 = sadd.s32 %s158, 1
    %s160 = scalar_select %p157, %s158, %s159
    %p163 = pneg %p157
    %p164 = scmp.eq.s32.totalorder %s17, 1
    %p165 = por %p163, %p164
    %p166 = scmp.ne.s32.totalorder %s158, %s161
    %p167 = scmp.eq.s32.totalorder %s17, 0
    %p168 = por %p166, %p167
    %p169 = scmp.ne.s32.totalorder %s158, %s161
    %p170 = scmp.eq.s32.totalorder %s22, 1
    %p171 = por %p169, %p170
    %p172 = scmp.ne.s32.totalorder %s161, %s162
    %p173 = scmp.eq.s32.totalorder %s22, 0
    %p174 = por %p172, %p173
    %p175 = scmp.ne.s32.totalorder %s161, %s162
    %p176 = scmp.eq.s32.totalorder %s23, 1
    %p177 = por %p175, %p176
    %p179 = scmp.ne.s32.totalorder %s162, %s178
    %p180 = scmp.eq.s32.totalorder %s23, 0
    %p181 = por %p179, %p180
    %s183 = sadd.s32 %s182, 1
    %p186 = scmp.eq.s32.totalorder %s17, 1
    %p187 = scmp.ne.s32.totalorder %s182, %s184
    %p188 = scmp.eq.s32.totalorder %s17, 0
    %p189 = por %p187, %p188
    %p190 = scmp.ne.s32.totalorder %s182, %s184
    %p191 = scmp.eq.s32.totalorder %s22, 1
    %p192 = por %p190, %p191
    %p193 = scmp.ne.s32.totalorder %s184, %s185
    %p194 = scmp.eq.s32.totalorder %s22, 0
    %p195 = por %p193, %p194
    %p196 = scmp.ne.s32.totalorder %s184, %s185
    %p197 = scmp.eq.s32.totalorder %s23, 1
    %p198 = por %p196, %p197
    %p200 = scmp.ne.s32.totalorder %s185, %s199
    %p201 = scmp.eq.s32.totalorder %s23, 0
    %p202 = por %p200, %p201
    %s204 = sadd.s32 %s203, 1
    %p207 = scmp.eq.s32.totalorder %s17, 1
    %p208 = scmp.ne.s32.totalorder %s203, %s205
    %p209 = scmp.eq.s32.totalorder %s17, 0
    %p210 = por %p208, %p209
    %p211 = scmp.ne.s32.totalorder %s203, %s205
    %p212 = scmp.eq.s32.totalorder %s22, 1
    %p213 = por %p211, %p212
    %p214 = scmp.ne.s32.totalorder %s205, %s206
    %p215 = scmp.eq.s32.totalorder %s22, 0
    %p216 = por %p214, %p215
    %p217 = scmp.ne.s32.totalorder %s205, %s206
    %p218 = scmp.eq.s32.totalorder %s23, 1
    %p219 = por %p217, %p218
    %p221 = scmp.ne.s32.totalorder %s206, %s220
    %p222 = scmp.eq.s32.totalorder %s23, 0
    %p223 = por %p221, %p222
    %s224 = ssub.s32 %s17, %s24
    %p225 = scmp.eq.s32.totalorder %s224, 0
    %s227 = sadd.s32 %s226, 1
    %s228 = scalar_select %p225, %s226, %s227
    %p231 = pneg %p225
    %p232 = scmp.eq.s32.totalorder %s17, 1
    %p233 = por %p231, %p232
    %p234 = scmp.ne.s32.totalorder %s226, %s229
    %p235 = scmp.eq.s32.totalorder %s17, 0
    %p236 = por %p234, %p235
    %p237 = scmp.ne.s32.totalorder %s226, %s229
    %p238 = scmp.eq.s32.totalorder %s22, 1
    %p239 = por %p237, %p238
    %p240 = scmp.ne.s32.totalorder %s229, %s230
    %p241 = scmp.eq.s32.totalorder %s22, 0
    %p242 = por %p240, %p241
    %p243 = scmp.ne.s32.totalorder %s229, %s230
    %p244 = scmp.eq.s32.totalorder %s23, 1
    %p245 = por %p243, %p244
    %p247 = scmp.ne.s32.totalorder %s230, %s246
    %p248 = scmp.eq.s32.totalorder %s23, 0
    %p249 = por %p247, %p248
    %s250 = ssub.s32 %s17, %s24
    %p251 = scmp.eq.s32.totalorder %s250, 0
    %s253 = sadd.s32 %s252, 1
    %s254 = scalar_select %p251, %s252, %s253
    %p257 = pneg %p251
    %p258 = scmp.eq.s32.totalorder %s17, 1
    %p259 = por %p257, %p258
    %p260 = scmp.ne.s32.totalorder %s252, %s255
    %p261 = scmp.eq.s32.totalorder %s17, 0
    %p262 = por %p260, %p261
    %p263 = scmp.ne.s32.totalorder %s252, %s255
    %p264 = scmp.eq.s32.totalorder %s22, 1
    %p265 = por %p263, %p264
    %p266 = scmp.ne.s32.totalorder %s255, %s256
    %p267 = scmp.eq.s32.totalorder %s22, 0
    %p268 = por %p266, %p267
    %p269 = scmp.ne.s32.totalorder %s255, %s256
    %p270 = scmp.eq.s32.totalorder %s23, 1
    %p271 = por %p269, %p270
    %p273 = scmp.ne.s32.totalorder %s256, %s272
    %p274 = scmp.eq.s32.totalorder %s23, 0
    %p275 = por %p273, %p274
    %p276 = scmp.le.s32.totalorder 1, %s17
    %p277 = scmp.lt.s32.totalorder %s17, 3
    %p278 = pnand %p276, %p277
    %p279 = pneg %p278
    // Predicated region
    $region9: #{coupling_layer_conv_forward.1} parent=5 // pred_check
      _
    $region10: #{coupling_layer_conv_forward.1} parent=5 // pred_check_branch
      %281 = sbr.rel (%p278) target = $region12
    $region11: #{coupling_layer_conv_forward.1} parent=5 // pred_region
      %s282 = ssub.s32 %s17, 1
      // Predicated region
      $region13: #{coupling_layer_conv_forward.1} parent=11 // pred_check
        %p283 = pneg %p64
      $region14: #{coupling_layer_conv_forward.1} parent=11 // pred_check_branch
        %285 = sbr.rel (%p283) target = $region16
      $region15: #{coupling_layer_conv_forward.1} parent=11 // pred_region
        _
      $region16: #{coupling_layer_conv_forward.1} parent=11 // pred_fallthru
        _
      // Predicated region
      $region17: #{coupling_layer_conv_forward.1} parent=11 // pred_check
        %p286 = pneg %p85
      $region18: #{coupling_layer_conv_forward.1} parent=11 // pred_check_branch
        %288 = sbr.rel (%p286) target = $region20
      $region19: #{coupling_layer_conv_forward.1} parent=11 // pred_region
        _
      $region20: #{coupling_layer_conv_forward.1} parent=11 // pred_fallthru
        _
      // Predicated region
      $region21: #{coupling_layer_conv_forward.1} parent=11 // pred_check
        %p289 = pneg %p106
      $region22: #{coupling_layer_conv_forward.1} parent=11 // pred_check_branch
        %291 = sbr.rel (%p289) target = $region24
      $region23: #{coupling_layer_conv_forward.1} parent=11 // pred_region
        _
      $region24: #{coupling_layer_conv_forward.1} parent=11 // pred_fallthru
        _
      // Predicated region
      $region25: #{coupling_layer_conv_forward.1} parent=11 // pred_check
        %p292 = pneg %p127
      $region26: #{coupling_layer_conv_forward.1} parent=11 // pred_check_branch
        %294 = sbr.rel (%p292) target = $region28
      $region27: #{coupling_layer_conv_forward.1} parent=11 // pred_region
        _
      $region28: #{coupling_layer_conv_forward.1} parent=11 // pred_fallthru
        _
      // Predicated region
      $region29: #{coupling_layer_conv_forward.1} parent=11 // pred_check
        %p295 = pneg %p148
      $region30: #{coupling_layer_conv_forward.1} parent=11 // pred_check_branch
        %297 = sbr.rel (%p295) target = $region32
      $region31: #{coupling_layer_conv_forward.1} parent=11 // pred_region
        _
      $region32: #{coupling_layer_conv_forward.1} parent=11 // pred_fallthru
        _
      // Predicated region
      $region33: #{coupling_layer_conv_forward.1} parent=11 // pred_check
        %p298 = pneg %p195
      $region34: #{coupling_layer_conv_forward.1} parent=11 // pred_check_branch
        %300 = sbr.rel (%p298) target = $region36
      $region35: #{coupling_layer_conv_forward.1} parent=11 // pred_region
        _
      $region36: #{coupling_layer_conv_forward.1} parent=11 // pred_fallthru
        _
      // Predicated region
      $region37: #{coupling_layer_conv_forward.1} parent=11 // pred_check
        %p301 = pneg %p216
      $region38: #{coupling_layer_conv_forward.1} parent=11 // pred_check_branch
        %303 = sbr.rel (%p301) target = $region40
      $region39: #{coupling_layer_conv_forward.1} parent=11 // pred_region
        _
      $region40: #{coupling_layer_conv_forward.1} parent=11 // pred_fallthru
        _
    $region12: #{coupling_layer_conv_forward.1} parent=5 // pred_fallthru
      _
    %p304 = scmp.lt.s32.totalorder %s17, 2
    // Predicated region
    $region41: #{coupling_layer_conv_forward.1} parent=5 // pred_check
      %p305 = pneg %p304
    $region42: #{coupling_layer_conv_forward.1} parent=5 // pred_check_branch
      %307 = sbr.rel (%p305) target = $region44
    $region43: #{coupling_layer_conv_forward.1} parent=5 // pred_region
      // Predicated region
      $region45: #{coupling_layer_conv_forward.1} parent=43 // pred_check
        %p308 = pneg %p37
      $region46: #{coupling_layer_conv_forward.1} parent=43 // pred_check_branch
        %310 = sbr.rel (%p308) target = $region48
      $region47: #{coupling_layer_conv_forward.1} parent=43 // pred_region
        %p311 = scmp.lt.s32.totalorder %s17, 1
        %s312 = scalar_select %p311, %s17, 1
        %s313 = smul.addr %s312, 2
        %s314 = smul.addr %s313, 4
        %s315 = scalar_lea.vmem %s0, %s314
      $region48: #{coupling_layer_conv_forward.1} parent=43 // pred_fallthru
        _
      // Predicated region
      $region49: #{coupling_layer_conv_forward.1} parent=43 // pred_check
        %p316 = pneg %p168
      $region50: #{coupling_layer_conv_forward.1} parent=43 // pred_check_branch
        %318 = sbr.rel (%p316) target = $region52
      $region51: #{coupling_layer_conv_forward.1} parent=43 // pred_region
        %p319 = scmp.lt.s32.totalorder %s17, 1
        %s320 = scalar_select %p319, %s17, 1
        %s321 = smul.addr %s320, 21
        %s322 = smul.addr %s321, 8
        %s323 = scalar_lea.vmem %s6, %s322
      $region52: #{coupling_layer_conv_forward.1} parent=43 // pred_fallthru
        _
    $region44: #{coupling_layer_conv_forward.1} parent=5 // pred_fallthru
      _
    %p324 = scmp.le.s32.totalorder 1, %s17
    %p325 = scmp.lt.s32.totalorder %s17, 3
    %p326 = pnand %p324, %p325
    %p327 = pneg %p326
    // Predicated region
    $region53: #{coupling_layer_conv_forward.1} parent=5 // pred_check
      _
    $region54: #{coupling_layer_conv_forward.1} parent=5 // pred_check_branch
      %329 = sbr.rel (%p326) target = $region56
    $region55: #{coupling_layer_conv_forward.1} parent=5 // pred_region
      %s330 = ssub.s32 %s17, 1
      %p331 = scmp.lt.s32.totalorder %s22, 1
      %s332 = scalar_select %p331, %s22, 1
      %s333 = smul.addr %s332, 2
      %s334 = smul.addr %s333, 4
      %s335 = scalar_lea.vmem %s0, %s334
      %p336 = pneg %p43
      %p337 = pneg %p40
      %p338 = pneg %p64
      %p339 = pneg %p61
      %p340 = pneg %p85
      %p341 = pneg %p82
      %p342 = pneg %p106
      %p343 = pneg %p103
      %p344 = pneg %p127
      %p345 = pneg %p124
      %p346 = pneg %p148
      %p347 = pneg %p145
      %p348 = scmp.lt.s32.totalorder %s22, 1
      %s349 = scalar_select %p348, %s22, 1
      %s350 = smul.addr %s349, 21
      %s351 = smul.addr %s350, 8
      %s352 = scalar_lea.vmem %s6, %s351
      %p353 = pneg %p174
      %p354 = pneg %p171
      %p355 = pneg %p195
      %p356 = pneg %p192
      %p357 = pneg %p216
      %p358 = pneg %p213
      %p359 = pneg %p242
      %p360 = pneg %p239
      %p361 = scmp.lt.s32.totalorder %s22, 1
      %s362 = scalar_select %p361, %s22, 1
      %s363 = smul.addr %s362, 2
      %s364 = smul.addr %s363, 4
      %s365 = scalar_lea.vmem %s9, %s364
      %p366 = pneg %p268
      %p367 = pneg %p265
      %p368 = scmp.lt.s32.totalorder %s22, 1
      %s369 = scalar_select %p368, %s22, 1
      %s370 = scalar_lea.vmem %s10, %s369
      %p371 = scmp.lt.s32.totalorder %s22, 1
      %s372 = scalar_select %p371, %s22, 1
      %s373 = smul.addr %s372, 2
      %s374 = smul.addr %s373, 4
      %s375 = scalar_lea.vmem %s0, %s374
      %p376 = scmp.lt.s32.totalorder %s22, 1
      %s377 = scalar_select %p376, %s22, 1
      %s378 = smul.addr %s377, 21
      %s379 = smul.addr %s378, 8
      %s380 = scalar_lea.vmem %s6, %s379
      %p381 = scmp.lt.s32.totalorder %s22, 1
      %s382 = scalar_select %p381, %s22, 1
      %s383 = smul.addr %s382, 2
      %s384 = smul.addr %s383, 4
      %s385 = scalar_lea.vmem %s9, %s384
      %p386 = scmp.lt.s32.totalorder %s22, 1
      %s387 = scalar_select %p386, %s22, 1
      %s388 = scalar_lea.vmem %s10, %s387
      %v390 = vld [vmem:[%s375] sm:$0xff]
      %v391 = vld [vmem:[%s1] sm:$0xff]
      %v392 = vsub.f32 1.0, %v391
      %v393 = vld [vmem:[%s3] sm:$0xf]
      %v394 = vld [vmem:[%s3 + $0x4] sm:$0xf]
      %v395 = vld [vmem:[%s3 + $0x8] sm:$0xf]
      %v396 = vld [vmem:[%s3 + $0xc] sm:$0xf]
      %v397 = vmul.f32 %v390, %v391
      %v399 = vcombine.high %v397, %v397
      %v401 = vpack.c.bf16 %v397, %v397
      %v402 = vpack.c.bf16 %v399, %v399
      %v403 = vld [vmem:[%s380] sm:$0xff]
      %v404 = vld [vmem:[%s380 + $0x8] sm:$0xff]
      %v405 = vld [vmem:[%s380 + $0x10] sm:$0xff]
      %v406 = vld [vmem:[%s380 + $0x18] sm:$0xff]
      %408 = vset.pattern.permute.xlu0 0
      %409 = vperm.xlu0 %408, %v403
      %v410 = vpop.permute.xlu0 %409
      %413 = vset.pattern.permute.xlu0 0
      %414 = vperm.xlu0 %413, %v404
      %v415 = vpop.permute.xlu0 %414
      %418 = vset.pattern.permute.xlu0 0
      %419 = vperm.xlu0 %418, %v405
      %v420 = vpop.permute.xlu0 %419
      %423 = vset.pattern.permute.xlu0 0
      %424 = vperm.xlu0 %423, %v406
      %v425 = vpop.permute.xlu0 %424
      %v431 = vunpack.c.l.b16 %v393
      %v432 = vunpack.c.l.b16 %v394
      %v433 = vunpack.c.l.b16 %v395
      %v434 = vunpack.c.l.b16 %v396
      %v435 = vpack.c.b16 %v432, %v431
      %v436 = vpack.c.b16 %v434, %v433
      %vm437 = vcmask 31744
      %v439 = vsel %vm437, %v435, 0
      %v442 = vsel %vm437, %v436, 0
      %vm444 = vcmask 1041408
      %v446 = vsel %vm444, %v401, 0
      %v449 = vsel %vm444, %v402, 0
      %451 = vmatprep.subr.bf16.mxu0 %v449
      %452 = vmatpush1.bf16.msra.mxu0 %v446
      %453 = vmatprep.subr.bf16.mxu0 0
      %454 = vmatpush1.bf16.msra.mxu0 0
      %455 = vmatprep.subr.bf16.mxu0 0
      %456 = vmatpush1.bf16.msra.mxu0 0
      %457 = vmatprep.subr.bf16.mxu0 0
      %458 = vmatpush1.bf16.msra.mxu0 0
      %459 = vmatprep.subr.bf16.mxu0 0
      %460 = vmatpush1.bf16.msra.mxu0 0
      %461 = vmatprep.subr.bf16.mxu0 0
      %462 = vmatpush1.bf16.msra.mxu0 0
      %463 = vmatprep.subr.bf16.mxu0 0
      %464 = vmatpush1.bf16.msra.mxu0 0
      %465 = vmatprep.subr.bf16.mxu0 0
      %466 = vmatpush1.bf16.msra.mxu0 0
      %467 = vmatprep.subr.bf16.mxu0 0
      %468 = vmatpush1.bf16.msra.mxu0 0
      %469 = vmatprep.subr.bf16.mxu0 0
      %470 = vmatpush1.bf16.msra.mxu0 0
      %471 = vmatprep.subr.bf16.mxu0 0
      %472 = vmatpush1.bf16.msra.mxu0 0
      %473 = vmatprep.subr.bf16.mxu0 0
      %474 = vmatpush1.bf16.msra.mxu0 0
      %475 = vmatprep.subr.bf16.mxu0 0
      %476 = vmatpush1.bf16.msra.mxu0 0
      %477 = vmatprep.subr.bf16.mxu0 0
      %478 = vmatpush1.bf16.msra.mxu0 0
      %479 = vmatprep.subr.bf16.mxu0 0
      %480 = vmatpush1.bf16.msra.mxu0 0
      %481 = vmatprep.subr.bf16.mxu0 0
      %482 = vmatpush1.bf16.msra.mxu0 0
      %483 = vmatprep.mubr.bf16.mxu0 0
      %484 = vmatmul.mubr.bf16.gmra.mrb[0].mxu0 %v439
      %v485 = vpop.f32.mrb[0].mxu0
      %v486 = vadd.f32 %v410, %v485
      %v487 = vpop.f32.mrb[0].mxu0
      %v488 = vadd.f32 %v410, %v487
      %v489 = vpop.f32.mrb[0].mxu0
      %v490 = vadd.f32 %v415, %v489
      %v491 = vpop.f32.mrb[0].mxu0
      %v492 = vadd.f32 %v415, %v491
      %493 = vmatprep.mubr.bf16.mxu0 0
      %494 = vmatmul.mubr.bf16.gmra.mrb[0].mxu0 %v442
      %v495 = vpop.f32.mrb[0].mxu0
      %v496 = vadd.f32 %v420, %v495
      %v497 = vpop.f32.mrb[0].mxu0
      %v498 = vadd.f32 %v420, %v497
      %v499 = vpop.f32.mrb[0].mxu0
      %v500 = vadd.f32 %v425, %v499
      %v501 = vpop.f32.mrb[0].mxu0
      %v502 = vadd.f32 %v425, %v501
      %503 = vdwg.mxu0
      %504 = vrot.lane.b32.xlu0 %v486, 17
      %v505 = vpop.permute.xlu0 %504
      %506 = vrot.lane.b32.xlu0 %v490, 17
      %v507 = vpop.permute.xlu0 %506
      %508 = vrot.lane.b32.xlu0 %v496, 17
      %v509 = vpop.permute.xlu0 %508
      %510 = vrot.lane.b32.xlu0 %v500, 17
      %v511 = vpop.permute.xlu0 %510
      %512 = vrot.lane.b32.xlu0 %v488, 17
      %v513 = vpop.permute.xlu0 %512
      %514 = vrot.lane.b32.xlu0 %v492, 17
      %v515 = vpop.permute.xlu0 %514
      %516 = vrot.lane.b32.xlu0 %v498, 17
      %v517 = vpop.permute.xlu0 %516
      %518 = vrot.lane.b32.xlu0 %v502, 17
      %v519 = vpop.permute.xlu0 %518
      %v520 = vlaneseq
      %v521 = vand.u32 %v520, 127
      %vm522 = vcmp.lt.s32.totalorder %v521, 17
      %v523 = vsel %vm522, %v505, %v513
      %v524 = vsel %vm522, %v507, %v515
      %v525 = vsel %vm522, %v509, %v517
      %v526 = vsel %vm522, %v511, %v519
      %v527 = vsel %vm522, %v513, %v505
      %v528 = vsel %vm522, %v515, %v507
      %v529 = vsel %vm522, %v517, %v509
      %v530 = vsel %vm522, %v519, %v511
      %v531 = vld [vmem:[%s2] ss:$8 sm:$0x3]
      %v533 = vlaneseq
      %v534 = vshrl.u32 %v533, 7
      %v535 = vsub.s32 0, %v534
      %v536 = vrot.slane %v531, %v535
      %v537 = vlaneseq
      %v538 = vshrl.u32 %v537, 7
      %v539 = vsub.s32 1, %v538
      %v540 = vrot.slane %v531, %v539
      %v543 = vmul.f32 %v527, %v536
      %v544 = vmul.f32 %v523, %v540
      %v545 = vmul.f32 %v528, %v536
      %v546 = vmul.f32 %v524, %v540
      %v547 = vmul.f32 %v529, %v536
      %v548 = vmul.f32 %v525, %v540
      %v549 = vmul.f32 %v530, %v536
      %v550 = vmul.f32 %v526, %v540
      %551 = vrot.lane.b32.xlu0 %v486, 16
      %v552 = vpop.permute.xlu0 %551
      %553 = vrot.lane.b32.xlu0 %v490, 16
      %v554 = vpop.permute.xlu0 %553
      %555 = vrot.lane.b32.xlu0 %v496, 16
      %v556 = vpop.permute.xlu0 %555
      %557 = vrot.lane.b32.xlu0 %v500, 16
      %v558 = vpop.permute.xlu0 %557
      %559 = vrot.lane.b32.xlu0 %v488, 16
      %v560 = vpop.permute.xlu0 %559
      %561 = vrot.lane.b32.xlu0 %v492, 16
      %v562 = vpop.permute.xlu0 %561
      %563 = vrot.lane.b32.xlu0 %v498, 16
      %v564 = vpop.permute.xlu0 %563
      %565 = vrot.lane.b32.xlu0 %v502, 16
      %v566 = vpop.permute.xlu0 %565
      %vm567 = vcmp.lt.s32.totalorder %v521, 16
      %v568 = vsel %vm567, %v552, %v560
      %v569 = vsel %vm567, %v554, %v562
      %v570 = vsel %vm567, %v556, %v564
      %v571 = vsel %vm567, %v558, %v566
      %v572 = vsel %vm567, %v560, %v552
      %v573 = vsel %vm567, %v562, %v554
      %v574 = vsel %vm567, %v564, %v556
      %v575 = vsel %vm567, %v566, %v558
      %s576 = scalar_lea.vmem %s2, 1
      %v577 = vld [vmem:[%s576] ss:$8 sm:$0x3]
      %v579 = vlaneseq
      %v580 = vshrl.u32 %v579, 7
      %v581 = vsub.s32 0, %v580
      %v582 = vrot.slane %v577, %v581
      %v583 = vlaneseq
      %v584 = vshrl.u32 %v583, 7
      %v585 = vsub.s32 1, %v584
      %v586 = vrot.slane %v577, %v585
      %v589 = vmul.f32 %v572, %v582
      %v590 = vmul.f32 %v568, %v586
      %v591 = vmul.f32 %v573, %v582
      %v592 = vmul.f32 %v569, %v586
      %v593 = vmul.f32 %v574, %v582
      %v594 = vmul.f32 %v570, %v586
      %v595 = vmul.f32 %v575, %v582
      %v596 = vmul.f32 %v571, %v586
      %597 = vrot.lane.b32.xlu0 %v486, 15
      %v598 = vpop.permute.xlu0 %597
      %599 = vrot.lane.b32.xlu0 %v490, 15
      %v600 = vpop.permute.xlu0 %599
      %601 = vrot.lane.b32.xlu0 %v496, 15
      %v602 = vpop.permute.xlu0 %601
      %603 = vrot.lane.b32.xlu0 %v500, 15
      %v604 = vpop.permute.xlu0 %603
      %605 = vrot.lane.b32.xlu0 %v488, 15
      %v606 = vpop.permute.xlu0 %605
      %607 = vrot.lane.b32.xlu0 %v492, 15
      %v608 = vpop.permute.xlu0 %607
      %609 = vrot.lane.b32.xlu0 %v498, 15
      %v610 = vpop.permute.xlu0 %609
      %611 = vrot.lane.b32.xlu0 %v502, 15
      %v612 = vpop.permute.xlu0 %611
      %vm613 = vcmp.lt.s32.totalorder %v521, 15
      %v614 = vsel %vm613, %v598, %v606
      %v615 = vsel %vm613, %v600, %v608
      %v616 = vsel %vm613, %v602, %v610
      %v617 = vsel %vm613, %v604, %v612
      %v618 = vsel %vm613, %v606, %v598
      %v619 = vsel %vm613, %v608, %v600
      %v620 = vsel %vm613, %v610, %v602
      %v621 = vsel %vm613, %v612, %v604
      %s622 = scalar_lea.vmem %s2, 2
      %v623 = vld [vmem:[%s622] ss:$8 sm:$0x3]
      %v625 = vlaneseq
      %v626 = vshrl.u32 %v625, 7
      %v627 = vsub.s32 0, %v626
      %v628 = vrot.slane %v623, %v627
      %v629 = vlaneseq
      %v630 = vshrl.u32 %v629, 7
      %v631 = vsub.s32 1, %v630
      %v632 = vrot.slane %v623, %v631
      %v635 = vmul.f32 %v618, %v628
      %v636 = vmul.f32 %v614, %v632
      %v637 = vmul.f32 %v619, %v628
      %v638 = vmul.f32 %v615, %v632
      %v639 = vmul.f32 %v620, %v628
      %v640 = vmul.f32 %v616, %v632
      %v641 = vmul.f32 %v621, %v628
      %v642 = vmul.f32 %v617, %v632
      %643 = vrot.lane.b32.xlu0 %v486, 1
      %v644 = vpop.permute.xlu0 %643
      %645 = vrot.lane.b32.xlu0 %v490, 1
      %v646 = vpop.permute.xlu0 %645
      %647 = vrot.lane.b32.xlu0 %v496, 1
      %v648 = vpop.permute.xlu0 %647
      %649 = vrot.lane.b32.xlu0 %v500, 1
      %v650 = vpop.permute.xlu0 %649
      %651 = vrot.lane.b32.xlu0 %v488, 1
      %v652 = vpop.permute.xlu0 %651
      %653 = vrot.lane.b32.xlu0 %v492, 1
      %v654 = vpop.permute.xlu0 %653
      %655 = vrot.lane.b32.xlu0 %v498, 1
      %v656 = vpop.permute.xlu0 %655
      %657 = vrot.lane.b32.xlu0 %v502, 1
      %v658 = vpop.permute.xlu0 %657
      %vm659 = vcmp.lt.s32.totalorder %v521, 1
      %v660 = vsel %vm659, %v644, %v652
      %v661 = vsel %vm659, %v646, %v654
      %v662 = vsel %vm659, %v648, %v656
      %v663 = vsel %vm659, %v650, %v658
      %v664 = vsel %vm659, %v652, %v644
      %v665 = vsel %vm659, %v654, %v646
      %v666 = vsel %vm659, %v656, %v648
      %v667 = vsel %vm659, %v658, %v650
      %s668 = scalar_lea.vmem %s2, 3
      %v669 = vld [vmem:[%s668] ss:$8 sm:$0x3]
      %v671 = vlaneseq
      %v672 = vshrl.u32 %v671, 7
      %v673 = vsub.s32 0, %v672
      %v674 = vrot.slane %v669, %v673
      %v675 = vlaneseq
      %v676 = vshrl.u32 %v675, 7
      %v677 = vsub.s32 1, %v676
      %v678 = vrot.slane %v669, %v677
      %v681 = vmul.f32 %v664, %v674
      %v682 = vmul.f32 %v660, %v678
      %v683 = vmul.f32 %v665, %v674
      %v684 = vmul.f32 %v661, %v678
      %v685 = vmul.f32 %v666, %v674
      %v686 = vmul.f32 %v662, %v678
      %v687 = vmul.f32 %v667, %v674
      %v688 = vmul.f32 %v663, %v678
      %689 = vrot.lane.b32.xlu0 %v486, 127
      %v690 = vpop.permute.xlu0 %689
      %691 = vrot.lane.b32.xlu0 %v490, 127
      %v692 = vpop.permute.xlu0 %691
      %693 = vrot.lane.b32.xlu0 %v496, 127
      %v694 = vpop.permute.xlu0 %693
      %695 = vrot.lane.b32.xlu0 %v500, 127
      %v696 = vpop.permute.xlu0 %695
      %697 = vrot.lane.b32.xlu0 %v488, 127
      %v698 = vpop.permute.xlu0 %697
      %699 = vrot.lane.b32.xlu0 %v492, 127
      %v700 = vpop.permute.xlu0 %699
      %701 = vrot.lane.b32.xlu0 %v498, 127
      %v702 = vpop.permute.xlu0 %701
      %703 = vrot.lane.b32.xlu0 %v502, 127
      %v704 = vpop.permute.xlu0 %703
      %vm705 = vcmp.lt.s32.totalorder %v521, 127
      %v706 = vsel %vm705, %v690, %v698
      %v707 = vsel %vm705, %v692, %v700
      %v708 = vsel %vm705, %v694, %v702
      %v709 = vsel %vm705, %v696, %v704
      %v710 = vsel %vm705, %v698, %v690
      %v711 = vsel %vm705, %v700, %v692
      %v712 = vsel %vm705, %v702, %v694
      %v713 = vsel %vm705, %v704, %v696
      %s714 = scalar_lea.vmem %s2, 5
      %v715 = vld [vmem:[%s714] ss:$8 sm:$0x3]
      %v717 = vlaneseq
      %v718 = vshrl.u32 %v717, 7
      %v719 = vsub.s32 0, %v718
      %v720 = vrot.slane %v715, %v719
      %v721 = vlaneseq
      %v722 = vshrl.u32 %v721, 7
      %v723 = vsub.s32 1, %v722
      %v724 = vrot.slane %v715, %v723
      %v727 = vmul.f32 %v706, %v720
      %v728 = vmul.f32 %v710, %v724
      %v729 = vmul.f32 %v707, %v720
      %v730 = vmul.f32 %v711, %v724
      %v731 = vmul.f32 %v708, %v720
      %v732 = vmul.f32 %v712, %v724
      %v733 = vmul.f32 %v709, %v720
      %v734 = vmul.f32 %v713, %v724
      %735 = vrot.lane.b32.xlu0 %v486, 113
      %v736 = vpop.permute.xlu0 %735
      %737 = vrot.lane.b32.xlu0 %v490, 113
      %v738 = vpop.permute.xlu0 %737
      %739 = vrot.lane.b32.xlu0 %v496, 113
      %v740 = vpop.permute.xlu0 %739
      %741 = vrot.lane.b32.xlu0 %v500, 113
      %v742 = vpop.permute.xlu0 %741
      %743 = vrot.lane.b32.xlu0 %v488, 113
      %v744 = vpop.permute.xlu0 %743
      %745 = vrot.lane.b32.xlu0 %v492, 113
      %v746 = vpop.permute.xlu0 %745
      %747 = vrot.lane.b32.xlu0 %v498, 113
      %v748 = vpop.permute.xlu0 %747
      %749 = vrot.lane.b32.xlu0 %v502, 113
      %v750 = vpop.permute.xlu0 %749
      %vm751 = vcmp.lt.s32.totalorder %v521, 113
      %v752 = vsel %vm751, %v736, %v744
      %v753 = vsel %vm751, %v738, %v746
      %v754 = vsel %vm751, %v740, %v748
      %v755 = vsel %vm751, %v742, %v750
      %v756 = vsel %vm751, %v744, %v736
      %v757 = vsel %vm751, %v746, %v738
      %v758 = vsel %vm751, %v748, %v740
      %v759 = vsel %vm751, %v750, %v742
      %s760 = scalar_lea.vmem %s2, 6
      %v761 = vld [vmem:[%s760] ss:$8 sm:$0x3]
      %v763 = vlaneseq
      %v764 = vshrl.u32 %v763, 7
      %v765 = vsub.s32 0, %v764
      %v766 = vrot.slane %v761, %v765
      %v767 = vlaneseq
      %v768 = vshrl.u32 %v767, 7
      %v769 = vsub.s32 1, %v768
      %v770 = vrot.slane %v761, %v769
      %v773 = vmul.f32 %v752, %v766
      %v774 = vmul.f32 %v756, %v770
      %v775 = vmul.f32 %v753, %v766
      %v776 = vmul.f32 %v757, %v770
      %v777 = vmul.f32 %v754, %v766
      %v778 = vmul.f32 %v758, %v770
      %v779 = vmul.f32 %v755, %v766
      %v780 = vmul.f32 %v759, %v770
      %781 = vrot.lane.b32.xlu0 %v486, 112
      %v782 = vpop.permute.xlu0 %781
      %783 = vrot.lane.b32.xlu0 %v490, 112
      %v784 = vpop.permute.xlu0 %783
      %785 = vrot.lane.b32.xlu0 %v496, 112
      %v786 = vpop.permute.xlu0 %785
      %787 = vrot.lane.b32.xlu0 %v500, 112
      %v788 = vpop.permute.xlu0 %787
      %789 = vrot.lane.b32.xlu0 %v488, 112
      %v790 = vpop.permute.xlu0 %789
      %791 = vrot.lane.b32.xlu0 %v492, 112
      %v792 = vpop.permute.xlu0 %791
      %793 = vrot.lane.b32.xlu0 %v498, 112
      %v794 = vpop.permute.xlu0 %793
      %795 = vrot.lane.b32.xlu0 %v502, 112
      %v796 = vpop.permute.xlu0 %795
      %vm797 = vcmp.lt.s32.totalorder %v521, 112
      %v798 = vsel %vm797, %v782, %v790
      %v799 = vsel %vm797, %v784, %v792
      %v800 = vsel %vm797, %v786, %v794
      %v801 = vsel %vm797, %v788, %v796
      %v802 = vsel %vm797, %v790, %v782
      %v803 = vsel %vm797, %v792, %v784
      %v804 = vsel %vm797, %v794, %v786
      %v805 = vsel %vm797, %v796, %v788
      %s806 = scalar_lea.vmem %s2, 7
      %v807 = vld [vmem:[%s806] ss:$8 sm:$0x3]
      %v809 = vlaneseq
      %v810 = vshrl.u32 %v809, 7
      %v811 = vsub.s32 0, %v810
      %v812 = vrot.slane %v807, %v811
      %v813 = vlaneseq
      %v814 = vshrl.u32 %v813, 7
      %v815 = vsub.s32 1, %v814
      %v816 = vrot.slane %v807, %v815
      %v819 = vmul.f32 %v798, %v812
      %v820 = vmul.f32 %v802, %v816
      %v821 = vmul.f32 %v799, %v812
      %v822 = vmul.f32 %v803, %v816
      %v823 = vmul.f32 %v800, %v812
      %v824 = vmul.f32 %v804, %v816
      %v825 = vmul.f32 %v801, %v812
      %v826 = vmul.f32 %v805, %v816
      %827 = vrot.lane.b32.xlu0 %v486, 111
      %v828 = vpop.permute.xlu0 %827
      %829 = vrot.lane.b32.xlu0 %v490, 111
      %v830 = vpop.permute.xlu0 %829
      %831 = vrot.lane.b32.xlu0 %v496, 111
      %v832 = vpop.permute.xlu0 %831
      %833 = vrot.lane.b32.xlu0 %v500, 111
      %v834 = vpop.permute.xlu0 %833
      %835 = vrot.lane.b32.xlu0 %v488, 111
      %v836 = vpop.permute.xlu0 %835
      %837 = vrot.lane.b32.xlu0 %v492, 111
      %v838 = vpop.permute.xlu0 %837
      %839 = vrot.lane.b32.xlu0 %v498, 111
      %v840 = vpop.permute.xlu0 %839
      %841 = vrot.lane.b32.xlu0 %v502, 111
      %v842 = vpop.permute.xlu0 %841
      %vm843 = vcmp.lt.s32.totalorder %v521, 111
      %v844 = vsel %vm843, %v828, %v836
      %v845 = vsel %vm843, %v830, %v838
      %v846 = vsel %vm843, %v832, %v840
      %v847 = vsel %vm843, %v834, %v842
      %v848 = vsel %vm843, %v836, %v828
      %v849 = vsel %vm843, %v838, %v830
      %v850 = vsel %vm843, %v840, %v832
      %v851 = vsel %vm843, %v842, %v834
      %s852 = scalar_lea.vmem %s2, 16
      %v853 = vld [vmem:[%s852] ss:$8 sm:$0x3]
      %v855 = vlaneseq
      %v856 = vshrl.u32 %v855, 7
      %v857 = vsub.s32 0, %v856
      %v858 = vrot.slane %v853, %v857
      %v859 = vlaneseq
      %v860 = vshrl.u32 %v859, 7
      %v861 = vsub.s32 1, %v860
      %v862 = vrot.slane %v853, %v861
      %v865 = vmul.f32 %v844, %v858
      %v866 = vmul.f32 %v848, %v862
      %v867 = vmul.f32 %v845, %v858
      %v868 = vmul.f32 %v849, %v862
      %v869 = vmul.f32 %v846, %v858
      %v870 = vmul.f32 %v850, %v862
      %v871 = vmul.f32 %v847, %v858
      %v872 = vmul.f32 %v851, %v862
      %v873 = vpack.c.bf16 %v545, %v543
      %v874 = vpack.c.bf16 %v546, %v544
      %v875 = vpack.c.bf16 %v549, %v547
      %v876 = vpack.c.bf16 %v550, %v548
      %v877 = vpack.c.bf16 %v591, %v589
      %v878 = vpack.c.bf16 %v592, %v590
      %v879 = vpack.c.bf16 %v595, %v593
      %v880 = vpack.c.bf16 %v596, %v594
      %v881 = vpack.c.bf16 %v637, %v635
      %v882 = vpack.c.bf16 %v638, %v636
      %v883 = vpack.c.bf16 %v641, %v639
      %v884 = vpack.c.bf16 %v642, %v640
      %v885 = vpack.c.bf16 %v683, %v681
      %v886 = vpack.c.bf16 %v684, %v682
      %v887 = vpack.c.bf16 %v687, %v685
      %v888 = vpack.c.bf16 %v688, %v686
      %v889 = vpack.c.bf16 %v490, %v486
      %v890 = vpack.c.bf16 %v492, %v488
      %v891 = vpack.c.bf16 %v500, %v496
      %v892 = vpack.c.bf16 %v502, %v498
      %v893 = vpack.c.bf16 %v729, %v727
      %v894 = vpack.c.bf16 %v730, %v728
      %v895 = vpack.c.bf16 %v733, %v731
      %v896 = vpack.c.bf16 %v734, %v732
      %v897 = vpack.c.bf16 %v775, %v773
      %v898 = vpack.c.bf16 %v776, %v774
      %v899 = vpack.c.bf16 %v779, %v777
      %v900 = vpack.c.bf16 %v780, %v778
      %v901 = vpack.c.bf16 %v821, %v819
      %v902 = vpack.c.bf16 %v822, %v820
      %v903 = vpack.c.bf16 %v825, %v823
      %v904 = vpack.c.bf16 %v826, %v824
      %v905 = vpack.c.bf16 %v867, %v865
      %v906 = vpack.c.bf16 %v868, %v866
      %v907 = vpack.c.bf16 %v871, %v869
      %v908 = vpack.c.bf16 %v872, %v870
      %v909 = vld [vmem:[%s4] sm:$0xff]
      %v910 = vld [vmem:[%s4 + $0x8] sm:$0xf]
      %v911 = vld [vmem:[%s4 + $0xc] sm:$0xff]
      %v912 = vld [vmem:[%s4 + $0x14] sm:$0xf]
      %v913 = vld [vmem:[%s4 + $0x18] sm:$0xff]
      %v914 = vld [vmem:[%s4 + $0x20] sm:$0xf]
      %v915 = vld [vmem:[%s4 + $0x24] sm:$0xff]
      %v916 = vld [vmem:[%s4 + $0x2c] sm:$0xf]
      %v917 = vld [vmem:[%s380 + $0x20] sm:$0xff]
      %v918 = vld [vmem:[%s380 + $0x28] sm:$0xff]
      %v919 = vld [vmem:[%s380 + $0x30] sm:$0xff]
      %v920 = vld [vmem:[%s380 + $0x38] sm:$0xff]
      %922 = vset.pattern.permute.xlu0 0
      %923 = vperm.xlu0 %922, %v917
      %v924 = vpop.permute.xlu0 %923
      %927 = vset.pattern.permute.xlu0 0
      %928 = vperm.xlu0 %927, %v918
      %v929 = vpop.permute.xlu0 %928
      %932 = vset.pattern.permute.xlu0 0
      %933 = vperm.xlu0 %932, %v919
      %v934 = vpop.permute.xlu0 %933
      %937 = vset.pattern.permute.xlu0 0
      %938 = vperm.xlu0 %937, %v920
      %v939 = vpop.permute.xlu0 %938
      %v949 = vunpack.c.l.b16 %v909
      %v950 = vunpack.c.h.b16 %v909
      %v951 = vunpack.c.l.b16 %v910
      %v952 = vunpack.c.l.b16 %v911
      %v953 = vunpack.c.h.b16 %v911
      %v954 = vunpack.c.l.b16 %v912
      %v955 = vunpack.c.l.b16 %v913
      %v956 = vunpack.c.h.b16 %v913
      %v957 = vunpack.c.l.b16 %v914
      %v958 = vunpack.c.l.b16 %v915
      %v959 = vunpack.c.h.b16 %v915
      %v960 = vunpack.c.l.b16 %v916
      %v961 = vpack.c.b16 %v952, %v949
      %v962 = vpack.c.b16 %v953, %v950
      %v963 = vpack.c.b16 %v954, %v951
      %v964 = vpack.c.b16 %v958, %v955
      %v965 = vpack.c.b16 %v959, %v956
      %v966 = vpack.c.b16 %v960, %v957
      %vm971 = vcmask 261120
      %v973 = vsel %vm971, %v963, 0
      %v976 = vsel %vm971, %v966, 0
      %978 = vmatprep.subr.bf16.mxu0 %v874
      %979 = vmatpush1.bf16.msra.mxu0 %v873
      %980 = vmatprep.subr.bf16.mxu0 %v876
      %981 = vmatpush1.bf16.msra.mxu0 %v875
      %982 = vmatprep.subr.bf16.mxu0 %v878
      %983 = vmatpush1.bf16.msra.mxu0 %v877
      %984 = vmatprep.subr.bf16.mxu0 %v880
      %985 = vmatpush1.bf16.msra.mxu0 %v879
      %986 = vmatprep.subr.bf16.mxu0 %v882
      %987 = vmatpush1.bf16.msra.mxu0 %v881
      %988 = vmatprep.subr.bf16.mxu0 %v884
      %989 = vmatpush1.bf16.msra.mxu0 %v883
      %990 = vmatprep.subr.bf16.mxu0 %v886
      %991 = vmatpush1.bf16.msra.mxu0 %v885
      %992 = vmatprep.subr.bf16.mxu0 %v888
      %993 = vmatpush1.bf16.msra.mxu0 %v887
      %994 = vmatprep.subr.bf16.mxu0 %v890
      %995 = vmatpush1.bf16.msra.mxu0 %v889
      %996 = vmatprep.subr.bf16.mxu0 %v892
      %997 = vmatpush1.bf16.msra.mxu0 %v891
      %998 = vmatprep.subr.bf16.mxu0 %v894
      %999 = vmatpush1.bf16.msra.mxu0 %v893
      %1000 = vmatprep.subr.bf16.mxu0 %v896
      %1001 = vmatpush1.bf16.msra.mxu0 %v895
      %1002 = vmatprep.subr.bf16.mxu0 %v898
      %1003 = vmatpush1.bf16.msra.mxu0 %v897
      %1004 = vmatprep.subr.bf16.mxu0 %v900
      %1005 = vmatpush1.bf16.msra.mxu0 %v899
      %1006 = vmatprep.subr.bf16.mxu0 %v902
      %1007 = vmatpush1.bf16.msra.mxu0 %v901
      %1008 = vmatprep.subr.bf16.mxu0 %v904
      %1009 = vmatpush1.bf16.msra.mxu0 %v903
      %1010 = vmatprep.mubr.bf16.mxu0 %v962
      %1011 = vmatmul.mubr.bf16.gmra.mrb[0].mxu0 %v961
      %v1012 = vpop.f32.mrb[0].mxu0
      %v1013 = vadd.f32 %v924, %v1012
      %v1014 = vpop.f32.mrb[0].mxu0
      %v1015 = vadd.f32 %v924, %v1014
      %v1016 = vpop.f32.mrb[0].mxu0
      %v1017 = vadd.f32 %v929, %v1016
      %v1018 = vpop.f32.mrb[0].mxu0
      %v1019 = vadd.f32 %v929, %v1018
      %1020 = vmatprep.mubr.bf16.mxu0 %v965
      %1021 = vmatmul.mubr.bf16.gmra.mrb[0].mxu0 %v964
      %v1022 = vpop.f32.mrb[0].mxu0
      %v1023 = vadd.f32 %v934, %v1022
      %v1024 = vpop.f32.mrb[0].mxu0
      %v1025 = vadd.f32 %v934, %v1024
      %v1026 = vpop.f32.mrb[0].mxu0
      %v1027 = vadd.f32 %v939, %v1026
      %v1028 = vpop.f32.mrb[0].mxu0
      %v1029 = vadd.f32 %v939, %v1028
      %1030 = vdwg.mxu0
      %1031 = vmatprep.subr.bf16.mxu0 %v906
      %1032 = vmatpush1.bf16.msra.mxu0 %v905
      %1033 = vmatprep.subr.bf16.mxu0 %v908
      %1034 = vmatpush1.bf16.msra.mxu0 %v907
      %1035 = vmatprep.subr.bf16.mxu0 0
      %1036 = vmatpush1.bf16.msra.mxu0 0
      %1037 = vmatprep.subr.bf16.mxu0 0
      %1038 = vmatpush1.bf16.msra.mxu0 0
      %1039 = vmatprep.subr.bf16.mxu0 0
      %1040 = vmatpush1.bf16.msra.mxu0 0
      %1041 = vmatprep.subr.bf16.mxu0 0
      %1042 = vmatpush1.bf16.msra.mxu0 0
      %1043 = vmatprep.subr.bf16.mxu0 0
      %1044 = vmatpush1.bf16.msra.mxu0 0
      %1045 = vmatprep.subr.bf16.mxu0 0
      %1046 = vmatpush1.bf16.msra.mxu0 0
      %1047 = vmatprep.subr.bf16.mxu0 0
      %1048 = vmatpush1.bf16.msra.mxu0 0
      %1049 = vmatprep.subr.bf16.mxu0 0
      %1050 = vmatpush1.bf16.msra.mxu0 0
      %1051 = vmatprep.subr.bf16.mxu0 0
      %1052 = vmatpush1.bf16.msra.mxu0 0
      %1053 = vmatprep.subr.bf16.mxu0 0
      %1054 = vmatpush1.bf16.msra.mxu0 0
      %1055 = vmatprep.subr.bf16.mxu0 0
      %1056 = vmatpush1.bf16.msra.mxu0 0
      %1057 = vmatprep.subr.bf16.mxu0 0
      %1058 = vmatpush1.bf16.msra.mxu0 0
      %1059 = vmatprep.subr.bf16.mxu0 0
      %1060 = vmatpush1.bf16.msra.mxu0 0
      %1061 = vmatprep.subr.bf16.mxu0 0
      %1062 = vmatpush1.bf16.msra.mxu0 0
      %1063 = vmatprep.mubr.bf16.mxu0 0
      %1064 = vmatmul.mubr.bf16.gmra.mrb[0].mxu0 %v973
      %v1065 = vpop.f32.mrb[0].mxu0
      %v1066 = vadd.f32 %v1013, %v1065
      %v1067 = vpop.f32.mrb[0].mxu0
      %v1068 = vadd.f32 %v1015, %v1067
      %v1069 = vpop.f32.mrb[0].mxu0
      %v1070 = vadd.f32 %v1017, %v1069
      %v1071 = vpop.f32.mrb[0].mxu0
      %v1072 = vadd.f32 %v1019, %v1071
      %1073 = vmatprep.mubr.bf16.mxu0 0
      %1074 = vmatmul.mubr.bf16.gmra.mrb[0].mxu0 %v976
      %v1075 = vpop.f32.mrb[0].mxu0
      %v1076 = vadd.f32 %v1023, %v1075
      %v1077 = vpop.f32.mrb[0].mxu0
      %v1078 = vadd.f32 %v1025, %v1077
      %v1079 = vpop.f32.mrb[0].mxu0
      %v1080 = vadd.f32 %v1027, %v1079
      %v1081 = vpop.f32.mrb[0].mxu0
      %v1082 = vadd.f32 %v1029, %v1081
      %1083 = vdwg.mxu0
      %1084 = vrot.lane.b32.xlu0 %v1066, 17
      %v1085 = vpop.permute.xlu0 %1084
      %1086 = vrot.lane.b32.xlu0 %v1070, 17
      %v1087 = vpop.permute.xlu0 %1086
      %1088 = vrot.lane.b32.xlu0 %v1076, 17
      %v1089 = vpop.permute.xlu0 %1088
      %1090 = vrot.lane.b32.xlu0 %v1080, 17
      %v1091 = vpop.permute.xlu0 %1090
      %1092 = vrot.lane.b32.xlu0 %v1068, 17
      %v1093 = vpop.permute.xlu0 %1092
      %1094 = vrot.lane.b32.xlu0 %v1072, 17
      %v1095 = vpop.permute.xlu0 %1094
      %1096 = vrot.lane.b32.xlu0 %v1078, 17
      %v1097 = vpop.permute.xlu0 %1096
      %1098 = vrot.lane.b32.xlu0 %v1082, 17
      %v1099 = vpop.permute.xlu0 %1098
      %v1100 = vsel %vm522, %v1085, %v1093
      %v1101 = vsel %vm522, %v1087, %v1095
      %v1102 = vsel %vm522, %v1089, %v1097
      %v1103 = vsel %vm522, %v1091, %v1099
      %v1104 = vsel %vm522, %v1093, %v1085
      %v1105 = vsel %vm522, %v1095, %v1087
      %v1106 = vsel %vm522, %v1097, %v1089
      %v1107 = vsel %vm522, %v1099, %v1091
      %v1108 = vmul.f32 %v1104, %v536
      %v1109 = vmul.f32 %v1100, %v540
      %v1110 = vmul.f32 %v1105, %v536
      %v1111 = vmul.f32 %v1101, %v540
      %v1112 = vmul.f32 %v1106, %v536
      %v1113 = vmul.f32 %v1102, %v540
      %v1114 = vmul.f32 %v1107, %v536
      %v1115 = vmul.f32 %v1103, %v540
      %1116 = vrot.lane.b32.xlu0 %v1066, 16
      %v1117 = vpop.permute.xlu0 %1116
      %1118 = vrot.lane.b32.xlu0 %v1070, 16
      %v1119 = vpop.permute.xlu0 %1118
      %1120 = vrot.lane.b32.xlu0 %v1076, 16
      %v1121 = vpop.permute.xlu0 %1120
      %1122 = vrot.lane.b32.xlu0 %v1080, 16
      %v1123 = vpop.permute.xlu0 %1122
      %1124 = vrot.lane.b32.xlu0 %v1068, 16
      %v1125 = vpop.permute.xlu0 %1124
      %1126 = vrot.lane.b32.xlu0 %v1072, 16
      %v1127 = vpop.permute.xlu0 %1126
      %1128 = vrot.lane.b32.xlu0 %v1078, 16
      %v1129 = vpop.permute.xlu0 %1128
      %1130 = vrot.lane.b32.xlu0 %v1082, 16
      %v1131 = vpop.permute.xlu0 %1130
      %v1132 = vsel %vm567, %v1117, %v1125
      %v1133 = vsel %vm567, %v1119, %v1127
      %v1134 = vsel %vm567, %v1121, %v1129
      %v1135 = vsel %vm567, %v1123, %v1131
      %v1136 = vsel %vm567, %v1125, %v1117
      %v1137 = vsel %vm567, %v1127, %v1119
      %v1138 = vsel %vm567, %v1129, %v1121
      %v1139 = vsel %vm567, %v1131, %v1123
      %v1140 = vmul.f32 %v1136, %v582
      %v1141 = vmul.f32 %v1132, %v586
      %v1142 = vmul.f32 %v1137, %v582
      %v1143 = vmul.f32 %v1133, %v586
      %v1144 = vmul.f32 %v1138, %v582
      %v1145 = vmul.f32 %v1134, %v586
      %v1146 = vmul.f32 %v1139, %v582
      %v1147 = vmul.f32 %v1135, %v586
      %1148 = vrot.lane.b32.xlu0 %v1066, 15
      %v1149 = vpop.permute.xlu0 %1148
      %1150 = vrot.lane.b32.xlu0 %v1070, 15
      %v1151 = vpop.permute.xlu0 %1150
      %1152 = vrot.lane.b32.xlu0 %v1076, 15
      %v1153 = vpop.permute.xlu0 %1152
      %1154 = vrot.lane.b32.xlu0 %v1080, 15
      %v1155 = vpop.permute.xlu0 %1154
      %1156 = vrot.lane.b32.xlu0 %v1068, 15
      %v1157 = vpop.permute.xlu0 %1156
      %1158 = vrot.lane.b32.xlu0 %v1072, 15
      %v1159 = vpop.permute.xlu0 %1158
      %1160 = vrot.lane.b32.xlu0 %v1078, 15
      %v1161 = vpop.permute.xlu0 %1160
      %1162 = vrot.lane.b32.xlu0 %v1082, 15
      %v1163 = vpop.permute.xlu0 %1162
      %v1164 = vsel %vm613, %v1149, %v1157
      %v1165 = vsel %vm613, %v1151, %v1159
      %v1166 = vsel %vm613, %v1153, %v1161
      %v1167 = vsel %vm613, %v1155, %v1163
      %v1168 = vsel %vm613, %v1157, %v1149
      %v1169 = vsel %vm613, %v1159, %v1151
      %v1170 = vsel %vm613, %v1161, %v1153
      %v1171 = vsel %vm613, %v1163, %v1155
      %v1172 = vmul.f32 %v1168, %v628
      %v1173 = vmul.f32 %v1164, %v632
      %v1174 = vmul.f32 %v1169, %v628
      %v1175 = vmul.f32 %v1165, %v632
      %v1176 = vmul.f32 %v1170, %v628
      %v1177 = vmul.f32 %v1166, %v632
      %v1178 = vmul.f32 %v1171, %v628
      %v1179 = vmul.f32 %v1167, %v632
      %1180 = vrot.lane.b32.xlu0 %v1066, 1
      %v1181 = vpop.permute.xlu0 %1180
      %1182 = vrot.lane.b32.xlu0 %v1070, 1
      %v1183 = vpop.permute.xlu0 %1182
      %1184 = vrot.lane.b32.xlu0 %v1076, 1
      %v1185 = vpop.permute.xlu0 %1184
      %1186 = vrot.lane.b32.xlu0 %v1080, 1
      %v1187 = vpop.permute.xlu0 %1186
      %1188 = vrot.lane.b32.xlu0 %v1068, 1
      %v1189 = vpop.permute.xlu0 %1188
      %1190 = vrot.lane.b32.xlu0 %v1072, 1
      %v1191 = vpop.permute.xlu0 %1190
      %1192 = vrot.lane.b32.xlu0 %v1078, 1
      %v1193 = vpop.permute.xlu0 %1192
      %1194 = vrot.lane.b32.xlu0 %v1082, 1
      %v1195 = vpop.permute.xlu0 %1194
      %v1196 = vsel %vm659, %v1181, %v1189
      %v1197 = vsel %vm659, %v1183, %v1191
      %v1198 = vsel %vm659, %v1185, %v1193
      %v1199 = vsel %vm659, %v1187, %v1195
      %v1200 = vsel %vm659, %v1189, %v1181
      %v1201 = vsel %vm659, %v1191, %v1183
      %v1202 = vsel %vm659, %v1193, %v1185
      %v1203 = vsel %vm659, %v1195, %v1187
      %v1204 = vmul.f32 %v1200, %v674
      %v1205 = vmul.f32 %v1196, %v678
      %v1206 = vmul.f32 %v1201, %v674
      %v1207 = vmul.f32 %v1197, %v678
      %v1208 = vmul.f32 %v1202, %v674
      %v1209 = vmul.f32 %v1198, %v678
      %v1210 = vmul.f32 %v1203, %v674
      %v1211 = vmul.f32 %v1199, %v678
      %1212 = vrot.lane.b32.xlu0 %v1066, 127
      %v1213 = vpop.permute.xlu0 %1212
      %1214 = vrot.lane.b32.xlu0 %v1070, 127
      %v1215 = vpop.permute.xlu0 %1214
      %1216 = vrot.lane.b32.xlu0 %v1076, 127
      %v1217 = vpop.permute.xlu0 %1216
      %1218 = vrot.lane.b32.xlu0 %v1080, 127
      %v1219 = vpop.permute.xlu0 %1218
      %1220 = vrot.lane.b32.xlu0 %v1068, 127
      %v1221 = vpop.permute.xlu0 %1220
      %1222 = vrot.lane.b32.xlu0 %v1072, 127
      %v1223 = vpop.permute.xlu0 %1222
      %1224 = vrot.lane.b32.xlu0 %v1078, 127
      %v1225 = vpop.permute.xlu0 %1224
      %1226 = vrot.lane.b32.xlu0 %v1082, 127
      %v1227 = vpop.permute.xlu0 %1226
      %v1228 = vsel %vm705, %v1213, %v1221
      %v1229 = vsel %vm705, %v1215, %v1223
      %v1230 = vsel %vm705, %v1217, %v1225
      %v1231 = vsel %vm705, %v1219, %v1227
      %v1232 = vsel %vm705, %v1221, %v1213
      %v1233 = vsel %vm705, %v1223, %v1215
      %v1234 = vsel %vm705, %v1225, %v1217
      %v1235 = vsel %vm705, %v1227, %v1219
      %v1236 = vmul.f32 %v1228, %v720
      %v1237 = vmul.f32 %v1232, %v724
      %v1238 = vmul.f32 %v1229, %v720
      %v1239 = vmul.f32 %v1233, %v724
      %v1240 = vmul.f32 %v1230, %v720
      %v1241 = vmul.f32 %v1234, %v724
      %v1242 = vmul.f32 %v1231, %v720
      %v1243 = vmul.f32 %v1235, %v724
      %1244 = vrot.lane.b32.xlu0 %v1066, 113
      %v1245 = vpop.permute.xlu0 %1244
      %1246 = vrot.lane.b32.xlu0 %v1070, 113
      %v1247 = vpop.permute.xlu0 %1246
      %1248 = vrot.lane.b32.xlu0 %v1076, 113
      %v1249 = vpop.permute.xlu0 %1248
      %1250 = vrot.lane.b32.xlu0 %v1080, 113
      %v1251 = vpop.permute.xlu0 %1250
      %1252 = vrot.lane.b32.xlu0 %v1068, 113
      %v1253 = vpop.permute.xlu0 %1252
      %1254 = vrot.lane.b32.xlu0 %v1072, 113
      %v1255 = vpop.permute.xlu0 %1254
      %1256 = vrot.lane.b32.xlu0 %v1078, 113
      %v1257 = vpop.permute.xlu0 %1256
      %1258 = vrot.lane.b32.xlu0 %v1082, 113
      %v1259 = vpop.permute.xlu0 %1258
      %v1260 = vsel %vm751, %v1245, %v1253
      %v1261 = vsel %vm751, %v1247, %v1255
      %v1262 = vsel %vm751, %v1249, %v1257
      %v1263 = vsel %vm751, %v1251, %v1259
      %v1264 = vsel %vm751, %v1253, %v1245
      %v1265 = vsel %vm751, %v1255, %v1247
      %v1266 = vsel %vm751, %v1257, %v1249
      %v1267 = vsel %vm751, %v1259, %v1251
      %v1268 = vmul.f32 %v1260, %v766
      %v1269 = vmul.f32 %v1264, %v770
      %v1270 = vmul.f32 %v1261, %v766
      %v1271 = vmul.f32 %v1265, %v770
      %v1272 = vmul.f32 %v1262, %v766
      %v1273 = vmul.f32 %v1266, %v770
      %v1274 = vmul.f32 %v1263, %v766
      %v1275 = vmul.f32 %v1267, %v770
      %1276 = vrot.lane.b32.xlu0 %v1066, 112
      %v1277 = vpop.permute.xlu0 %1276
      %1278 = vrot.lane.b32.xlu0 %v1070, 112
      %v1279 = vpop.permute.xlu0 %1278
      %1280 = vrot.lane.b32.xlu0 %v1076, 112
      %v1281 = vpop.permute.xlu0 %1280
      %1282 = vrot.lane.b32.xlu0 %v1080, 112
      %v1283 = vpop.permute.xlu0 %1282
      %1284 = vrot.lane.b32.xlu0 %v1068, 112
      %v1285 = vpop.permute.xlu0 %1284
      %1286 = vrot.lane.b32.xlu0 %v1072, 112
      %v1287 = vpop.permute.xlu0 %1286
      %1288 = vrot.lane.b32.xlu0 %v1078, 112
      %v1289 = vpop.permute.xlu0 %1288
      %1290 = vrot.lane.b32.xlu0 %v1082, 112
      %v1291 = vpop.permute.xlu0 %1290
      %v1292 = vsel %vm797, %v1277, %v1285
      %v1293 = vsel %vm797, %v1279, %v1287
      %v1294 = vsel %vm797, %v1281, %v1289
      %v1295 = vsel %vm797, %v1283, %v1291
      %v1296 = vsel %vm797, %v1285, %v1277
      %v1297 = vsel %vm797, %v1287, %v1279
      %v1298 = vsel %vm797, %v1289, %v1281
      %v1299 = vsel %vm797, %v1291, %v1283
      %v1300 = vmul.f32 %v1292, %v812
      %v1301 = vmul.f32 %v1296, %v816
      %v1302 = vmul.f32 %v1293, %v812
      %v1303 = vmul.f32 %v1297, %v816
      %v1304 = vmul.f32 %v1294, %v812
      %v1305 = vmul.f32 %v1298, %v816
      %v1306 = vmul.f32 %v1295, %v812
      %v1307 = vmul.f32 %v1299, %v816
      %1308 = vrot.lane.b32.xlu0 %v1066, 111
      %v1309 = vpop.permute.xlu0 %1308
      %1310 = vrot.lane.b32.xlu0 %v1070, 111
      %v1311 = vpop.permute.xlu0 %1310
      %1312 = vrot.lane.b32.xlu0 %v1076, 111
      %v1313 = vpop.permute.xlu0 %1312
      %1314 = vrot.lane.b32.xlu0 %v1080, 111
      %v1315 = vpop.permute.xlu0 %1314
      %1316 = vrot.lane.b32.xlu0 %v1068, 111
      %v1317 = vpop.permute.xlu0 %1316
      %1318 = vrot.lane.b32.xlu0 %v1072, 111
      %v1319 = vpop.permute.xlu0 %1318
      %1320 = vrot.lane.b32.xlu0 %v1078, 111
      %v1321 = vpop.permute.xlu0 %1320
      %1322 = vrot.lane.b32.xlu0 %v1082, 111
      %v1323 = vpop.permute.xlu0 %1322
      %v1324 = vsel %vm843, %v1309, %v1317
      %v1325 = vsel %vm843, %v1311, %v1319
      %v1326 = vsel %vm843, %v1313, %v1321
      %v1327 = vsel %vm843, %v1315, %v1323
      %v1328 = vsel %vm843, %v1317, %v1309
      %v1329 = vsel %vm843, %v1319, %v1311
      %v1330 = vsel %vm843, %v1321, %v1313
      %v1331 = vsel %vm843, %v1323, %v1315
      %v1332 = vmul.f32 %v1324, %v858
      %v1333 = vmul.f32 %v1328, %v862
      %v1334 = vmul.f32 %v1325, %v858
      %v1335 = vmul.f32 %v1329, %v862
      %v1336 = vmul.f32 %v1326, %v858
      %v1337 = vmul.f32 %v1330, %v862
      %v1338 = vmul.f32 %v1327, %v858
      %v1339 = vmul.f32 %v1331, %v862
      %v1340 = vpack.c.bf16 %v1110, %v1108
      %v1341 = vpack.c.bf16 %v1111, %v1109
      %v1342 = vpack.c.bf16 %v1114, %v1112
      %v1343 = vpack.c.bf16 %v1115, %v1113
      %v1344 = vpack.c.bf16 %v1142, %v1140
      %v1345 = vpack.c.bf16 %v1143, %v1141
      %v1346 = vpack.c.bf16 %v1146, %v1144
      %v1347 = vpack.c.bf16 %v1147, %v1145
      %v1348 = vpack.c.bf16 %v1174, %v1172
      %v1349 = vpack.c.bf16 %v1175, %v1173
      %v1350 = vpack.c.bf16 %v1178, %v1176
      %v1351 = vpack.c.bf16 %v1179, %v1177
      %v1352 = vpack.c.bf16 %v1206, %v1204
      %v1353 = vpack.c.bf16 %v1207, %v1205
      %v1354 = vpack.c.bf16 %v1210, %v1208
      %v1355 = vpack.c.bf16 %v1211, %v1209
      %v1356 = vpack.c.bf16 %v1070, %v1066
      %v1357 = vpack.c.bf16 %v1072, %v1068
      %v1358 = vpack.c.bf16 %v1080, %v1076
      %v1359 = vpack.c.bf16 %v1082, %v1078
      %v1360 = vpack.c.bf16 %v1238, %v1236
      %v1361 = vpack.c.bf16 %v1239, %v1237
      %v1362 = vpack.c.bf16 %v1242, %v1240
      %v1363 = vpack.c.bf16 %v1243, %v1241
      %v1364 = vpack.c.bf16 %v1270, %v1268
      %v1365 = vpack.c.bf16 %v1271, %v1269
      %v1366 = vpack.c.bf16 %v1274, %v1272
      %v1367 = vpack.c.bf16 %v1275, %v1273
      %v1368 = vpack.c.bf16 %v1302, %v1300
      %v1369 = vpack.c.bf16 %v1303, %v1301
      %v1370 = vpack.c.bf16 %v1306, %v1304
      %v1371 = vpack.c.bf16 %v1307, %v1305
      %v1372 = vpack.c.bf16 %v1334, %v1332
      %v1373 = vpack.c.bf16 %v1335, %v1333
      %v1374 = vpack.c.bf16 %v1338, %v1336
      %v1375 = vpack.c.bf16 %v1339, %v1337
      %s1376 = scalar_lea.vmem %s4, 48
      %v1377 = vld [vmem:[%s1376] sm:$0xff]
      %v1378 = vld [vmem:[%s1376 + $0x8] sm:$0xf]
      %v1379 = vld [vmem:[%s1376 + $0xc] sm:$0xff]
      %v1380 = vld [vmem:[%s1376 + $0x14] sm:$0xf]
      %v1381 = vld [vmem:[%s1376 + $0x18] sm:$0xff]
      %v1382 = vld [vmem:[%s1376 + $0x20] sm:$0xf]
      %v1383 = vld [vmem:[%s1376 + $0x24] sm:$0xff]
      %v1384 = vld [vmem:[%s1376 + $0x2c] sm:$0xf]
      %v1385 = vld [vmem:[%s380 + $0x40] sm:$0xff]
      %v1386 = vld [vmem:[%s380 + $0x48] sm:$0xff]
      %v1387 = vld [vmem:[%s380 + $0x50] sm:$0xff]
      %v1388 = vld [vmem:[%s380 + $0x58] sm:$0xff]
      %1390 = vset.pattern.permute.xlu0 0
      %1391 = vperm.xlu0 %1390, %v1385
      %v1392 = vpop.permute.xlu0 %1391
      %1395 = vset.pattern.permute.xlu0 0
      %1396 = vperm.xlu0 %1395, %v1386
      %v1397 = vpop.permute.xlu0 %1396
      %1400 = vset.pattern.permute.xlu0 0
      %1401 = vperm.xlu0 %1400, %v1387
      %v1402 = vpop.permute.xlu0 %1401
      %1405 = vset.pattern.permute.xlu0 0
      %1406 = vperm.xlu0 %1405, %v1388
      %v1407 = vpop.permute.xlu0 %1406
      %v1417 = vunpack.c.l.b16 %v1377
      %v1418 = vunpack.c.h.b16 %v1377
      %v1419 = vunpack.c.l.b16 %v1378
      %v1420 = vunpack.c.l.b16 %v1379
      %v1421 = vunpack.c.h.b16 %v1379
      %v1422 = vunpack.c.l.b16 %v1380
      %v1423 = vunpack.c.l.b16 %v1381
      %v1424 = vunpack.c.h.b16 %v1381
      %v1425 = vunpack.c.l.b16 %v1382
      %v1426 = vunpack.c.l.b16 %v1383
      %v1427 = vunpack.c.h.b16 %v1383
      %v1428 = vunpack.c.l.b16 %v1384
      %v1429 = vpack.c.b16 %v1420, %v1417
      %v1430 = vpack.c.b16 %v1421, %v1418
      %v1431 = vpack.c.b16 %v1422, %v1419
      %v1432 = vpack.c.b16 %v1426, %v1423
      %v1433 = vpack.c.b16 %v1427, %v1424
      %v1434 = vpack.c.b16 %v1428, %v1425
      %v1440 = vsel %vm971, %v1431, 0
      %v1443 = vsel %vm971, %v1434, 0
      %1445 = vmatprep.subr.bf16.mxu0 %v1341
      %1446 = vmatpush1.bf16.msra.mxu0 %v1340
      %1447 = vmatprep.subr.bf16.mxu0 %v1343
      %1448 = vmatpush1.bf16.msra.mxu0 %v1342
      %1449 = vmatprep.subr.bf16.mxu0 %v1345
      %1450 = vmatpush1.bf16.msra.mxu0 %v1344
      %1451 = vmatprep.subr.bf16.mxu0 %v1347
      %1452 = vmatpush1.bf16.msra.mxu0 %v1346
      %1453 = vmatprep.subr.bf16.mxu0 %v1349
      %1454 = vmatpush1.bf16.msra.mxu0 %v1348
      %1455 = vmatprep.subr.bf16.mxu0 %v1351
      %1456 = vmatpush1.bf16.msra.mxu0 %v1350
      %1457 = vmatprep.subr.bf16.mxu0 %v1353
      %1458 = vmatpush1.bf16.msra.mxu0 %v1352
      %1459 = vmatprep.subr.bf16.mxu0 %v1355
      %1460 = vmatpush1.bf16.msra.mxu0 %v1354
      %1461 = vmatprep.subr.bf16.mxu0 %v1357
      %1462 = vmatpush1.bf16.msra.mxu0 %v1356
      %1463 = vmatprep.subr.bf16.mxu0 %v1359
      %1464 = vmatpush1.bf16.msra.mxu0 %v1358
      %1465 = vmatprep.subr.bf16.mxu0 %v1361
      %1466 = vmatpush1.bf16.msra.mxu0 %v1360
      %1467 = vmatprep.subr.bf16.mxu0 %v1363
      %1468 = vmatpush1.bf16.msra.mxu0 %v1362
      %1469 = vmatprep.subr.bf16.mxu0 %v1365
      %1470 = vmatpush1.bf16.msra.mxu0 %v1364
      %1471 = vmatprep.subr.bf16.mxu0 %v1367
      %1472 = vmatpush1.bf16.msra.mxu0 %v1366
      %1473 = vmatprep.subr.bf16.mxu0 %v1369
      %1474 = vmatpush1.bf16.msra.mxu0 %v1368
      %1475 = vmatprep.subr.bf16.mxu0 %v1371
      %1476 = vmatpush1.bf16.msra.mxu0 %v1370
      %1477 = vmatprep.mubr.bf16.mxu0 %v1430
      %1478 = vmatmul.mubr.bf16.gmra.mrb[0].mxu0 %v1429
      %v1479 = vpop.f32.mrb[0].mxu0
      %v1480 = vadd.f32 %v1392, %v1479
      %v1481 = vpop.f32.mrb[0].mxu0
      %v1482 = vadd.f32 %v1392, %v1481
      %v1483 = vpop.f32.mrb[0].mxu0
      %v1484 = vadd.f32 %v1397, %v1483
      %v1485 = vpop.f32.mrb[0].mxu0
      %v1486 = vadd.f32 %v1397, %v1485
      %1487 = vmatprep.mubr.bf16.mxu0 %v1433
      %1488 = vmatmul.mubr.bf16.gmra.mrb[0].mxu0 %v1432
      %v1489 = vpop.f32.mrb[0].mxu0
      %v1490 = vadd.f32 %v1402, %v1489
      %v1491 = vpop.f32.mrb[0].mxu0
      %v1492 = vadd.f32 %v1402, %v1491
      %v1493 = vpop.f32.mrb[0].mxu0
      %v1494 = vadd.f32 %v1407, %v1493
      %v1495 = vpop.f32.mrb[0].mxu0
      %v1496 = vadd.f32 %v1407, %v1495
      %1497 = vdwg.mxu0
      %1498 = vmatprep.subr.bf16.mxu0 %v1373
      %1499 = vmatpush1.bf16.msra.mxu0 %v1372
      %1500 = vmatprep.subr.bf16.mxu0 %v1375
      %1501 = vmatpush1.bf16.msra.mxu0 %v1374
      %1502 = vmatprep.subr.bf16.mxu0 0
      %1503 = vmatpush1.bf16.msra.mxu0 0
      %1504 = vmatprep.subr.bf16.mxu0 0
      %1505 = vmatpush1.bf16.msra.mxu0 0
      %1506 = vmatprep.subr.bf16.mxu0 0
      %1507 = vmatpush1.bf16.msra.mxu0 0
      %1508 = vmatprep.subr.bf16.mxu0 0
      %1509 = vmatpush1.bf16.msra.mxu0 0
      %1510 = vmatprep.subr.bf16.mxu0 0
      %1511 = vmatpush1.bf16.msra.mxu0 0
      %1512 = vmatprep.subr.bf16.mxu0 0
      %1513 = vmatpush1.bf16.msra.mxu0 0
      %1514 = vmatprep.subr.bf16.mxu0 0
      %1515 = vmatpush1.bf16.msra.mxu0 0
      %1516 = vmatprep.subr.bf16.mxu0 0
      %1517 = vmatpush1.bf16.msra.mxu0 0
      %1518 = vmatprep.subr.bf16.mxu0 0
      %1519 = vmatpush1.bf16.msra.mxu0 0
      %1520 = vmatprep.subr.bf16.mxu0 0
      %1521 = vmatpush1.bf16.msra.mxu0 0
      %1522 = vmatprep.subr.bf16.mxu0 0
      %1523 = vmatpush1.bf16.msra.mxu0 0
      %1524 = vmatprep.subr.bf16.mxu0 0
      %1525 = vmatpush1.bf16.msra.mxu0 0
      %1526 = vmatprep.subr.bf16.mxu0 0
      %1527 = vmatpush1.bf16.msra.mxu0 0
      %1528 = vmatprep.subr.bf16.mxu0 0
      %1529 = vmatpush1.bf16.msra.mxu0 0
      %1530 = vmatprep.mubr.bf16.mxu0 0
      %1531 = vmatmul.mubr.bf16.gmra.mrb[0].mxu0 %v1440
      %v1532 = vpop.f32.mrb[0].mxu0
      %v1533 = vadd.f32 %v1480, %v1532
      %v1534 = vpop.f32.mrb[0].mxu0
      %v1535 = vadd.f32 %v1482, %v1534
      %v1536 = vpop.f32.mrb[0].mxu0
      %v1537 = vadd.f32 %v1484, %v1536
      %v1538 = vpop.f32.mrb[0].mxu0
      %v1539 = vadd.f32 %v1486, %v1538
      %1540 = vmatprep.mubr.bf16.mxu0 0
      %1541 = vmatmul.mubr.bf16.gmra.mrb[0].mxu0 %v1443
      %v1542 = vpop.f32.mrb[0].mxu0
      %v1543 = vadd.f32 %v1490, %v1542
      %v1544 = vpop.f32.mrb[0].mxu0
      %v1545 = vadd.f32 %v1492, %v1544
      %v1546 = vpop.f32.mrb[0].mxu0
      %v1547 = vadd.f32 %v1494, %v1546
      %v1548 = vpop.f32.mrb[0].mxu0
      %v1549 = vadd.f32 %v1496, %v1548
      %1550 = vdwg.mxu0
      %v1551 = vadd.f32 %v1533, %v486
      %v1552 = vadd.f32 %v1535, %v488
      %v1553 = vadd.f32 %v1537, %v490
      %v1554 = vadd.f32 %v1539, %v492
      %v1555 = vadd.f32 %v1543, %v496
      %v1556 = vadd.f32 %v1545, %v498
      %v1557 = vadd.f32 %v1547, %v500
      %v1558 = vadd.f32 %v1549, %v502
      %v1559 = vtanh.pop %v1551
      %v1560 = vtanh.pop %v1552
      %v1561 = vtanh.pop %v1553
      %v1562 = vtanh.pop %v1554
      %v1563 = vtanh.pop %v1555
      %v1564 = vtanh.pop %v1556
      %v1565 = vtanh.pop %v1557
      %v1566 = vtanh.pop %v1558
      %1567 = vrot.lane.b32.xlu0 %v1559, 17
      %v1568 = vpop.permute.xlu0 %1567
      %1569 = vrot.lane.b32.xlu0 %v1561, 17
      %v1570 = vpop.permute.xlu0 %1569
      %1571 = vrot.lane.b32.xlu0 %v1563, 17
      %v1572 = vpop.permute.xlu0 %1571
      %1573 = vrot.lane.b32.xlu0 %v1565, 17
      %v1574 = vpop.permute.xlu0 %1573
      %1575 = vrot.lane.b32.xlu0 %v1560, 17
      %v1576 = vpop.permute.xlu0 %1575
      %1577 = vrot.lane.b32.xlu0 %v1562, 17
      %v1578 = vpop.permute.xlu0 %1577
      %1579 = vrot.lane.b32.xlu0 %v1564, 17
      %v1580 = vpop.permute.xlu0 %1579
      %1581 = vrot.lane.b32.xlu0 %v1566, 17
      %v1582 = vpop.permute.xlu0 %1581
      %v1583 = vsel %vm522, %v1568, %v1576
      %v1584 = vsel %vm522, %v1570, %v1578
      %v1585 = vsel %vm522, %v1572, %v1580
      %v1586 = vsel %vm522, %v1574, %v1582
      %v1587 = vsel %vm522, %v1576, %v1568
      %v1588 = vsel %vm522, %v1578, %v1570
      %v1589 = vsel %vm522, %v1580, %v1572
      %v1590 = vsel %vm522, %v1582, %v1574
      %v1591 = vmul.f32 %v1587, %v536
      %v1592 = vmul.f32 %v1583, %v540
      %v1593 = vmul.f32 %v1588, %v536
      %v1594 = vmul.f32 %v1584, %v540
      %v1595 = vmul.f32 %v1589, %v536
      %v1596 = vmul.f32 %v1585, %v540
      %v1597 = vmul.f32 %v1590, %v536
      %v1598 = vmul.f32 %v1586, %v540
      %1599 = vrot.lane.b32.xlu0 %v1559, 16
      %v1600 = vpop.permute.xlu0 %1599
      %1601 = vrot.lane.b32.xlu0 %v1561, 16
      %v1602 = vpop.permute.xlu0 %1601
      %1603 = vrot.lane.b32.xlu0 %v1563, 16
      %v1604 = vpop.permute.xlu0 %1603
      %1605 = vrot.lane.b32.xlu0 %v1565, 16
      %v1606 = vpop.permute.xlu0 %1605
      %1607 = vrot.lane.b32.xlu0 %v1560, 16
      %v1608 = vpop.permute.xlu0 %1607
      %1609 = vrot.lane.b32.xlu0 %v1562, 16
      %v1610 = vpop.permute.xlu0 %1609
      %1611 = vrot.lane.b32.xlu0 %v1564, 16
      %v1612 = vpop.permute.xlu0 %1611
      %1613 = vrot.lane.b32.xlu0 %v1566, 16
      %v1614 = vpop.permute.xlu0 %1613
      %v1615 = vsel %vm567, %v1600, %v1608
      %v1616 = vsel %vm567, %v1602, %v1610
      %v1617 = vsel %vm567, %v1604, %v1612
      %v1618 = vsel %vm567, %v1606, %v1614
      %v1619 = vsel %vm567, %v1608, %v1600
      %v1620 = vsel %vm567, %v1610, %v1602
      %v1621 = vsel %vm567, %v1612, %v1604
      %v1622 = vsel %vm567, %v1614, %v1606
      %v1623 = vmul.f32 %v1619, %v582
      %v1624 = vmul.f32 %v1615, %v586
      %v1625 = vmul.f32 %v1620, %v582
      %v1626 = vmul.f32 %v1616, %v586
      %v1627 = vmul.f32 %v1621, %v582
      %v1628 = vmul.f32 %v1617, %v586
      %v1629 = vmul.f32 %v1622, %v582
      %v1630 = vmul.f32 %v1618, %v586
      %1631 = vrot.lane.b32.xlu0 %v1559, 15
      %v1632 = vpop.permute.xlu0 %1631
      %1633 = vrot.lane.b32.xlu0 %v1561, 15
      %v1634 = vpop.permute.xlu0 %1633
      %1635 = vrot.lane.b32.xlu0 %v1563, 15
      %v1636 = vpop.permute.xlu0 %1635
      %1637 = vrot.lane.b32.xlu0 %v1565, 15
      %v1638 = vpop.permute.xlu0 %1637
      %1639 = vrot.lane.b32.xlu0 %v1560, 15
      %v1640 = vpop.permute.xlu0 %1639
      %1641 = vrot.lane.b32.xlu0 %v1562, 15
      %v1642 = vpop.permute.xlu0 %1641
      %1643 = vrot.lane.b32.xlu0 %v1564, 15
      %v1644 = vpop.permute.xlu0 %1643
      %1645 = vrot.lane.b32.xlu0 %v1566, 15
      %v1646 = vpop.permute.xlu0 %1645
      %v1647 = vsel %vm613, %v1632, %v1640
      %v1648 = vsel %vm613, %v1634, %v1642
      %v1649 = vsel %vm613, %v1636, %v1644
      %v1650 = vsel %vm613, %v1638, %v1646
      %v1651 = vsel %vm613, %v1640, %v1632
      %v1652 = vsel %vm613, %v1642, %v1634
      %v1653 = vsel %vm613, %v1644, %v1636
      %v1654 = vsel %vm613, %v1646, %v1638
      %v1655 = vmul.f32 %v1651, %v628
      %v1656 = vmul.f32 %v1647, %v632
      %v1657 = vmul.f32 %v1652, %v628
      %v1658 = vmul.f32 %v1648, %v632
      %v1659 = vmul.f32 %v1653, %v628
      %v1660 = vmul.f32 %v1649, %v632
      %v1661 = vmul.f32 %v1654, %v628
      %v1662 = vmul.f32 %v1650, %v632
      %1663 = vrot.lane.b32.xlu0 %v1559, 1
      %v1664 = vpop.permute.xlu0 %1663
      %1665 = vrot.lane.b32.xlu0 %v1561, 1
      %v1666 = vpop.permute.xlu0 %1665
      %1667 = vrot.lane.b32.xlu0 %v1563, 1
      %v1668 = vpop.permute.xlu0 %1667
      %1669 = vrot.lane.b32.xlu0 %v1565, 1
      %v1670 = vpop.permute.xlu0 %1669
      %1671 = vrot.lane.b32.xlu0 %v1560, 1
      %v1672 = vpop.permute.xlu0 %1671
      %1673 = vrot.lane.b32.xlu0 %v1562, 1
      %v1674 = vpop.permute.xlu0 %1673
      %1675 = vrot.lane.b32.xlu0 %v1564, 1
      %v1676 = vpop.permute.xlu0 %1675
      %1677 = vrot.lane.b32.xlu0 %v1566, 1
      %v1678 = vpop.permute.xlu0 %1677
      %v1679 = vsel %vm659, %v1664, %v1672
      %v1680 = vsel %vm659, %v1666, %v1674
      %v1681 = vsel %vm659, %v1668, %v1676
      %v1682 = vsel %vm659, %v1670, %v1678
      %v1683 = vsel %vm659, %v1672, %v1664
      %v1684 = vsel %vm659, %v1674, %v1666
      %v1685 = vsel %vm659, %v1676, %v1668
      %v1686 = vsel %vm659, %v1678, %v1670
      %v1687 = vmul.f32 %v1683, %v674
      %v1688 = vmul.f32 %v1679, %v678
      %v1689 = vmul.f32 %v1684, %v674
      %v1690 = vmul.f32 %v1680, %v678
      %v1691 = vmul.f32 %v1685, %v674
      %v1692 = vmul.f32 %v1681, %v678
      %v1693 = vmul.f32 %v1686, %v674
      %v1694 = vmul.f32 %v1682, %v678
      %1695 = vrot.lane.b32.xlu0 %v1559, 127
      %v1696 = vpop.permute.xlu0 %1695
      %1697 = vrot.lane.b32.xlu0 %v1561, 127
      %v1698 = vpop.permute.xlu0 %1697
      %1699 = vrot.lane.b32.xlu0 %v1563, 127
      %v1700 = vpop.permute.xlu0 %1699
      %1701 = vrot.lane.b32.xlu0 %v1565, 127
      %v1702 = vpop.permute.xlu0 %1701
      %1703 = vrot.lane.b32.xlu0 %v1560, 127
      %v1704 = vpop.permute.xlu0 %1703
      %1705 = vrot.lane.b32.xlu0 %v1562, 127
      %v1706 = vpop.permute.xlu0 %1705
      %1707 = vrot.lane.b32.xlu0 %v1564, 127
      %v1708 = vpop.permute.xlu0 %1707
      %1709 = vrot.lane.b32.xlu0 %v1566, 127
      %v1710 = vpop.permute.xlu0 %1709
      %v1711 = vsel %vm705, %v1696, %v1704
      %v1712 = vsel %vm705, %v1698, %v1706
      %v1713 = vsel %vm705, %v1700, %v1708
      %v1714 = vsel %vm705, %v1702, %v1710
      %v1715 = vsel %vm705, %v1704, %v1696
      %v1716 = vsel %vm705, %v1706, %v1698
      %v1717 = vsel %vm705, %v1708, %v1700
      %v1718 = vsel %vm705, %v1710, %v1702
      %v1719 = vmul.f32 %v1711, %v720
      %v1720 = vmul.f32 %v1715, %v724
      %v1721 = vmul.f32 %v1712, %v720
      %v1722 = vmul.f32 %v1716, %v724
      %v1723 = vmul.f32 %v1713, %v720
      %v1724 = vmul.f32 %v1717, %v724
      %v1725 = vmul.f32 %v1714, %v720
      %v1726 = vmul.f32 %v1718, %v724
      %1727 = vrot.lane.b32.xlu0 %v1559, 113
      %v1728 = vpop.permute.xlu0 %1727
      %1729 = vrot.lane.b32.xlu0 %v1561, 113
      %v1730 = vpop.permute.xlu0 %1729
      %1731 = vrot.lane.b32.xlu0 %v1563, 113
      %v1732 = vpop.permute.xlu0 %1731
      %1733 = vrot.lane.b32.xlu0 %v1565, 113
      %v1734 = vpop.permute.xlu0 %1733
      %1735 = vrot.lane.b32.xlu0 %v1560, 113
      %v1736 = vpop.permute.xlu0 %1735
      %1737 = vrot.lane.b32.xlu0 %v1562, 113
      %v1738 = vpop.permute.xlu0 %1737
      %1739 = vrot.lane.b32.xlu0 %v1564, 113
      %v1740 = vpop.permute.xlu0 %1739
      %1741 = vrot.lane.b32.xlu0 %v1566, 113
      %v1742 = vpop.permute.xlu0 %1741
      %v1743 = vsel %vm751, %v1728, %v1736
      %v1744 = vsel %vm751, %v1730, %v1738
      %v1745 = vsel %vm751, %v1732, %v1740
      %v1746 = vsel %vm751, %v1734, %v1742
      %v1747 = vsel %vm751, %v1736, %v1728
      %v1748 = vsel %vm751, %v1738, %v1730
      %v1749 = vsel %vm751, %v1740, %v1732
      %v1750 = vsel %vm751, %v1742, %v1734
      %v1751 = vmul.f32 %v1743, %v766
      %v1752 = vmul.f32 %v1747, %v770
      %v1753 = vmul.f32 %v1744, %v766
      %v1754 = vmul.f32 %v1748, %v770
      %v1755 = vmul.f32 %v1745, %v766
      %v1756 = vmul.f32 %v1749, %v770
      %v1757 = vmul.f32 %v1746, %v766
      %v1758 = vmul.f32 %v1750, %v770
      %1759 = vrot.lane.b32.xlu0 %v1559, 112
      %v1760 = vpop.permute.xlu0 %1759
      %1761 = vrot.lane.b32.xlu0 %v1561, 112
      %v1762 = vpop.permute.xlu0 %1761
      %1763 = vrot.lane.b32.xlu0 %v1563, 112
      %v1764 = vpop.permute.xlu0 %1763
      %1765 = vrot.lane.b32.xlu0 %v1565, 112
      %v1766 = vpop.permute.xlu0 %1765
      %1767 = vrot.lane.b32.xlu0 %v1560, 112
      %v1768 = vpop.permute.xlu0 %1767
      %1769 = vrot.lane.b32.xlu0 %v1562, 112
      %v1770 = vpop.permute.xlu0 %1769
      %1771 = vrot.lane.b32.xlu0 %v1564, 112
      %v1772 = vpop.permute.xlu0 %1771
      %1773 = vrot.lane.b32.xlu0 %v1566, 112
      %v1774 = vpop.permute.xlu0 %1773
      %v1775 = vsel %vm797, %v1760, %v1768
      %v1776 = vsel %vm797, %v1762, %v1770
      %v1777 = vsel %vm797, %v1764, %v1772
      %v1778 = vsel %vm797, %v1766, %v1774
      %v1779 = vsel %vm797, %v1768, %v1760
      %v1780 = vsel %vm797, %v1770, %v1762
      %v1781 = vsel %vm797, %v1772, %v1764
      %v1782 = vsel %vm797, %v1774, %v1766
      %v1783 = vmul.f32 %v1775, %v812
      %v1784 = vmul.f32 %v1779, %v816
      %v1785 = vmul.f32 %v1776, %v812
      %v1786 = vmul.f32 %v1780, %v816
      %v1787 = vmul.f32 %v1777, %v812
      %v1788 = vmul.f32 %v1781, %v816
      %v1789 = vmul.f32 %v1778, %v812
      %v1790 = vmul.f32 %v1782, %v816
      %1791 = vrot.lane.b32.xlu0 %v1559, 111
      %v1792 = vpop.permute.xlu0 %1791
      %1793 = vrot.lane.b32.xlu0 %v1561, 111
      %v1794 = vpop.permute.xlu0 %1793
      %1795 = vrot.lane.b32.xlu0 %v1563, 111
      %v1796 = vpop.permute.xlu0 %1795
      %1797 = vrot.lane.b32.xlu0 %v1565, 111
      %v1798 = vpop.permute.xlu0 %1797
      %1799 = vrot.lane.b32.xlu0 %v1560, 111
      %v1800 = vpop.permute.xlu0 %1799
      %1801 = vrot.lane.b32.xlu0 %v1562, 111
      %v1802 = vpop.permute.xlu0 %1801
      %1803 = vrot.lane.b32.xlu0 %v1564, 111
      %v1804 = vpop.permute.xlu0 %1803
      %1805 = vrot.lane.b32.xlu0 %v1566, 111
      %v1806 = vpop.permute.xlu0 %1805
      %v1807 = vsel %vm843, %v1792, %v1800
      %v1808 = vsel %vm843, %v1794, %v1802
      %v1809 = vsel %vm843, %v1796, %v1804
      %v1810 = vsel %vm843, %v1798, %v1806
      %v1811 = vsel %vm843, %v1800, %v1792
      %v1812 = vsel %vm843, %v1802, %v1794
      %v1813 = vsel %vm843, %v1804, %v1796
      %v1814 = vsel %vm843, %v1806, %v1798
      %v1815 = vmul.f32 %v1807, %v858
      %v1816 = vmul.f32 %v1811, %v862
      %v1817 = vmul.f32 %v1808, %v858
      %v1818 = vmul.f32 %v1812, %v862
      %v1819 = vmul.f32 %v1809, %v858
      %v1820 = vmul.f32 %v1813, %v862
      %v1821 = vmul.f32 %v1810, %v858
      %v1822 = vmul.f32 %v1814, %v862
      %v1823 = vpack.c.bf16 %v1593, %v1591
      %v1824 = vpack.c.bf16 %v1594, %v1592
      %v1825 = vpack.c.bf16 %v1597, %v1595
      %v1826 = vpack.c.bf16 %v1598, %v1596
      %v1827 = vpack.c.bf16 %v1625, %v1623
      %v1828 = vpack.c.bf16 %v1626, %v1624
      %v1829 = vpack.c.bf16 %v1629, %v1627
      %v1830 = vpack.c.bf16 %v1630, %v1628
      %v1831 = vpack.c.bf16 %v1657, %v1655
      %v1832 = vpack.c.bf16 %v1658, %v1656
      %v1833 = vpack.c.bf16 %v1661, %v1659
      %v1834 = vpack.c.bf16 %v1662, %v1660
      %v1835 = vpack.c.bf16 %v1689, %v1687
      %v1836 = vpack.c.bf16 %v1690, %v1688
      %v1837 = vpack.c.bf16 %v1693, %v1691
      %v1838 = vpack.c.bf16 %v1694, %v1692
      %v1839 = vpack.c.bf16 %v1561, %v1559
      %v1840 = vpack.c.bf16 %v1562, %v1560
      %v1841 = vpack.c.bf16 %v1565, %v1563
      %v1842 = vpack.c.bf16 %v1566, %v1564
      %v1843 = vpack.c.bf16 %v1721, %v1719
      %v1844 = vpack.c.bf16 %v1722, %v1720
      %v1845 = vpack.c.bf16 %v1725, %v1723
      %v1846 = vpack.c.bf16 %v1726, %v1724
      %v1847 = vpack.c.bf16 %v1753, %v1751
      %v1848 = vpack.c.bf16 %v1754, %v1752
      %v1849 = vpack.c.bf16 %v1757, %v1755
      %v1850 = vpack.c.bf16 %v1758, %v1756
      %v1851 = vpack.c.bf16 %v1785, %v1783
      %v1852 = vpack.c.bf16 %v1786, %v1784
      %v1853 = vpack.c.bf16 %v1789, %v1787
      %v1854 = vpack.c.bf16 %v1790, %v1788
      %v1855 = vpack.c.bf16 %v1817, %v1815
      %v1856 = vpack.c.bf16 %v1818, %v1816
      %v1857 = vpack.c.bf16 %v1821, %v1819
      %v1858 = vpack.c.bf16 %v1822, %v1820
      %s1859 = scalar_lea.vmem %s4, 96
      %v1860 = vld [vmem:[%s1859] sm:$0xff]
      %v1861 = vld [vmem:[%s1859 + $0x8] sm:$0xf]
      %v1862 = vld [vmem:[%s1859 + $0xc] sm:$0xff]
      %v1863 = vld [vmem:[%s1859 + $0x14] sm:$0xf]
      %v1864 = vld [vmem:[%s1859 + $0x18] sm:$0xff]
      %v1865 = vld [vmem:[%s1859 + $0x20] sm:$0xf]
      %v1866 = vld [vmem:[%s1859 + $0x24] sm:$0xff]
      %v1867 = vld [vmem:[%s1859 + $0x2c] sm:$0xf]
      %v1868 = vld [vmem:[%s380 + $0x60] sm:$0xff]
      %v1869 = vld [vmem:[%s380 + $0x68] sm:$0xff]
      %v1870 = vld [vmem:[%s380 + $0x70] sm:$0xff]
      %v1871 = vld [vmem:[%s380 + $0x78] sm:$0xff]
      %1873 = vset.pattern.permute.xlu0 0
      %1874 = vperm.xlu0 %1873, %v1868
      %v1875 = vpop.permute.xlu0 %1874
      %1878 = vset.pattern.permute.xlu0 0
      %1879 = vperm.xlu0 %1878, %v1869
      %v1880 = vpop.permute.xlu0 %1879
      %1883 = vset.pattern.permute.xlu0 0
      %1884 = vperm.xlu0 %1883, %v1870
      %v1885 = vpop.permute.xlu0 %1884
      %1888 = vset.pattern.permute.xlu0 0
      %1889 = vperm.xlu0 %1888, %v1871
      %v1890 = vpop.permute.xlu0 %1889
      %v1900 = vunpack.c.l.b16 %v1860
      %v1901 = vunpack.c.h.b16 %v1860
      %v1902 = vunpack.c.l.b16 %v1861
      %v1903 = vunpack.c.l.b16 %v1862
      %v1904 = vunpack.c.h.b16 %v1862
      %v1905 = vunpack.c.l.b16 %v1863
      %v1906 = vunpack.c.l.b16 %v1864
      %v1907 = vunpack.c.h.b16 %v1864
      %v1908 = vunpack.c.l.b16 %v1865
      %v1909 = vunpack.c.l.b16 %v1866
      %v1910 = vunpack.c.h.b16 %v1866
      %v1911 = vunpack.c.l.b16 %v1867
      %v1912 = vpack.c.b16 %v1903, %v1900
      %v1913 = vpack.c.b16 %v1904, %v1901
      %v1914 = vpack.c.b16 %v1905, %v1902
      %v1915 = vpack.c.b16 %v1909, %v1906
      %v1916 = vpack.c.b16 %v1910, %v1907
      %v1917 = vpack.c.b16 %v1911, %v1908
      %v1923 = vsel %vm971, %v1914, 0
      %v1926 = vsel %vm971, %v1917, 0
      %1928 = vmatprep.subr.bf16.mxu0 %v1824
      %1929 = vmatpush1.bf16.msra.mxu0 %v1823
      %1930 = vmatprep.subr.bf16.mxu0 %v1826
      %1931 = vmatpush1.bf16.msra.mxu0 %v1825
      %1932 = vmatprep.subr.bf16.mxu0 %v1828
      %1933 = vmatpush1.bf16.msra.mxu0 %v1827
      %1934 = vmatprep.subr.bf16.mxu0 %v1830
      %1935 = vmatpush1.bf16.msra.mxu0 %v1829
      %1936 = vmatprep.subr.bf16.mxu0 %v1832
      %1937 = vmatpush1.bf16.msra.mxu0 %v1831
      %1938 = vmatprep.subr.bf16.mxu0 %v1834
      %1939 = vmatpush1.bf16.msra.mxu0 %v1833
      %1940 = vmatprep.subr.bf16.mxu0 %v1836
      %1941 = vmatpush1.bf16.msra.mxu0 %v1835
      %1942 = vmatprep.subr.bf16.mxu0 %v1838
      %1943 = vmatpush1.bf16.msra.mxu0 %v1837
      %1944 = vmatprep.subr.bf16.mxu0 %v1840
      %1945 = vmatpush1.bf16.msra.mxu0 %v1839
      %1946 = vmatprep.subr.bf16.mxu0 %v1842
      %1947 = vmatpush1.bf16.msra.mxu0 %v1841
      %1948 = vmatprep.subr.bf16.mxu0 %v1844
      %1949 = vmatpush1.bf16.msra.mxu0 %v1843
      %1950 = vmatprep.subr.bf16.mxu0 %v1846
      %1951 = vmatpush1.bf16.msra.mxu0 %v1845
      %1952 = vmatprep.subr.bf16.mxu0 %v1848
      %1953 = vmatpush1.bf16.msra.mxu0 %v1847
      %1954 = vmatprep.subr.bf16.mxu0 %v1850
      %1955 = vmatpush1.bf16.msra.mxu0 %v1849
      %1956 = vmatprep.subr.bf16.mxu0 %v1852
      %1957 = vmatpush1.bf16.msra.mxu0 %v1851
      %1958 = vmatprep.subr.bf16.mxu0 %v1854
      %1959 = vmatpush1.bf16.msra.mxu0 %v1853
      %1960 = vmatprep.mubr.bf16.mxu0 %v1913
      %1961 = vmatmul.mubr.bf16.gmra.mrb[0].mxu0 %v1912
      %v1962 = vpop.f32.mrb[0].mxu0
      %v1963 = vadd.f32 %v1875, %v1962
      %v1964 = vpop.f32.mrb[0].mxu0
      %v1965 = vadd.f32 %v1875, %v1964
      %v1966 = vpop.f32.mrb[0].mxu0
      %v1967 = vadd.f32 %v1880, %v1966
      %v1968 = vpop.f32.mrb[0].mxu0
      %v1969 = vadd.f32 %v1880, %v1968
      %1970 = vmatprep.mubr.bf16.mxu0 %v1916
      %1971 = vmatmul.mubr.bf16.gmra.mrb[0].mxu0 %v1915
      %v1972 = vpop.f32.mrb[0].mxu0
      %v1973 = vadd.f32 %v1885, %v1972
      %v1974 = vpop.f32.mrb[0].mxu0
      %v1975 = vadd.f32 %v1885, %v1974
      %v1976 = vpop.f32.mrb[0].mxu0
      %v1977 = vadd.f32 %v1890, %v1976
      %v1978 = vpop.f32.mrb[0].mxu0
      %v1979 = vadd.f32 %v1890, %v1978
      %1980 = vdwg.mxu0
      %1981 = vmatprep.subr.bf16.mxu0 %v1856
      %1982 = vmatpush1.bf16.msra.mxu0 %v1855
      %1983 = vmatprep.subr.bf16.mxu0 %v1858
      %1984 = vmatpush1.bf16.msra.mxu0 %v1857
      %1985 = vmatprep.subr.bf16.mxu0 0
      %1986 = vmatpush1.bf16.msra.mxu0 0
      %1987 = vmatprep.subr.bf16.mxu0 0
      %1988 = vmatpush1.bf16.msra.mxu0 0
      %1989 = vmatprep.subr.bf16.mxu0 0
      %1990 = vmatpush1.bf16.msra.mxu0 0
      %1991 = vmatprep.subr.bf16.mxu0 0
      %1992 = vmatpush1.bf16.msra.mxu0 0
      %1993 = vmatprep.subr.bf16.mxu0 0
      %1994 = vmatpush1.bf16.msra.mxu0 0
      %1995 = vmatprep.subr.bf16.mxu0 0
      %1996 = vmatpush1.bf16.msra.mxu0 0
      %1997 = vmatprep.subr.bf16.mxu0 0
      %1998 = vmatpush1.bf16.msra.mxu0 0
      %1999 = vmatprep.subr.bf16.mxu0 0
      %2000 = vmatpush1.bf16.msra.mxu0 0
      %2001 = vmatprep.subr.bf16.mxu0 0
      %2002 = vmatpush1.bf16.msra.mxu0 0
      %2003 = vmatprep.subr.bf16.mxu0 0
      %2004 = vmatpush1.bf16.msra.mxu0 0
      %2005 = vmatprep.subr.bf16.mxu0 0
      %2006 = vmatpush1.bf16.msra.mxu0 0
      %2007 = vmatprep.subr.bf16.mxu0 0
      %2008 = vmatpush1.bf16.msra.mxu0 0
      %2009 = vmatprep.subr.bf16.mxu0 0
      %2010 = vmatpush1.bf16.msra.mxu0 0
      %2011 = vmatprep.subr.bf16.mxu0 0
      %2012 = vmatpush1.bf16.msra.mxu0 0
      %2013 = vmatprep.mubr.bf16.mxu0 0
      %2014 = vmatmul.mubr.bf16.gmra.mrb[0].mxu0 %v1923
      %v2015 = vpop.f32.mrb[0].mxu0
      %v2016 = vadd.f32 %v1963, %v2015
      %v2017 = vpop.f32.mrb[0].mxu0
      %v2018 = vadd.f32 %v1965, %v2017
      %v2019 = vpop.f32.mrb[0].mxu0
      %v2020 = vadd.f32 %v1967, %v2019
      %v2021 = vpop.f32.mrb[0].mxu0
      %v2022 = vadd.f32 %v1969, %v2021
      %2023 = vmatprep.mubr.bf16.mxu0 0
      %2024 = vmatmul.mubr.bf16.gmra.mrb[0].mxu0 %v1926
      %v2025 = vpop.f32.mrb[0].mxu0
      %v2026 = vadd.f32 %v1973, %v2025
      %v2027 = vpop.f32.mrb[0].mxu0
      %v2028 = vadd.f32 %v1975, %v2027
      %v2029 = vpop.f32.mrb[0].mxu0
      %v2030 = vadd.f32 %v1977, %v2029
      %v2031 = vpop.f32.mrb[0].mxu0
      %v2032 = vadd.f32 %v1979, %v2031
      %2033 = vdwg.mxu0
      %2034 = vrot.lane.b32.xlu0 %v2016, 17
      %v2035 = vpop.permute.xlu0 %2034
      %2036 = vrot.lane.b32.xlu0 %v2020, 17
      %v2037 = vpop.permute.xlu0 %2036
      %2038 = vrot.lane.b32.xlu0 %v2026, 17
      %v2039 = vpop.permute.xlu0 %2038
      %2040 = vrot.lane.b32.xlu0 %v2030, 17
      %v2041 = vpop.permute.xlu0 %2040
      %2042 = vrot.lane.b32.xlu0 %v2018, 17
      %v2043 = vpop.permute.xlu0 %2042
      %2044 = vrot.lane.b32.xlu0 %v2022, 17
      %v2045 = vpop.permute.xlu0 %2044
      %2046 = vrot.lane.b32.xlu0 %v2028, 17
      %v2047 = vpop.permute.xlu0 %2046
      %2048 = vrot.lane.b32.xlu0 %v2032, 17
      %v2049 = vpop.permute.xlu0 %2048
      %v2050 = vsel %vm522, %v2035, %v2043
      %v2051 = vsel %vm522, %v2037, %v2045
      %v2052 = vsel %vm522, %v2039, %v2047
      %v2053 = vsel %vm522, %v2041, %v2049
      %v2054 = vsel %vm522, %v2043, %v2035
      %v2055 = vsel %vm522, %v2045, %v2037
      %v2056 = vsel %vm522, %v2047, %v2039
      %v2057 = vsel %vm522, %v2049, %v2041
      %v2058 = vmul.f32 %v2054, %v536
      %v2059 = vmul.f32 %v2050, %v540
      %v2060 = vmul.f32 %v2055, %v536
      %v2061 = vmul.f32 %v2051, %v540
      %v2062 = vmul.f32 %v2056, %v536
      %v2063 = vmul.f32 %v2052, %v540
      %v2064 = vmul.f32 %v2057, %v536
      %v2065 = vmul.f32 %v2053, %v540
      %2066 = vrot.lane.b32.xlu0 %v2016, 16
      %v2067 = vpop.permute.xlu0 %2066
      %2068 = vrot.lane.b32.xlu0 %v2020, 16
      %v2069 = vpop.permute.xlu0 %2068
      %2070 = vrot.lane.b32.xlu0 %v2026, 16
      %v2071 = vpop.permute.xlu0 %2070
      %2072 = vrot.lane.b32.xlu0 %v2030, 16
      %v2073 = vpop.permute.xlu0 %2072
      %2074 = vrot.lane.b32.xlu0 %v2018, 16
      %v2075 = vpop.permute.xlu0 %2074
      %2076 = vrot.lane.b32.xlu0 %v2022, 16
      %v2077 = vpop.permute.xlu0 %2076
      %2078 = vrot.lane.b32.xlu0 %v2028, 16
      %v2079 = vpop.permute.xlu0 %2078
      %2080 = vrot.lane.b32.xlu0 %v2032, 16
      %v2081 = vpop.permute.xlu0 %2080
      %v2082 = vsel %vm567, %v2067, %v2075
      %v2083 = vsel %vm567, %v2069, %v2077
      %v2084 = vsel %vm567, %v2071, %v2079
      %v2085 = vsel %vm567, %v2073, %v2081
      %v2086 = vsel %vm567, %v2075, %v2067
      %v2087 = vsel %vm567, %v2077, %v2069
      %v2088 = vsel %vm567, %v2079, %v2071
      %v2089 = vsel %vm567, %v2081, %v2073
      %v2090 = vmul.f32 %v2086, %v582
      %v2091 = vmul.f32 %v2082, %v586
      %v2092 = vmul.f32 %v2087, %v582
      %v2093 = vmul.f32 %v2083, %v586
      %v2094 = vmul.f32 %v2088, %v582
      %v2095 = vmul.f32 %v2084, %v586
      %v2096 = vmul.f32 %v2089, %v582
      %v2097 = vmul.f32 %v2085, %v586
      %2098 = vrot.lane.b32.xlu0 %v2016, 15
      %v2099 = vpop.permute.xlu0 %2098
      %2100 = vrot.lane.b32.xlu0 %v2020, 15
      %v2101 = vpop.permute.xlu0 %2100
      %2102 = vrot.lane.b32.xlu0 %v2026, 15
      %v2103 = vpop.permute.xlu0 %2102
      %2104 = vrot.lane.b32.xlu0 %v2030, 15
      %v2105 = vpop.permute.xlu0 %2104
      %2106 = vrot.lane.b32.xlu0 %v2018, 15
      %v2107 = vpop.permute.xlu0 %2106
      %2108 = vrot.lane.b32.xlu0 %v2022, 15
      %v2109 = vpop.permute.xlu0 %2108
      %2110 = vrot.lane.b32.xlu0 %v2028, 15
      %v2111 = vpop.permute.xlu0 %2110
      %2112 = vrot.lane.b32.xlu0 %v2032, 15
      %v2113 = vpop.permute.xlu0 %2112
      %v2114 = vsel %vm613, %v2099, %v2107
      %v2115 = vsel %vm613, %v2101, %v2109
      %v2116 = vsel %vm613, %v2103, %v2111
      %v2117 = vsel %vm613, %v2105, %v2113
      %v2118 = vsel %vm613, %v2107, %v2099
      %v2119 = vsel %vm613, %v2109, %v2101
      %v2120 = vsel %vm613, %v2111, %v2103
      %v2121 = vsel %vm613, %v2113, %v2105
      %v2122 = vmul.f32 %v2118, %v628
      %v2123 = vmul.f32 %v2114, %v632
      %v2124 = vmul.f32 %v2119, %v628
      %v2125 = vmul.f32 %v2115, %v632
      %v2126 = vmul.f32 %v2120, %v628
      %v2127 = vmul.f32 %v2116, %v632
      %v2128 = vmul.f32 %v2121, %v628
      %v2129 = vmul.f32 %v2117, %v632
      %2130 = vrot.lane.b32.xlu0 %v2016, 1
      %v2131 = vpop.permute.xlu0 %2130
      %2132 = vrot.lane.b32.xlu0 %v2020, 1
      %v2133 = vpop.permute.xlu0 %2132
      %2134 = vrot.lane.b32.xlu0 %v2026, 1
      %v2135 = vpop.permute.xlu0 %2134
      %2136 = vrot.lane.b32.xlu0 %v2030, 1
      %v2137 = vpop.permute.xlu0 %2136
      %2138 = vrot.lane.b32.xlu0 %v2018, 1
      %v2139 = vpop.permute.xlu0 %2138
      %2140 = vrot.lane.b32.xlu0 %v2022, 1
      %v2141 = vpop.permute.xlu0 %2140
      %2142 = vrot.lane.b32.xlu0 %v2028, 1
      %v2143 = vpop.permute.xlu0 %2142
      %2144 = vrot.lane.b32.xlu0 %v2032, 1
      %v2145 = vpop.permute.xlu0 %2144
      %v2146 = vsel %vm659, %v2131, %v2139
      %v2147 = vsel %vm659, %v2133, %v2141
      %v2148 = vsel %vm659, %v2135, %v2143
      %v2149 = vsel %vm659, %v2137, %v2145
      %v2150 = vsel %vm659, %v2139, %v2131
      %v2151 = vsel %vm659, %v2141, %v2133
      %v2152 = vsel %vm659, %v2143, %v2135
      %v2153 = vsel %vm659, %v2145, %v2137
      %v2154 = vmul.f32 %v2150, %v674
      %v2155 = vmul.f32 %v2146, %v678
      %v2156 = vmul.f32 %v2151, %v674
      %v2157 = vmul.f32 %v2147, %v678
      %v2158 = vmul.f32 %v2152, %v674
      %v2159 = vmul.f32 %v2148, %v678
      %v2160 = vmul.f32 %v2153, %v674
      %v2161 = vmul.f32 %v2149, %v678
      %2162 = vrot.lane.b32.xlu0 %v2016, 127
      %v2163 = vpop.permute.xlu0 %2162
      %2164 = vrot.lane.b32.xlu0 %v2020, 127
      %v2165 = vpop.permute.xlu0 %2164
      %2166 = vrot.lane.b32.xlu0 %v2026, 127
      %v2167 = vpop.permute.xlu0 %2166
      %2168 = vrot.lane.b32.xlu0 %v2030, 127
      %v2169 = vpop.permute.xlu0 %2168
      %2170 = vrot.lane.b32.xlu0 %v2018, 127
      %v2171 = vpop.permute.xlu0 %2170
      %2172 = vrot.lane.b32.xlu0 %v2022, 127
      %v2173 = vpop.permute.xlu0 %2172
      %2174 = vrot.lane.b32.xlu0 %v2028, 127
      %v2175 = vpop.permute.xlu0 %2174
      %2176 = vrot.lane.b32.xlu0 %v2032, 127
      %v2177 = vpop.permute.xlu0 %2176
      %v2178 = vsel %vm705, %v2163, %v2171
      %v2179 = vsel %vm705, %v2165, %v2173
      %v2180 = vsel %vm705, %v2167, %v2175
      %v2181 = vsel %vm705, %v2169, %v2177
      %v2182 = vsel %vm705, %v2171, %v2163
      %v2183 = vsel %vm705, %v2173, %v2165
      %v2184 = vsel %vm705, %v2175, %v2167
      %v2185 = vsel %vm705, %v2177, %v2169
      %v2186 = vmul.f32 %v2178, %v720
      %v2187 = vmul.f32 %v2182, %v724
      %v2188 = vmul.f32 %v2179, %v720
      %v2189 = vmul.f32 %v2183, %v724
      %v2190 = vmul.f32 %v2180, %v720
      %v2191 = vmul.f32 %v2184, %v724
      %v2192 = vmul.f32 %v2181, %v720
      %v2193 = vmul.f32 %v2185, %v724
      %2194 = vrot.lane.b32.xlu0 %v2016, 113
      %v2195 = vpop.permute.xlu0 %2194
      %2196 = vrot.lane.b32.xlu0 %v2020, 113
      %v2197 = vpop.permute.xlu0 %2196
      %2198 = vrot.lane.b32.xlu0 %v2026, 113
      %v2199 = vpop.permute.xlu0 %2198
      %2200 = vrot.lane.b32.xlu0 %v2030, 113
      %v2201 = vpop.permute.xlu0 %2200
      %2202 = vrot.lane.b32.xlu0 %v2018, 113
      %v2203 = vpop.permute.xlu0 %2202
      %2204 = vrot.lane.b32.xlu0 %v2022, 113
      %v2205 = vpop.permute.xlu0 %2204
      %2206 = vrot.lane.b32.xlu0 %v2028, 113
      %v2207 = vpop.permute.xlu0 %2206
      %2208 = vrot.lane.b32.xlu0 %v2032, 113
      %v2209 = vpop.permute.xlu0 %2208
      %v2210 = vsel %vm751, %v2195, %v2203
      %v2211 = vsel %vm751, %v2197, %v2205
      %v2212 = vsel %vm751, %v2199, %v2207
      %v2213 = vsel %vm751, %v2201, %v2209
      %v2214 = vsel %vm751, %v2203, %v2195
      %v2215 = vsel %vm751, %v2205, %v2197
      %v2216 = vsel %vm751, %v2207, %v2199
      %v2217 = vsel %vm751, %v2209, %v2201
      %v2218 = vmul.f32 %v2210, %v766
      %v2219 = vmul.f32 %v2214, %v770
      %v2220 = vmul.f32 %v2211, %v766
      %v2221 = vmul.f32 %v2215, %v770
      %v2222 = vmul.f32 %v2212, %v766
      %v2223 = vmul.f32 %v2216, %v770
      %v2224 = vmul.f32 %v2213, %v766
      %v2225 = vmul.f32 %v2217, %v770
      %2226 = vrot.lane.b32.xlu0 %v2016, 112
      %v2227 = vpop.permute.xlu0 %2226
      %2228 = vrot.lane.b32.xlu0 %v2020, 112
      %v2229 = vpop.permute.xlu0 %2228
      %2230 = vrot.lane.b32.xlu0 %v2026, 112
      %v2231 = vpop.permute.xlu0 %2230
      %2232 = vrot.lane.b32.xlu0 %v2030, 112
      %v2233 = vpop.permute.xlu0 %2232
      %2234 = vrot.lane.b32.xlu0 %v2018, 112
      %v2235 = vpop.permute.xlu0 %2234
      %2236 = vrot.lane.b32.xlu0 %v2022, 112
      %v2237 = vpop.permute.xlu0 %2236
      %2238 = vrot.lane.b32.xlu0 %v2028, 112
      %v2239 = vpop.permute.xlu0 %2238
      %2240 = vrot.lane.b32.xlu0 %v2032, 112
      %v2241 = vpop.permute.xlu0 %2240
      %v2242 = vsel %vm797, %v2227, %v2235
      %v2243 = vsel %vm797, %v2229, %v2237
      %v2244 = vsel %vm797, %v2231, %v2239
      %v2245 = vsel %vm797, %v2233, %v2241
      %v2246 = vsel %vm797, %v2235, %v2227
      %v2247 = vsel %vm797, %v2237, %v2229
      %v2248 = vsel %vm797, %v2239, %v2231
      %v2249 = vsel %vm797, %v2241, %v2233
      %v2250 = vmul.f32 %v2242, %v812
      %v2251 = vmul.f32 %v2246, %v816
      %v2252 = vmul.f32 %v2243, %v812
      %v2253 = vmul.f32 %v2247, %v816
      %v2254 = vmul.f32 %v2244, %v812
      %v2255 = vmul.f32 %v2248, %v816
      %v2256 = vmul.f32 %v2245, %v812
      %v2257 = vmul.f32 %v2249, %v816
      %2258 = vrot.lane.b32.xlu0 %v2016, 111
      %v2259 = vpop.permute.xlu0 %2258
      %2260 = vrot.lane.b32.xlu0 %v2020, 111
      %v2261 = vpop.permute.xlu0 %2260
      %2262 = vrot.lane.b32.xlu0 %v2026, 111
      %v2263 = vpop.permute.xlu0 %2262
      %2264 = vrot.lane.b32.xlu0 %v2030, 111
      %v2265 = vpop.permute.xlu0 %2264
      %2266 = vrot.lane.b32.xlu0 %v2018, 111
      %v2267 = vpop.permute.xlu0 %2266
      %2268 = vrot.lane.b32.xlu0 %v2022, 111
      %v2269 = vpop.permute.xlu0 %2268
      %2270 = vrot.lane.b32.xlu0 %v2028, 111
      %v2271 = vpop.permute.xlu0 %2270
      %2272 = vrot.lane.b32.xlu0 %v2032, 111
      %v2273 = vpop.permute.xlu0 %2272
      %v2274 = vsel %vm843, %v2259, %v2267
      %v2275 = vsel %vm843, %v2261, %v2269
      %v2276 = vsel %vm843, %v2263, %v2271
      %v2277 = vsel %vm843, %v2265, %v2273
      %v2278 = vsel %vm843, %v2267, %v2259
      %v2279 = vsel %vm843, %v2269, %v2261
      %v2280 = vsel %vm843, %v2271, %v2263
      %v2281 = vsel %vm843, %v2273, %v2265
      %v2282 = vmul.f32 %v2274, %v858
      %v2283 = vmul.f32 %v2278, %v862
      %v2284 = vmul.f32 %v2275, %v858
      %v2285 = vmul.f32 %v2279, %v862
      %v2286 = vmul.f32 %v2276, %v858
      %v2287 = vmul.f32 %v2280, %v862
      %v2288 = vmul.f32 %v2277, %v858
      %v2289 = vmul.f32 %v2281, %v862
      %v2290 = vpack.c.bf16 %v2060, %v2058
      %v2291 = vpack.c.bf16 %v2061, %v2059
      %v2292 = vpack.c.bf16 %v2064, %v2062
      %v2293 = vpack.c.bf16 %v2065, %v2063
      %v2294 = vpack.c.bf16 %v2092, %v2090
      %v2295 = vpack.c.bf16 %v2093, %v2091
      %v2296 = vpack.c.bf16 %v2096, %v2094
      %v2297 = vpack.c.bf16 %v2097, %v2095
      %v2298 = vpack.c.bf16 %v2124, %v2122
      %v2299 = vpack.c.bf16 %v2125, %v2123
      %v2300 = vpack.c.bf16 %v2128, %v2126
      %v2301 = vpack.c.bf16 %v2129, %v2127
      %v2302 = vpack.c.bf16 %v2156, %v2154
      %v2303 = vpack.c.bf16 %v2157, %v2155
      %v2304 = vpack.c.bf16 %v2160, %v2158
      %v2305 = vpack.c.bf16 %v2161, %v2159
      %v2306 = vpack.c.bf16 %v2020, %v2016
      %v2307 = vpack.c.bf16 %v2022, %v2018
      %v2308 = vpack.c.bf16 %v2030, %v2026
      %v2309 = vpack.c.bf16 %v2032, %v2028
      %v2310 = vpack.c.bf16 %v2188, %v2186
      %v2311 = vpack.c.bf16 %v2189, %v2187
      %v2312 = vpack.c.bf16 %v2192, %v2190
      %v2313 = vpack.c.bf16 %v2193, %v2191
      %v2314 = vpack.c.bf16 %v2220, %v2218
      %v2315 = vpack.c.bf16 %v2221, %v2219
      %v2316 = vpack.c.bf16 %v2224, %v2222
      %v2317 = vpack.c.bf16 %v2225, %v2223
      %v2318 = vpack.c.bf16 %v2252, %v2250
      %v2319 = vpack.c.bf16 %v2253, %v2251
      %v2320 = vpack.c.bf16 %v2256, %v2254
      %v2321 = vpack.c.bf16 %v2257, %v2255
      %v2322 = vpack.c.bf16 %v2284, %v2282
      %v2323 = vpack.c.bf16 %v2285, %v2283
      %v2324 = vpack.c.bf16 %v2288, %v2286
      %v2325 = vpack.c.bf16 %v2289, %v2287
      %s2326 = scalar_lea.vmem %s4, 144
      %v2327 = vld [vmem:[%s2326] sm:$0xff]
      %v2328 = vld [vmem:[%s2326 + $0x8] sm:$0xf]
      %v2329 = vld [vmem:[%s2326 + $0xc] sm:$0xff]
      %v2330 = vld [vmem:[%s2326 + $0x14] sm:$0xf]
      %v2331 = vld [vmem:[%s2326 + $0x18] sm:$0xff]
      %v2332 = vld [vmem:[%s2326 + $0x20] sm:$0xf]
      %v2333 = vld [vmem:[%s2326 + $0x24] sm:$0xff]
      %v2334 = vld [vmem:[%s2326 + $0x2c] sm:$0xf]
      %v2335 = vld [vmem:[%s380 + $0x80] sm:$0xff]
      %v2336 = vld [vmem:[%s380 + $0x88] sm:$0xff]
      %v2337 = vld [vmem:[%s380 + $0x90] sm:$0xff]
      %v2338 = vld [vmem:[%s380 + $0x98] sm:$0xff]
      %2340 = vset.pattern.permute.xlu0 0
      %2341 = vperm.xlu0 %2340, %v2335
      %v2342 = vpop.permute.xlu0 %2341
      %2345 = vset.pattern.permute.xlu0 0
      %2346 = vperm.xlu0 %2345, %v2336
      %v2347 = vpop.permute.xlu0 %2346
      %2350 = vset.pattern.permute.xlu0 0
      %2351 = vperm.xlu0 %2350, %v2337
      %v2352 = vpop.permute.xlu0 %2351
      %2355 = vset.pattern.permute.xlu0 0
      %2356 = vperm.xlu0 %2355, %v2338
      %v2357 = vpop.permute.xlu0 %2356
      %v2367 = vunpack.c.l.b16 %v2327
      %v2368 = vunpack.c.h.b16 %v2327
      %v2369 = vunpack.c.l.b16 %v2328
      %v2370 = vunpack.c.l.b16 %v2329
      %v2371 = vunpack.c.h.b16 %v2329
      %v2372 = vunpack.c.l.b16 %v2330
      %v2373 = vunpack.c.l.b16 %v2331
      %v2374 = vunpack.c.h.b16 %v2331
      %v2375 = vunpack.c.l.b16 %v2332
      %v2376 = vunpack.c.l.b16 %v2333
      %v2377 = vunpack.c.h.b16 %v2333
      %v2378 = vunpack.c.l.b16 %v2334
      %v2379 = vpack.c.b16 %v2370, %v2367
      %v2380 = vpack.c.b16 %v2371, %v2368
      %v2381 = vpack.c.b16 %v2372, %v2369
      %v2382 = vpack.c.b16 %v2376, %v2373
      %v2383 = vpack.c.b16 %v2377, %v2374
      %v2384 = vpack.c.b16 %v2378, %v2375
      %v2390 = vsel %vm971, %v2381, 0
      %v2393 = vsel %vm971, %v2384, 0
      %2395 = vmatprep.subr.bf16.mxu0 %v2291
      %2396 = vmatpush1.bf16.msra.mxu0 %v2290
      %2397 = vmatprep.subr.bf16.mxu0 %v2293
      %2398 = vmatpush1.bf16.msra.mxu0 %v2292
      %2399 = vmatprep.subr.bf16.mxu0 %v2295
      %2400 = vmatpush1.bf16.msra.mxu0 %v2294
      %2401 = vmatprep.subr.bf16.mxu0 %v2297
      %2402 = vmatpush1.bf16.msra.mxu0 %v2296
      %2403 = vmatprep.subr.bf16.mxu0 %v2299
      %2404 = vmatpush1.bf16.msra.mxu0 %v2298
      %2405 = vmatprep.subr.bf16.mxu0 %v2301
      %2406 = vmatpush1.bf16.msra.mxu0 %v2300
      %2407 = vmatprep.subr.bf16.mxu0 %v2303
      %2408 = vmatpush1.bf16.msra.mxu0 %v2302
      %2409 = vmatprep.subr.bf16.mxu0 %v2305
      %2410 = vmatpush1.bf16.msra.mxu0 %v2304
      %2411 = vmatprep.subr.bf16.mxu0 %v2307
      %2412 = vmatpush1.bf16.msra.mxu0 %v2306
      %2413 = vmatprep.subr.bf16.mxu0 %v2309
      %2414 = vmatpush1.bf16.msra.mxu0 %v2308
      %2415 = vmatprep.subr.bf16.mxu0 %v2311
      %2416 = vmatpush1.bf16.msra.mxu0 %v2310
      %2417 = vmatprep.subr.bf16.mxu0 %v2313
      %2418 = vmatpush1.bf16.msra.mxu0 %v2312
      %2419 = vmatprep.subr.bf16.mxu0 %v2315
      %2420 = vmatpush1.bf16.msra.mxu0 %v2314
      %2421 = vmatprep.subr.bf16.mxu0 %v2317
      %2422 = vmatpush1.bf16.msra.mxu0 %v2316
      %2423 = vmatprep.subr.bf16.mxu0 %v2319
      %2424 = vmatpush1.bf16.msra.mxu0 %v2318
      %2425 = vmatprep.subr.bf16.mxu0 %v2321
      %2426 = vmatpush1.bf16.msra.mxu0 %v2320
      %2427 = vmatprep.mubr.bf16.mxu0 %v2380
      %2428 = vmatmul.mubr.bf16.gmra.mrb[0].mxu0 %v2379
      %v2429 = vpop.f32.mrb[0].mxu0
      %v2430 = vadd.f32 %v2342, %v2429
      %v2431 = vpop.f32.mrb[0].mxu0
      %v2432 = vadd.f32 %v2342, %v2431
      %v2433 = vpop.f32.mrb[0].mxu0
      %v2434 = vadd.f32 %v2347, %v2433
      %v2435 = vpop.f32.mrb[0].mxu0
      %v2436 = vadd.f32 %v2347, %v2435
      %2437 = vmatprep.mubr.bf16.mxu0 %v2383
      %2438 = vmatmul.mubr.bf16.gmra.mrb[0].mxu0 %v2382
      %v2439 = vpop.f32.mrb[0].mxu0
      %v2440 = vadd.f32 %v2352, %v2439
      %v2441 = vpop.f32.mrb[0].mxu0
      %v2442 = vadd.f32 %v2352, %v2441
      %v2443 = vpop.f32.mrb[0].mxu0
      %v2444 = vadd.f32 %v2357, %v2443
      %v2445 = vpop.f32.mrb[0].mxu0
      %v2446 = vadd.f32 %v2357, %v2445
      %2447 = vdwg.mxu0
      %2448 = vmatprep.subr.bf16.mxu0 %v2323
      %2449 = vmatpush1.bf16.msra.mxu0 %v2322
      %2450 = vmatprep.subr.bf16.mxu0 %v2325
      %2451 = vmatpush1.bf16.msra.mxu0 %v2324
      %2452 = vmatprep.subr.bf16.mxu0 0
      %2453 = vmatpush1.bf16.msra.mxu0 0
      %2454 = vmatprep.subr.bf16.mxu0 0
      %2455 = vmatpush1.bf16.msra.mxu0 0
      %2456 = vmatprep.subr.bf16.mxu0 0
      %2457 = vmatpush1.bf16.msra.mxu0 0
      %2458 = vmatprep.subr.bf16.mxu0 0
      %2459 = vmatpush1.bf16.msra.mxu0 0
      %2460 = vmatprep.subr.bf16.mxu0 0
      %2461 = vmatpush1.bf16.msra.mxu0 0
      %2462 = vmatprep.subr.bf16.mxu0 0
      %2463 = vmatpush1.bf16.msra.mxu0 0
      %2464 = vmatprep.subr.bf16.mxu0 0
      %2465 = vmatpush1.bf16.msra.mxu0 0
      %2466 = vmatprep.subr.bf16.mxu0 0
      %2467 = vmatpush1.bf16.msra.mxu0 0
      %2468 = vmatprep.subr.bf16.mxu0 0
      %2469 = vmatpush1.bf16.msra.mxu0 0
      %2470 = vmatprep.subr.bf16.mxu0 0
      %2471 = vmatpush1.bf16.msra.mxu0 0
      %2472 = vmatprep.subr.bf16.mxu0 0
      %2473 = vmatpush1.bf16.msra.mxu0 0
      %2474 = vmatprep.subr.bf16.mxu0 0
      %2475 = vmatpush1.bf16.msra.mxu0 0
      %2476 = vmatprep.subr.bf16.mxu0 0
      %2477 = vmatpush1.bf16.msra.mxu0 0
      %2478 = vmatprep.subr.bf16.mxu0 0
      %2479 = vmatpush1.bf16.msra.mxu0 0
      %2480 = vmatprep.mubr.bf16.mxu0 0
      %2481 = vmatmul.mubr.bf16.gmra.mrb[0].mxu0 %v2390
      %v2482 = vpop.f32.mrb[0].mxu0
      %v2483 = vadd.f32 %v2430, %v2482
      %v2484 = vpop.f32.mrb[0].mxu0
      %v2485 = vadd.f32 %v2432, %v2484
      %v2486 = vpop.f32.mrb[0].mxu0
      %v2487 = vadd.f32 %v2434, %v2486
      %v2488 = vpop.f32.mrb[0].mxu0
      %v2489 = vadd.f32 %v2436, %v2488
      %2490 = vmatprep.mubr.bf16.mxu0 0
      %2491 = vmatmul.mubr.bf16.gmra.mrb[0].mxu0 %v2393
      %v2492 = vpop.f32.mrb[0].mxu0
      %v2493 = vadd.f32 %v2440, %v2492
      %v2494 = vpop.f32.mrb[0].mxu0
      %v2495 = vadd.f32 %v2442, %v2494
      %v2496 = vpop.f32.mrb[0].mxu0
      %v2497 = vadd.f32 %v2444, %v2496
      %v2498 = vpop.f32.mrb[0].mxu0
      %v2499 = vadd.f32 %v2446, %v2498
      %2500 = vdwg.mxu0
      %v2501 = vadd.f32 %v2483, %v1559
      %v2502 = vadd.f32 %v2485, %v1560
      %v2503 = vadd.f32 %v2487, %v1561
      %v2504 = vadd.f32 %v2489, %v1562
      %v2505 = vadd.f32 %v2493, %v1563
      %v2506 = vadd.f32 %v2495, %v1564
      %v2507 = vadd.f32 %v2497, %v1565
      %v2508 = vadd.f32 %v2499, %v1566
      %v2509 = vtanh.pop %v2501
      %v2510 = vtanh.pop %v2502
      %v2511 = vtanh.pop %v2503
      %v2512 = vtanh.pop %v2504
      %v2513 = vtanh.pop %v2505
      %v2514 = vtanh.pop %v2506
      %v2515 = vtanh.pop %v2507
      %v2516 = vtanh.pop %v2508
      %v2517 = vld [vmem:[%s5] sm:$0xf]
      %v2518 = vpack.c.bf16 %v2511, %v2509
      %v2519 = vpack.c.bf16 %v2512, %v2510
      %v2520 = vpack.c.bf16 %v2515, %v2513
      %v2521 = vpack.c.bf16 %v2516, %v2514
      %v2522 = vld [vmem:[%s380 + $0xa0] sm:$0xff]
      %2524 = vset.pattern.permute.xlu0 0
      %2525 = vperm.xlu0 %2524, %v2522
      %v2526 = vpop.permute.xlu0 %2525
      %v2529 = vsel %vm971, %v2517, 0
      %2531 = vmatprep.subr.bf16.mxu0 %v2519
      %2532 = vmatpush1.bf16.msra.mxu0 %v2518
      %2533 = vmatprep.subr.bf16.mxu0 %v2521
      %2534 = vmatpush1.bf16.msra.mxu0 %v2520
      %2535 = vmatprep.subr.bf16.mxu0 0
      %2536 = vmatpush1.bf16.msra.mxu0 0
      %2537 = vmatprep.subr.bf16.mxu0 0
      %2538 = vmatpush1.bf16.msra.mxu0 0
      %2539 = vmatprep.subr.bf16.mxu0 0
      %2540 = vmatpush1.bf16.msra.mxu0 0
      %2541 = vmatprep.subr.bf16.mxu0 0
      %2542 = vmatpush1.bf16.msra.mxu0 0
      %2543 = vmatprep.subr.bf16.mxu0 0
      %2544 = vmatpush1.bf16.msra.mxu0 0
      %2545 = vmatprep.subr.bf16.mxu0 0
      %2546 = vmatpush1.bf16.msra.mxu0 0
      %2547 = vmatprep.subr.bf16.mxu0 0
      %2548 = vmatpush1.bf16.msra.mxu0 0
      %2549 = vmatprep.subr.bf16.mxu0 0
      %2550 = vmatpush1.bf16.msra.mxu0 0
      %2551 = vmatprep.subr.bf16.mxu0 0
      %2552 = vmatpush1.bf16.msra.mxu0 0
      %2553 = vmatprep.subr.bf16.mxu0 0
      %2554 = vmatpush1.bf16.msra.mxu0 0
      %2555 = vmatprep.subr.bf16.mxu0 0
      %2556 = vmatpush1.bf16.msra.mxu0 0
      %2557 = vmatprep.subr.bf16.mxu0 0
      %2558 = vmatpush1.bf16.msra.mxu0 0
      %2559 = vmatprep.subr.bf16.mxu0 0
      %2560 = vmatpush1.bf16.msra.mxu0 0
      %2561 = vmatprep.subr.bf16.mxu0 0
      %2562 = vmatpush1.bf16.msra.mxu0 0
      %2563 = vmatprep.mubr.bf16.mxu0 0
      %2564 = vmatmul.mubr.bf16.gmra.mrb[0].mxu0 %v2529
      %v2565 = vpop.f32.mrb[0].mxu0
      %v2566 = vadd.f32 %v2526, %v2565
      %v2567 = vpop.f32.mrb[0].mxu0
      %v2568 = vadd.f32 %v2526, %v2567
      %v2569 = vpop.f32.mrb[0].mxu0
      %v2570 = vpop.f32.mrb[0].mxu0
      %2571 = vdwg.mxu0
      %v2573 = vcombine.high %v392, %v392
      %v2575 = vmul.f32 %v2566, %v392
      %v2576 = vmul.f32 %v2568, %v2573
      %v2577 = vrot.slane %v2566, 4
      %v2578 = vrot.slane %v2568, 4
      %v2579 = vmul.f32 %v2577, %v392
      %v2580 = vmul.f32 %v2578, %v2573
      %v2581 = vld [vmem:[%s8] sm:$0xf]
      %2583 = vset.pattern.permute.xlu0 0
      %2584 = vperm.xlu0 %2583, %v2581
      %v2585 = vpop.permute.xlu0 %2584
      %v2587 = vmul.f32 %v2579, %v2585
      %v2588 = vmul.f32 %v2580, %v2585
      %v2589 = vtanh.pop %v2587
      %v2590 = vtanh.pop %v2588
      %v2591 = vld [vmem:[%s7] sm:$0xf]
      %2593 = vset.pattern.permute.xlu0 0
      %2594 = vperm.xlu0 %2593, %v2591
      %v2595 = vpop.permute.xlu0 %2594
      %v2597 = vmul.f32 %v2589, %v2595
      %v2598 = vmul.f32 %v2590, %v2595
      %v2599 = vmul.f32 %v2597, 1.442695
      %v2600 = vpow.pop %v2599
      %v2601 = vmul.f32 %v2598, 1.442695
      %v2602 = vpow.pop %v2601
      %v2605 = vcombine.low %v2600, %v2602
      %v2607 = vmul.f32 %v390, %v2605
      %v2610 = vcombine.low %v2575, %v2576
      %v2612 = vadd.f32 %v2607, %v2610
      %v2613 = vmul.f32 %v392, %v2612
      %v2614 = vadd.f32 %v397, %v2613
      %2615 = vst [vmem:[%s385] sm:$0xff] %v2614
      %vm2616 = vcmask 1043456
      %v2617 = vsel %vm2616, %v2597, 0.0
      %v2618 = vsel %vm2616, %v2598, 0.0
      %v2619 = vadd.f32 %v2617, %v2618
      %2620 = vadd.xlane.f32.xlu0 %v2619
      %v2621 = vpop.xlane.xlu0 %2620
      %v2622 = vrot.slane %v2621, 4
      %v2623 = vadd.f32 %v2621, %v2622
      %v2624 = vrot.slane %v2623, 2
      %v2625 = vadd.f32 %v2623, %v2624
      %v2626 = vrot.slane %v2625, 1
      %v2627 = vadd.f32 %v2625, %v2626
      %s2628 = vtos %v2627
      %v2629 = vstv %s2628
      %vm2630 = vcmask 0
      %2631 = vst.msk [vmem:[%s388] sm:$0x1] %vm2630, %v2629
      %p2632 = scmp.lt.s32.totalorder %s22, 1
      %s2633 = scalar_select %p2632, %s22, 1
      %s2634 = smul.addr %s2633, 2
      %s2635 = smul.addr %s2634, 4
      %s2636 = scalar_lea.vmem %s9, %s2635
      %p2637 = scmp.lt.s32.totalorder %s22, 1
      %s2638 = scalar_select %p2637, %s22, 1
      %s2639 = scalar_lea.vmem %s10, %s2638
      // Predicated region
      $region57: #{coupling_layer_conv_forward.1} parent=55 // pred_check
        %p2640 = pneg %p239
      $region58: #{coupling_layer_conv_forward.1} parent=55 // pred_check_branch
        %2642 = sbr.rel (%p2640) target = $region60
      $region59: #{coupling_layer_conv_forward.1} parent=55 // pred_region
        _
      $region60: #{coupling_layer_conv_forward.1} parent=55 // pred_fallthru
        _
      // Predicated region
      $region61: #{coupling_layer_conv_forward.1} parent=55 // pred_check
        %p2643 = pneg %p265
      $region62: #{coupling_layer_conv_forward.1} parent=55 // pred_check_branch
        %2645 = sbr.rel (%p2643) target = $region64
      $region63: #{coupling_layer_conv_forward.1} parent=55 // pred_region
        _
      $region64: #{coupling_layer_conv_forward.1} parent=55 // pred_fallthru
        _
    $region56: #{coupling_layer_conv_forward.1} parent=5 // pred_fallthru
      _
    %p2646 = scmp.le.s32.totalorder 2, %s17
    // Predicated region
    $region65: #{coupling_layer_conv_forward.1} parent=5 // pred_check
      %p2647 = pneg %p2646
    $region66: #{coupling_layer_conv_forward.1} parent=5 // pred_check_branch
      %2649 = sbr.rel (%p2647) target = $region68
    $region67: #{coupling_layer_conv_forward.1} parent=5 // pred_region
      %s2650 = ssub.s32 %s17, 2
      // Predicated region
      $region69: #{coupling_layer_conv_forward.1} parent=67 // pred_check
        %p2651 = pneg %p245
      $region70: #{coupling_layer_conv_forward.1} parent=67 // pred_check_branch
        %2653 = sbr.rel (%p2651) target = $region72
      $region71: #{coupling_layer_conv_forward.1} parent=67 // pred_region
        %p2654 = scmp.lt.s32.totalorder %s23, 1
        %s2655 = scalar_select %p2654, %s23, 1
        %s2656 = smul.addr %s2655, 2
        %s2657 = smul.addr %s2656, 4
        %s2658 = scalar_lea.vmem %s9, %s2657
      $region72: #{coupling_layer_conv_forward.1} parent=67 // pred_fallthru
        _
      // Predicated region
      $region73: #{coupling_layer_conv_forward.1} parent=67 // pred_check
        %p2659 = pneg %p271
      $region74: #{coupling_layer_conv_forward.1} parent=67 // pred_check_branch
        %2661 = sbr.rel (%p2659) target = $region76
      $region75: #{coupling_layer_conv_forward.1} parent=67 // pred_region
        %p2662 = scmp.lt.s32.totalorder %s23, 1
        %s2663 = scalar_select %p2662, %s23, 1
        %s2664 = scalar_lea.vmem %s10, %s2663
      $region76: #{coupling_layer_conv_forward.1} parent=67 // pred_fallthru
        _
    $region68: #{coupling_layer_conv_forward.1} parent=5 // pred_fallthru
      _
  $region6: #{coupling_layer_conv_forward.1} parent=0 // loop_footer
    %s21 = sadd.s32 1, %s17
  $region7: #{coupling_layer_conv_forward.1} parent=0 // loop_footer_branch
    %16 = sbr.rel target = $region3
  $region8: #{coupling_layer_conv_forward.1} parent=0 // loop_exit
    _

</llo_original>
